<compile_context>
chip_gen: v6e
topology: v6e:2x2x1
jax: 0.10.0
libtpu: 0.0.40
codegen_flags: <defaults>
</compile_context>

<pallas_src>
import jax
import jax.numpy as jnp
from jax.experimental import pallas as pl
from jax.experimental.pallas import tpu as pltpu


# Fixed geometry implied by the PyTorch module (28x28 single-channel input).
_POOL1_H, _POOL1_W = 13, 13          # MaxPool2d(2,2) output of the 26x26 conv1 map
_POOL1_WPAD = 16                     # W padded to a sublane multiple -> clean reshapes
_CONV1_PATCH = 9                     # 3*3*1
_POS1 = 4 * _POOL1_H * _POOL1_WPAD   # 832 matmul rows per sample for conv1+pool
_CONV2_POS = 8 * 8                   # conv2 positions surviving MaxPool(2,2)+AdaptiveMax


# ------------------------------ Pallas kernel -------------------------------

def fused_net_kernel(p_ref, w1_ref, b1_ref, w2_ref, b2_ref,
                     fw1_ref, fb1_ref, fw2_ref, fb2_ref, o_ref):
    """Whole Net forward for a block of B samples.

    p_ref : (B, 832, 9)   conv1 im2col patches (4 pool offsets x 13x16 pos x 9 taps)
    w1_ref: (9, 32)       b1_ref: (1, 32)
    w2_ref: (25, 32, 64)  b2_ref: (1, 64)
    fw1_ref: (64, 32)  fb1_ref: (1, 32)  fw2_ref: (32, 10)  fb2_ref: (1, 10)
    o_ref : (1, B, 10)
    """
    B = p_ref.shape[0]

    # ---- Conv2d(1, 32, 3) as ONE im2col matmul, fused with MaxPool2d(2, 2) ----
    p = p_ref[...].reshape(B * _POS1, _CONV1_PATCH)                    # (B*832, 9)
    y1 = jnp.dot(p, w1_ref[...], preferred_element_type=jnp.float32)   # (B*832, 32)
    y1 = y1.reshape(B, 4, _POOL1_H * _POOL1_WPAD, 32)                  # (B, 4, 208, 32)
    pooled = jnp.maximum(jnp.maximum(y1[:, 0], y1[:, 1]),
                         jnp.maximum(y1[:, 2], y1[:, 3]))              # max over 2x2 window
    pooled = pooled + b1_ref[...]                                      # bias AFTER the max
    pooled = pooled.reshape(B, _POOL1_H, _POOL1_WPAD, 32)              # (B, 13, 16, 32)

    # ---- Conv2d(32, 64, 5): im2col built in-kernel as 25 shifted matmuls ----
    w2 = w2_ref[...]                                                   # (25, 32, 64)
    acc = jnp.zeros((B * _CONV2_POS, 64), jnp.float32)
    for kh in range(5):
        for kw in range(5):
            slab = pooled[:, kh:kh + 8, kw:kw + 8, :].reshape(B * _CONV2_POS, 32)
            acc = acc + jnp.dot(slab, w2[kh * 5 + kw],
                                preferred_element_type=jnp.float32)

    # ---- MaxPool2d(2,2) + AdaptiveMaxPool2d((1,1)) == global max over the 8x8
    #      conv2-output region; conv2 bias added AFTER the max (commutes).
    # TODO(synk): Dropout2d(p=0.1) is applied as inference-mode identity
    # (train-time stochastic channel dropout not reproduced).
    feat = jnp.max(acc.reshape(B, _CONV2_POS, 64), axis=1) + b2_ref[...]   # (B, 64)

    # ---- Linear(64, 32) -> ReLU -> Linear(32, 10), fused head ----
    z = jnp.dot(feat, fw1_ref[...], preferred_element_type=jnp.float32) + fb1_ref[...]
    z = jnp.maximum(z, 0.0)
    logits = jnp.dot(z, fw2_ref[...], preferred_element_type=jnp.float32) + fb2_ref[...]
    o_ref[0] = logits.astype(o_ref.dtype)


# --------------------------- JAX glue (im2col etc.) --------------------------

def _conv1_pool_patches(x):
    """x: (N, 28, 28) -> (N, 832, 9) conv1 im2col patches fused with the 2x2
    max-pool: row layout is (pool offset, pooled row, pooled col padded 13->16)."""
    N = x.shape[0]
    windows = []
    for dh in range(2):
        for dw in range(2):
            taps = []
            for kh in range(3):
                for kw in range(3):
                    r0, c0 = dh + kh, dw + kw
                    taps.append(x[:, r0:r0 + 26:2, c0:c0 + 26:2])      # (N, 13, 13)
            windows.append(jnp.stack(taps, axis=-1))                   # (N, 13, 13, 9)
    p = jnp.stack(windows, axis=1)                                     # (N, 4, 13, 13, 9)
    p = jnp.pad(p, ((0, 0), (0, 0), (0, 0), (0, _POOL1_WPAD - _POOL1_W), (0, 0)))
    return p.reshape(N, _POS1, _CONV1_PATCH)                           # (N, 832, 9)


def _choose_batch_block(n, max_b=8):
    """Samples per grid step: large enough to amortize per-step overhead, small
    enough for the lane-padded patch tile to fit scoped VMEM (v7x: 64 MiB),
    and keeping >=2 grid steps when possible so both v7x TensorCores get work."""
    b = min(max_b, n)
    while b > 1 and (n + b - 1) // b < 2:
        b = (b + 1) // 2
    return max(b, 1)


def init_params(key):
    ks = jax.random.split(key, 8)
    s = 0.1
    w1 = s * jax.random.normal(ks[0], (3, 3, 1, 32), jnp.float32)   # HWIO
    b1 = s * jax.random.normal(ks[1], (32,), jnp.float32)
    w2 = s * jax.random.normal(ks[2], (5, 5, 32, 64), jnp.float32)  # HWIO
    b2 = s * jax.random.normal(ks[3], (64,), jnp.float32)
    fw1 = s * jax.random.normal(ks[4], (64, 32), jnp.float32)
    fb1 = s * jax.random.normal(ks[5], (32,), jnp.float32)
    fw2 = s * jax.random.normal(ks[6], (32, 10), jnp.float32)
    fb2 = s * jax.random.normal(ks[7], (10,), jnp.float32)
    return (w1, b1, w2, b2, fw1, fb1, fw2, fb2)


@jax.jit
def net_forward(x_nchw, params):
    w1, b1, w2, b2, fw1, fb1, fw2, fb2 = params
    N = x_nchw.shape[0]
    x = x_nchw[:, 0, :, :].astype(jnp.float32)          # (N, 28, 28); C_in == 1

    B = _choose_batch_block(N)
    G = (N + B - 1) // B
    n_pad = G * B
    if n_pad != N:
        x = jnp.pad(x, ((0, n_pad - N), (0, 0), (0, 0)))

    patches = _conv1_pool_patches(x)                    # (n_pad, 832, 9)

    logits = pl.pallas_call(
        fused_net_kernel,
        out_shape=jax.ShapeDtypeStruct((G, B, 10), jnp.float32),
        grid=(G,),
        in_specs=[
            pl.BlockSpec((B, _POS1, _CONV1_PATCH), lambda g: (g, 0, 0)),
            pl.BlockSpec((9, 32), lambda g: (0, 0)),
            pl.BlockSpec((1, 32), lambda g: (0, 0)),
            pl.BlockSpec((25, 32, 64), lambda g: (0, 0, 0)),
            pl.BlockSpec((1, 64), lambda g: (0, 0)),
            pl.BlockSpec((64, 32), lambda g: (0, 0)),
            pl.BlockSpec((1, 32), lambda g: (0, 0)),
            pl.BlockSpec((32, 10), lambda g: (0, 0)),
            pl.BlockSpec((1, 10), lambda g: (0, 0)),
        ],
        out_specs=pl.BlockSpec((1, B, 10), lambda g: (g, 0, 0)),
        compiler_params=pltpu.CompilerParams(
            dimension_semantics=("parallel",),
            vmem_limit_bytes=32 * 1024 * 1024,
        ),
    )(patches, w1.reshape(9, 32), b1.reshape(1, 32),
      w2.reshape(25, 32, 64), b2.reshape(1, 64),
      fw1, fb1.reshape(1, 32), fw2, fb2.reshape(1, 10))

    return logits.reshape(n_pad, 10)[:N]


def reference_forward(x_nchw, params):
    """Pure-JAX (XLA) reference mirroring the PyTorch forward, for checking."""
    w1, b1, w2, b2, fw1, fb1, fw2, fb2 = params
    x = jnp.transpose(x_nchw, (0, 2, 3, 1)).astype(jnp.float32)
    dn = ("NHWC", "HWIO", "NHWC")
    y = jax.lax.conv_general_dilated(x, w1, (1, 1), "VALID", dimension_numbers=dn) + b1
    y = jax.lax.reduce_window(y, -jnp.inf, jax.lax.max, (1, 2, 2, 1), (1, 2, 2, 1), "VALID")
    y = jax.lax.conv_general_dilated(y, w2, (1, 1), "VALID", dimension_numbers=dn) + b2
    y = jax.lax.reduce_window(y, -jnp.inf, jax.lax.max, (1, 2, 2, 1), (1, 2, 2, 1), "VALID")
    y = jnp.max(y, axis=(1, 2))          # Dropout2d(eval)=id, AdaptiveMaxPool(1,1), Flatten
    y = jnp.maximum(y @ fw1 + fb1, 0.0)
    return y @ fw2 + fb2


if __name__ == "__main__":
    key = jax.random.PRNGKey(0)
    pkey, xkey = jax.random.split(key)
    params = init_params(pkey)
    x = jax.random.normal(xkey, (2, 1, 28, 28), jnp.float32)   # NCHW, as in PyTorch

    out = jax.block_until_ready(net_forward(x, params))
    assert out.shape == (2, 10), out.shape

    ref = reference_forward(x, params)
    assert jnp.allclose(out, ref, rtol=1e-3, atol=1e-3), (out, ref)
    print("KERNEL_OK")
</pallas_src>

<mosaic_0001>
module attributes {stable_mosaic.version = 11 : i64} {
  func.func @fused_net_kernel(%arg0: i32, %arg1: memref<1x832x9xf32, #tpu.memory_space<vmem>>, %arg2: memref<9x32xf32, #tpu.memory_space<vmem>>, %arg3: memref<1x32xf32, #tpu.memory_space<vmem>>, %arg4: memref<25x32x64xf32, #tpu.memory_space<vmem>>, %arg5: memref<1x64xf32, #tpu.memory_space<vmem>>, %arg6: memref<64x32xf32, #tpu.memory_space<vmem>>, %arg7: memref<1x32xf32, #tpu.memory_space<vmem>>, %arg8: memref<32x10xf32, #tpu.memory_space<vmem>>, %arg9: memref<1x10xf32, #tpu.memory_space<vmem>>, %arg10: memref<1x1x10xf32, #tpu.memory_space<vmem>>) attributes {dimension_semantics = [#tpu.dimension_semantics<parallel>], iteration_bounds = array<i64: 2>, scalar_prefetch = 0 : i64, scratch_operands = 0 : i64, tpu.core_type = #tpu.core_type<tc>, window_params = [{transform_indices = @transform_0, window_bounds = array<i64: 1, 832, 9>}, {pipeline_mode = #tpu.pipeline_mode<synchronous>, transform_indices = @transform_1, window_bounds = array<i64: 9, 32>}, {pipeline_mode = #tpu.pipeline_mode<synchronous>, transform_indices = @transform_2, window_bounds = array<i64: 1, 32>}, {pipeline_mode = #tpu.pipeline_mode<synchronous>, transform_indices = @transform_3, window_bounds = array<i64: 25, 32, 64>}, {pipeline_mode = #tpu.pipeline_mode<synchronous>, transform_indices = @transform_4, window_bounds = array<i64: 1, 64>}, {pipeline_mode = #tpu.pipeline_mode<synchronous>, transform_indices = @transform_5, window_bounds = array<i64: 64, 32>}, {pipeline_mode = #tpu.pipeline_mode<synchronous>, transform_indices = @transform_6, window_bounds = array<i64: 1, 32>}, {pipeline_mode = #tpu.pipeline_mode<synchronous>, transform_indices = @transform_7, window_bounds = array<i64: 32, 10>}, {pipeline_mode = #tpu.pipeline_mode<synchronous>, transform_indices = @transform_8, window_bounds = array<i64: 1, 10>}, {transform_indices = @transform_9, window_bounds = array<i64: 1, 1, 10>}]} {
    %c0 = arith.constant 0 : index
    %c0_0 = arith.constant 0 : index
    %c0_1 = arith.constant 0 : index
    %0 = vector.load %arg1[%c0, %c0_0, %c0_1] : memref<1x832x9xf32, #tpu.memory_space<vmem>>, vector<1x832x9xf32>
    %1 = vector.shape_cast %0 : vector<1x832x9xf32> to vector<832x9xf32>
    %c0_2 = arith.constant 0 : index
    %c0_3 = arith.constant 0 : index
    %2 = vector.load %arg2[%c0_2, %c0_3] : memref<9x32xf32, #tpu.memory_space<vmem>>, vector<9x32xf32>
    %cst = arith.constant dense<0.000000e+00> : vector<832x32xf32>
    %3 = tpu.matmul %1, %2, %cst {dimension_numbers = #tpu.dot_dimension_numbers<[1], [0], [0], [1], [0, 0, 1, 1], [], []>} : vector<832x9xf32>, vector<9x32xf32>, vector<832x32xf32> -> vector<832x32xf32>
    %4 = vector.shape_cast %3 : vector<832x32xf32> to vector<1x4x208x32xf32>
    %5 = vector.extract_strided_slice %4 {offsets = [0, 0, 0, 0], sizes = [1, 1, 208, 32], strides = [1, 1, 1, 1]} : vector<1x4x208x32xf32> to vector<1x1x208x32xf32>
    %6 = vector.shape_cast %5 : vector<1x1x208x32xf32> to vector<1x208x32xf32>
    %7 = vector.extract_strided_slice %4 {offsets = [0, 1, 0, 0], sizes = [1, 1, 208, 32], strides = [1, 1, 1, 1]} : vector<1x4x208x32xf32> to vector<1x1x208x32xf32>
    %8 = vector.shape_cast %7 : vector<1x1x208x32xf32> to vector<1x208x32xf32>
    %9 = arith.maximumf %6, %8 : vector<1x208x32xf32>
    %10 = vector.extract_strided_slice %4 {offsets = [0, 2, 0, 0], sizes = [1, 1, 208, 32], strides = [1, 1, 1, 1]} : vector<1x4x208x32xf32> to vector<1x1x208x32xf32>
    %11 = vector.shape_cast %10 : vector<1x1x208x32xf32> to vector<1x208x32xf32>
    %12 = vector.extract_strided_slice %4 {offsets = [0, 3, 0, 0], sizes = [1, 1, 208, 32], strides = [1, 1, 1, 1]} : vector<1x4x208x32xf32> to vector<1x1x208x32xf32>
    %13 = vector.shape_cast %12 : vector<1x1x208x32xf32> to vector<1x208x32xf32>
    %14 = arith.maximumf %11, %13 : vector<1x208x32xf32>
    %15 = arith.maximumf %9, %14 : vector<1x208x32xf32>
    %c0_4 = arith.constant 0 : index
    %c0_5 = arith.constant 0 : index
    %16 = vector.load %arg3[%c0_4, %c0_5] : memref<1x32xf32, #tpu.memory_space<vmem>>, vector<1x32xf32>
    %17 = vector.shape_cast %16 : vector<1x32xf32> to vector<1x1x32xf32>
    %18 = vector.broadcast %17 : vector<1x1x32xf32> to vector<1x208x32xf32>
    %19 = arith.addf %15, %18 : vector<1x208x32xf32>
    %20 = vector.shape_cast %19 : vector<1x208x32xf32> to vector<1x13x16x32xf32>
    %c0_6 = arith.constant 0 : index
    %c0_7 = arith.constant 0 : index
    %c0_8 = arith.constant 0 : index
    %21 = vector.load %arg4[%c0_6, %c0_7, %c0_8] : memref<25x32x64xf32, #tpu.memory_space<vmem>>, vector<25x32x64xf32>
    %cst_9 = arith.constant 0.000000e+00 : f32
    %22 = vector.broadcast %cst_9 : f32 to vector<64x64xf32>
    %23 = vector.extract_strided_slice %20 {offsets = [0, 0, 0, 0], sizes = [1, 8, 8, 32], strides = [1, 1, 1, 1]} : vector<1x13x16x32xf32> to vector<1x8x8x32xf32>
    %24 = vector.shape_cast %23 : vector<1x8x8x32xf32> to vector<64x32xf32>
    %25 = vector.extract_strided_slice %21 {offsets = [0, 0, 0], sizes = [1, 32, 64], strides = [1, 1, 1]} : vector<25x32x64xf32> to vector<1x32x64xf32>
    %26 = vector.shape_cast %25 : vector<1x32x64xf32> to vector<32x64xf32>
    %cst_10 = arith.constant dense<0.000000e+00> : vector<64x64xf32>
    %27 = tpu.matmul %24, %26, %cst_10 {dimension_numbers = #tpu.dot_dimension_numbers<[1], [0], [0], [1], [0, 0, 1, 1], [], []>} : vector<64x32xf32>, vector<32x64xf32>, vector<64x64xf32> -> vector<64x64xf32>
    %28 = arith.addf %22, %27 : vector<64x64xf32>
    %29 = vector.extract_strided_slice %20 {offsets = [0, 0, 1, 0], sizes = [1, 8, 8, 32], strides = [1, 1, 1, 1]} : vector<1x13x16x32xf32> to vector<1x8x8x32xf32>
    %30 = vector.shape_cast %29 : vector<1x8x8x32xf32> to vector<64x32xf32>
    %31 = vector.extract_strided_slice %21 {offsets = [1, 0, 0], sizes = [1, 32, 64], strides = [1, 1, 1]} : vector<25x32x64xf32> to vector<1x32x64xf32>
    %32 = vector.shape_cast %31 : vector<1x32x64xf32> to vector<32x64xf32>
    %cst_11 = arith.constant dense<0.000000e+00> : vector<64x64xf32>
    %33 = tpu.matmul %30, %32, %cst_11 {dimension_numbers = #tpu.dot_dimension_numbers<[1], [0], [0], [1], [0, 0, 1, 1], [], []>} : vector<64x32xf32>, vector<32x64xf32>, vector<64x64xf32> -> vector<64x64xf32>
    %34 = arith.addf %28, %33 : vector<64x64xf32>
    %35 = vector.extract_strided_slice %20 {offsets = [0, 0, 2, 0], sizes = [1, 8, 8, 32], strides = [1, 1, 1, 1]} : vector<1x13x16x32xf32> to vector<1x8x8x32xf32>
    %36 = vector.shape_cast %35 : vector<1x8x8x32xf32> to vector<64x32xf32>
    %37 = vector.extract_strided_slice %21 {offsets = [2, 0, 0], sizes = [1, 32, 64], strides = [1, 1, 1]} : vector<25x32x64xf32> to vector<1x32x64xf32>
    %38 = vector.shape_cast %37 : vector<1x32x64xf32> to vector<32x64xf32>
    %cst_12 = arith.constant dense<0.000000e+00> : vector<64x64xf32>
    %39 = tpu.matmul %36, %38, %cst_12 {dimension_numbers = #tpu.dot_dimension_numbers<[1], [0], [0], [1], [0, 0, 1, 1], [], []>} : vector<64x32xf32>, vector<32x64xf32>, vector<64x64xf32> -> vector<64x64xf32>
    %40 = arith.addf %34, %39 : vector<64x64xf32>
    %41 = vector.extract_strided_slice %20 {offsets = [0, 0, 3, 0], sizes = [1, 8, 8, 32], strides = [1, 1, 1, 1]} : vector<1x13x16x32xf32> to vector<1x8x8x32xf32>
    %42 = vector.shape_cast %41 : vector<1x8x8x32xf32> to vector<64x32xf32>
    %43 = vector.extract_strided_slice %21 {offsets = [3, 0, 0], sizes = [1, 32, 64], strides = [1, 1, 1]} : vector<25x32x64xf32> to vector<1x32x64xf32>
    %44 = vector.shape_cast %43 : vector<1x32x64xf32> to vector<32x64xf32>
    %cst_13 = arith.constant dense<0.000000e+00> : vector<64x64xf32>
    %45 = tpu.matmul %42, %44, %cst_13 {dimension_numbers = #tpu.dot_dimension_numbers<[1], [0], [0], [1], [0, 0, 1, 1], [], []>} : vector<64x32xf32>, vector<32x64xf32>, vector<64x64xf32> -> vector<64x64xf32>
    %46 = arith.addf %40, %45 : vector<64x64xf32>
    %47 = vector.extract_strided_slice %20 {offsets = [0, 0, 4, 0], sizes = [1, 8, 8, 32], strides = [1, 1, 1, 1]} : vector<1x13x16x32xf32> to vector<1x8x8x32xf32>
    %48 = vector.shape_cast %47 : vector<1x8x8x32xf32> to vector<64x32xf32>
    %49 = vector.extract_strided_slice %21 {offsets = [4, 0, 0], sizes = [1, 32, 64], strides = [1, 1, 1]} : vector<25x32x64xf32> to vector<1x32x64xf32>
    %50 = vector.shape_cast %49 : vector<1x32x64xf32> to vector<32x64xf32>
    %cst_14 = arith.constant dense<0.000000e+00> : vector<64x64xf32>
    %51 = tpu.matmul %48, %50, %cst_14 {dimension_numbers = #tpu.dot_dimension_numbers<[1], [0], [0], [1], [0, 0, 1, 1], [], []>} : vector<64x32xf32>, vector<32x64xf32>, vector<64x64xf32> -> vector<64x64xf32>
    %52 = arith.addf %46, %51 : vector<64x64xf32>
    %53 = vector.extract_strided_slice %20 {offsets = [0, 1, 0, 0], sizes = [1, 8, 8, 32], strides = [1, 1, 1, 1]} : vector<1x13x16x32xf32> to vector<1x8x8x32xf32>
    %54 = vector.shape_cast %53 : vector<1x8x8x32xf32> to vector<64x32xf32>
    %55 = vector.extract_strided_slice %21 {offsets = [5, 0, 0], sizes = [1, 32, 64], strides = [1, 1, 1]} : vector<25x32x64xf32> to vector<1x32x64xf32>
    %56 = vector.shape_cast %55 : vector<1x32x64xf32> to vector<32x64xf32>
    %cst_15 = arith.constant dense<0.000000e+00> : vector<64x64xf32>
    %57 = tpu.matmul %54, %56, %cst_15 {dimension_numbers = #tpu.dot_dimension_numbers<[1], [0], [0], [1], [0, 0, 1, 1], [], []>} : vector<64x32xf32>, vector<32x64xf32>, vector<64x64xf32> -> vector<64x64xf32>
    %58 = arith.addf %52, %57 : vector<64x64xf32>
    %59 = vector.extract_strided_slice %20 {offsets = [0, 1, 1, 0], sizes = [1, 8, 8, 32], strides = [1, 1, 1, 1]} : vector<1x13x16x32xf32> to vector<1x8x8x32xf32>
    %60 = vector.shape_cast %59 : vector<1x8x8x32xf32> to vector<64x32xf32>
    %61 = vector.extract_strided_slice %21 {offsets = [6, 0, 0], sizes = [1, 32, 64], strides = [1, 1, 1]} : vector<25x32x64xf32> to vector<1x32x64xf32>
    %62 = vector.shape_cast %61 : vector<1x32x64xf32> to vector<32x64xf32>
    %cst_16 = arith.constant dense<0.000000e+00> : vector<64x64xf32>
    %63 = tpu.matmul %60, %62, %cst_16 {dimension_numbers = #tpu.dot_dimension_numbers<[1], [0], [0], [1], [0, 0, 1, 1], [], []>} : vector<64x32xf32>, vector<32x64xf32>, vector<64x64xf32> -> vector<64x64xf32>
    %64 = arith.addf %58, %63 : vector<64x64xf32>
    %65 = vector.extract_strided_slice %20 {offsets = [0, 1, 2, 0], sizes = [1, 8, 8, 32], strides = [1, 1, 1, 1]} : vector<1x13x16x32xf32> to vector<1x8x8x32xf32>
    %66 = vector.shape_cast %65 : vector<1x8x8x32xf32> to vector<64x32xf32>
    %67 = vector.extract_strided_slice %21 {offsets = [7, 0, 0], sizes = [1, 32, 64], strides = [1, 1, 1]} : vector<25x32x64xf32> to vector<1x32x64xf32>
    %68 = vector.shape_cast %67 : vector<1x32x64xf32> to vector<32x64xf32>
    %cst_17 = arith.constant dense<0.000000e+00> : vector<64x64xf32>
    %69 = tpu.matmul %66, %68, %cst_17 {dimension_numbers = #tpu.dot_dimension_numbers<[1], [0], [0], [1], [0, 0, 1, 1], [], []>} : vector<64x32xf32>, vector<32x64xf32>, vector<64x64xf32> -> vector<64x64xf32>
    %70 = arith.addf %64, %69 : vector<64x64xf32>
    %71 = vector.extract_strided_slice %20 {offsets = [0, 1, 3, 0], sizes = [1, 8, 8, 32], strides = [1, 1, 1, 1]} : vector<1x13x16x32xf32> to vector<1x8x8x32xf32>
    %72 = vector.shape_cast %71 : vector<1x8x8x32xf32> to vector<64x32xf32>
    %73 = vector.extract_strided_slice %21 {offsets = [8, 0, 0], sizes = [1, 32, 64], strides = [1, 1, 1]} : vector<25x32x64xf32> to vector<1x32x64xf32>
    %74 = vector.shape_cast %73 : vector<1x32x64xf32> to vector<32x64xf32>
    %cst_18 = arith.constant dense<0.000000e+00> : vector<64x64xf32>
    %75 = tpu.matmul %72, %74, %cst_18 {dimension_numbers = #tpu.dot_dimension_numbers<[1], [0], [0], [1], [0, 0, 1, 1], [], []>} : vector<64x32xf32>, vector<32x64xf32>, vector<64x64xf32> -> vector<64x64xf32>
    %76 = arith.addf %70, %75 : vector<64x64xf32>
    %77 = vector.extract_strided_slice %20 {offsets = [0, 1, 4, 0], sizes = [1, 8, 8, 32], strides = [1, 1, 1, 1]} : vector<1x13x16x32xf32> to vector<1x8x8x32xf32>
    %78 = vector.shape_cast %77 : vector<1x8x8x32xf32> to vector<64x32xf32>
    %79 = vector.extract_strided_slice %21 {offsets = [9, 0, 0], sizes = [1, 32, 64], strides = [1, 1, 1]} : vector<25x32x64xf32> to vector<1x32x64xf32>
    %80 = vector.shape_cast %79 : vector<1x32x64xf32> to vector<32x64xf32>
    %cst_19 = arith.constant dense<0.000000e+00> : vector<64x64xf32>
    %81 = tpu.matmul %78, %80, %cst_19 {dimension_numbers = #tpu.dot_dimension_numbers<[1], [0], [0], [1], [0, 0, 1, 1], [], []>} : vector<64x32xf32>, vector<32x64xf32>, vector<64x64xf32> -> vector<64x64xf32>
    %82 = arith.addf %76, %81 : vector<64x64xf32>
    %83 = vector.extract_strided_slice %20 {offsets = [0, 2, 0, 0], sizes = [1, 8, 8, 32], strides = [1, 1, 1, 1]} : vector<1x13x16x32xf32> to vector<1x8x8x32xf32>
    %84 = vector.shape_cast %83 : vector<1x8x8x32xf32> to vector<64x32xf32>
    %85 = vector.extract_strided_slice %21 {offsets = [10, 0, 0], sizes = [1, 32, 64], strides = [1, 1, 1]} : vector<25x32x64xf32> to vector<1x32x64xf32>
    %86 = vector.shape_cast %85 : vector<1x32x64xf32> to vector<32x64xf32>
    %cst_20 = arith.constant dense<0.000000e+00> : vector<64x64xf32>
    %87 = tpu.matmul %84, %86, %cst_20 {dimension_numbers = #tpu.dot_dimension_numbers<[1], [0], [0], [1], [0, 0, 1, 1], [], []>} : vector<64x32xf32>, vector<32x64xf32>, vector<64x64xf32> -> vector<64x64xf32>
    %88 = arith.addf %82, %87 : vector<64x64xf32>
    %89 = vector.extract_strided_slice %20 {offsets = [0, 2, 1, 0], sizes = [1, 8, 8, 32], strides = [1, 1, 1, 1]} : vector<1x13x16x32xf32> to vector<1x8x8x32xf32>
    %90 = vector.shape_cast %89 : vector<1x8x8x32xf32> to vector<64x32xf32>
    %91 = vector.extract_strided_slice %21 {offsets = [11, 0, 0], sizes = [1, 32, 64], strides = [1, 1, 1]} : vector<25x32x64xf32> to vector<1x32x64xf32>
    %92 = vector.shape_cast %91 : vector<1x32x64xf32> to vector<32x64xf32>
    %cst_21 = arith.constant dense<0.000000e+00> : vector<64x64xf32>
    %93 = tpu.matmul %90, %92, %cst_21 {dimension_numbers = #tpu.dot_dimension_numbers<[1], [0], [0], [1], [0, 0, 1, 1], [], []>} : vector<64x32xf32>, vector<32x64xf32>, vector<64x64xf32> -> vector<64x64xf32>
    %94 = arith.addf %88, %93 : vector<64x64xf32>
    %95 = vector.extract_strided_slice %20 {offsets = [0, 2, 2, 0], sizes = [1, 8, 8, 32], strides = [1, 1, 1, 1]} : vector<1x13x16x32xf32> to vector<1x8x8x32xf32>
    %96 = vector.shape_cast %95 : vector<1x8x8x32xf32> to vector<64x32xf32>
    %97 = vector.extract_strided_slice %21 {offsets = [12, 0, 0], sizes = [1, 32, 64], strides = [1, 1, 1]} : vector<25x32x64xf32> to vector<1x32x64xf32>
    %98 = vector.shape_cast %97 : vector<1x32x64xf32> to vector<32x64xf32>
    %cst_22 = arith.constant dense<0.000000e+00> : vector<64x64xf32>
    %99 = tpu.matmul %96, %98, %cst_22 {dimension_numbers = #tpu.dot_dimension_numbers<[1], [0], [0], [1], [0, 0, 1, 1], [], []>} : vector<64x32xf32>, vector<32x64xf32>, vector<64x64xf32> -> vector<64x64xf32>
    %100 = arith.addf %94, %99 : vector<64x64xf32>
    %101 = vector.extract_strided_slice %20 {offsets = [0, 2, 3, 0], sizes = [1, 8, 8, 32], strides = [1, 1, 1, 1]} : vector<1x13x16x32xf32> to vector<1x8x8x32xf32>
    %102 = vector.shape_cast %101 : vector<1x8x8x32xf32> to vector<64x32xf32>
    %103 = vector.extract_strided_slice %21 {offsets = [13, 0, 0], sizes = [1, 32, 64], strides = [1, 1, 1]} : vector<25x32x64xf32> to vector<1x32x64xf32>
    %104 = vector.shape_cast %103 : vector<1x32x64xf32> to vector<32x64xf32>
    %cst_23 = arith.constant dense<0.000000e+00> : vector<64x64xf32>
    %105 = tpu.matmul %102, %104, %cst_23 {dimension_numbers = #tpu.dot_dimension_numbers<[1], [0], [0], [1], [0, 0, 1, 1], [], []>} : vector<64x32xf32>, vector<32x64xf32>, vector<64x64xf32> -> vector<64x64xf32>
    %106 = arith.addf %100, %105 : vector<64x64xf32>
    %107 = vector.extract_strided_slice %20 {offsets = [0, 2, 4, 0], sizes = [1, 8, 8, 32], strides = [1, 1, 1, 1]} : vector<1x13x16x32xf32> to vector<1x8x8x32xf32>
    %108 = vector.shape_cast %107 : vector<1x8x8x32xf32> to vector<64x32xf32>
    %109 = vector.extract_strided_slice %21 {offsets = [14, 0, 0], sizes = [1, 32, 64], strides = [1, 1, 1]} : vector<25x32x64xf32> to vector<1x32x64xf32>
    %110 = vector.shape_cast %109 : vector<1x32x64xf32> to vector<32x64xf32>
    %cst_24 = arith.constant dense<0.000000e+00> : vector<64x64xf32>
    %111 = tpu.matmul %108, %110, %cst_24 {dimension_numbers = #tpu.dot_dimension_numbers<[1], [0], [0], [1], [0, 0, 1, 1], [], []>} : vector<64x32xf32>, vector<32x64xf32>, vector<64x64xf32> -> vector<64x64xf32>
    %112 = arith.addf %106, %111 : vector<64x64xf32>
    %113 = vector.extract_strided_slice %20 {offsets = [0, 3, 0, 0], sizes = [1, 8, 8, 32], strides = [1, 1, 1, 1]} : vector<1x13x16x32xf32> to vector<1x8x8x32xf32>
    %114 = vector.shape_cast %113 : vector<1x8x8x32xf32> to vector<64x32xf32>
    %115 = vector.extract_strided_slice %21 {offsets = [15, 0, 0], sizes = [1, 32, 64], strides = [1, 1, 1]} : vector<25x32x64xf32> to vector<1x32x64xf32>
    %116 = vector.shape_cast %115 : vector<1x32x64xf32> to vector<32x64xf32>
    %cst_25 = arith.constant dense<0.000000e+00> : vector<64x64xf32>
    %117 = tpu.matmul %114, %116, %cst_25 {dimension_numbers = #tpu.dot_dimension_numbers<[1], [0], [0], [1], [0, 0, 1, 1], [], []>} : vector<64x32xf32>, vector<32x64xf32>, vector<64x64xf32> -> vector<64x64xf32>
    %118 = arith.addf %112, %117 : vector<64x64xf32>
    %119 = vector.extract_strided_slice %20 {offsets = [0, 3, 1, 0], sizes = [1, 8, 8, 32], strides = [1, 1, 1, 1]} : vector<1x13x16x32xf32> to vector<1x8x8x32xf32>
    %120 = vector.shape_cast %119 : vector<1x8x8x32xf32> to vector<64x32xf32>
    %121 = vector.extract_strided_slice %21 {offsets = [16, 0, 0], sizes = [1, 32, 64], strides = [1, 1, 1]} : vector<25x32x64xf32> to vector<1x32x64xf32>
    %122 = vector.shape_cast %121 : vector<1x32x64xf32> to vector<32x64xf32>
    %cst_26 = arith.constant dense<0.000000e+00> : vector<64x64xf32>
    %123 = tpu.matmul %120, %122, %cst_26 {dimension_numbers = #tpu.dot_dimension_numbers<[1], [0], [0], [1], [0, 0, 1, 1], [], []>} : vector<64x32xf32>, vector<32x64xf32>, vector<64x64xf32> -> vector<64x64xf32>
    %124 = arith.addf %118, %123 : vector<64x64xf32>
    %125 = vector.extract_strided_slice %20 {offsets = [0, 3, 2, 0], sizes = [1, 8, 8, 32], strides = [1, 1, 1, 1]} : vector<1x13x16x32xf32> to vector<1x8x8x32xf32>
    %126 = vector.shape_cast %125 : vector<1x8x8x32xf32> to vector<64x32xf32>
    %127 = vector.extract_strided_slice %21 {offsets = [17, 0, 0], sizes = [1, 32, 64], strides = [1, 1, 1]} : vector<25x32x64xf32> to vector<1x32x64xf32>
    %128 = vector.shape_cast %127 : vector<1x32x64xf32> to vector<32x64xf32>
    %cst_27 = arith.constant dense<0.000000e+00> : vector<64x64xf32>
    %129 = tpu.matmul %126, %128, %cst_27 {dimension_numbers = #tpu.dot_dimension_numbers<[1], [0], [0], [1], [0, 0, 1, 1], [], []>} : vector<64x32xf32>, vector<32x64xf32>, vector<64x64xf32> -> vector<64x64xf32>
    %130 = arith.addf %124, %129 : vector<64x64xf32>
    %131 = vector.extract_strided_slice %20 {offsets = [0, 3, 3, 0], sizes = [1, 8, 8, 32], strides = [1, 1, 1, 1]} : vector<1x13x16x32xf32> to vector<1x8x8x32xf32>
    %132 = vector.shape_cast %131 : vector<1x8x8x32xf32> to vector<64x32xf32>
    %133 = vector.extract_strided_slice %21 {offsets = [18, 0, 0], sizes = [1, 32, 64], strides = [1, 1, 1]} : vector<25x32x64xf32> to vector<1x32x64xf32>
    %134 = vector.shape_cast %133 : vector<1x32x64xf32> to vector<32x64xf32>
    %cst_28 = arith.constant dense<0.000000e+00> : vector<64x64xf32>
    %135 = tpu.matmul %132, %134, %cst_28 {dimension_numbers = #tpu.dot_dimension_numbers<[1], [0], [0], [1], [0, 0, 1, 1], [], []>} : vector<64x32xf32>, vector<32x64xf32>, vector<64x64xf32> -> vector<64x64xf32>
    %136 = arith.addf %130, %135 : vector<64x64xf32>
    %137 = vector.extract_strided_slice %20 {offsets = [0, 3, 4, 0], sizes = [1, 8, 8, 32], strides = [1, 1, 1, 1]} : vector<1x13x16x32xf32> to vector<1x8x8x32xf32>
    %138 = vector.shape_cast %137 : vector<1x8x8x32xf32> to vector<64x32xf32>
    %139 = vector.extract_strided_slice %21 {offsets = [19, 0, 0], sizes = [1, 32, 64], strides = [1, 1, 1]} : vector<25x32x64xf32> to vector<1x32x64xf32>
    %140 = vector.shape_cast %139 : vector<1x32x64xf32> to vector<32x64xf32>
    %cst_29 = arith.constant dense<0.000000e+00> : vector<64x64xf32>
    %141 = tpu.matmul %138, %140, %cst_29 {dimension_numbers = #tpu.dot_dimension_numbers<[1], [0], [0], [1], [0, 0, 1, 1], [], []>} : vector<64x32xf32>, vector<32x64xf32>, vector<64x64xf32> -> vector<64x64xf32>
    %142 = arith.addf %136, %141 : vector<64x64xf32>
    %143 = vector.extract_strided_slice %20 {offsets = [0, 4, 0, 0], sizes = [1, 8, 8, 32], strides = [1, 1, 1, 1]} : vector<1x13x16x32xf32> to vector<1x8x8x32xf32>
    %144 = vector.shape_cast %143 : vector<1x8x8x32xf32> to vector<64x32xf32>
    %145 = vector.extract_strided_slice %21 {offsets = [20, 0, 0], sizes = [1, 32, 64], strides = [1, 1, 1]} : vector<25x32x64xf32> to vector<1x32x64xf32>
    %146 = vector.shape_cast %145 : vector<1x32x64xf32> to vector<32x64xf32>
    %cst_30 = arith.constant dense<0.000000e+00> : vector<64x64xf32>
    %147 = tpu.matmul %144, %146, %cst_30 {dimension_numbers = #tpu.dot_dimension_numbers<[1], [0], [0], [1], [0, 0, 1, 1], [], []>} : vector<64x32xf32>, vector<32x64xf32>, vector<64x64xf32> -> vector<64x64xf32>
    %148 = arith.addf %142, %147 : vector<64x64xf32>
    %149 = vector.extract_strided_slice %20 {offsets = [0, 4, 1, 0], sizes = [1, 8, 8, 32], strides = [1, 1, 1, 1]} : vector<1x13x16x32xf32> to vector<1x8x8x32xf32>
    %150 = vector.shape_cast %149 : vector<1x8x8x32xf32> to vector<64x32xf32>
    %151 = vector.extract_strided_slice %21 {offsets = [21, 0, 0], sizes = [1, 32, 64], strides = [1, 1, 1]} : vector<25x32x64xf32> to vector<1x32x64xf32>
    %152 = vector.shape_cast %151 : vector<1x32x64xf32> to vector<32x64xf32>
    %cst_31 = arith.constant dense<0.000000e+00> : vector<64x64xf32>
    %153 = tpu.matmul %150, %152, %cst_31 {dimension_numbers = #tpu.dot_dimension_numbers<[1], [0], [0], [1], [0, 0, 1, 1], [], []>} : vector<64x32xf32>, vector<32x64xf32>, vector<64x64xf32> -> vector<64x64xf32>
    %154 = arith.addf %148, %153 : vector<64x64xf32>
    %155 = vector.extract_strided_slice %20 {offsets = [0, 4, 2, 0], sizes = [1, 8, 8, 32], strides = [1, 1, 1, 1]} : vector<1x13x16x32xf32> to vector<1x8x8x32xf32>
    %156 = vector.shape_cast %155 : vector<1x8x8x32xf32> to vector<64x32xf32>
    %157 = vector.extract_strided_slice %21 {offsets = [22, 0, 0], sizes = [1, 32, 64], strides = [1, 1, 1]} : vector<25x32x64xf32> to vector<1x32x64xf32>
    %158 = vector.shape_cast %157 : vector<1x32x64xf32> to vector<32x64xf32>
    %cst_32 = arith.constant dense<0.000000e+00> : vector<64x64xf32>
    %159 = tpu.matmul %156, %158, %cst_32 {dimension_numbers = #tpu.dot_dimension_numbers<[1], [0], [0], [1], [0, 0, 1, 1], [], []>} : vector<64x32xf32>, vector<32x64xf32>, vector<64x64xf32> -> vector<64x64xf32>
    %160 = arith.addf %154, %159 : vector<64x64xf32>
    %161 = vector.extract_strided_slice %20 {offsets = [0, 4, 3, 0], sizes = [1, 8, 8, 32], strides = [1, 1, 1, 1]} : vector<1x13x16x32xf32> to vector<1x8x8x32xf32>
    %162 = vector.shape_cast %161 : vector<1x8x8x32xf32> to vector<64x32xf32>
    %163 = vector.extract_strided_slice %21 {offsets = [23, 0, 0], sizes = [1, 32, 64], strides = [1, 1, 1]} : vector<25x32x64xf32> to vector<1x32x64xf32>
    %164 = vector.shape_cast %163 : vector<1x32x64xf32> to vector<32x64xf32>
    %cst_33 = arith.constant dense<0.000000e+00> : vector<64x64xf32>
    %165 = tpu.matmul %162, %164, %cst_33 {dimension_numbers = #tpu.dot_dimension_numbers<[1], [0], [0], [1], [0, 0, 1, 1], [], []>} : vector<64x32xf32>, vector<32x64xf32>, vector<64x64xf32> -> vector<64x64xf32>
    %166 = arith.addf %160, %165 : vector<64x64xf32>
    %167 = vector.extract_strided_slice %20 {offsets = [0, 4, 4, 0], sizes = [1, 8, 8, 32], strides = [1, 1, 1, 1]} : vector<1x13x16x32xf32> to vector<1x8x8x32xf32>
    %168 = vector.shape_cast %167 : vector<1x8x8x32xf32> to vector<64x32xf32>
    %169 = vector.extract_strided_slice %21 {offsets = [24, 0, 0], sizes = [1, 32, 64], strides = [1, 1, 1]} : vector<25x32x64xf32> to vector<1x32x64xf32>
    %170 = vector.shape_cast %169 : vector<1x32x64xf32> to vector<32x64xf32>
    %cst_34 = arith.constant dense<0.000000e+00> : vector<64x64xf32>
    %171 = tpu.matmul %168, %170, %cst_34 {dimension_numbers = #tpu.dot_dimension_numbers<[1], [0], [0], [1], [0, 0, 1, 1], [], []>} : vector<64x32xf32>, vector<32x64xf32>, vector<64x64xf32> -> vector<64x64xf32>
    %172 = arith.addf %166, %171 : vector<64x64xf32>
    %173 = vector.shape_cast %172 : vector<64x64xf32> to vector<1x64x64xf32>
    %cst_35 = arith.constant dense<0xFF800000> : vector<1x64xf32>
    %174 = vector.multi_reduction <maximumf>, %173, %cst_35 [1] : vector<1x64x64xf32> to vector<1x64xf32>
    %c0_36 = arith.constant 0 : index
    %c0_37 = arith.constant 0 : index
    %175 = vector.load %arg5[%c0_36, %c0_37] : memref<1x64xf32, #tpu.memory_space<vmem>>, vector<1x64xf32>
    %176 = arith.addf %174, %175 : vector<1x64xf32>
    %c0_38 = arith.constant 0 : index
    %c0_39 = arith.constant 0 : index
    %177 = vector.load %arg6[%c0_38, %c0_39] : memref<64x32xf32, #tpu.memory_space<vmem>>, vector<64x32xf32>
    %cst_40 = arith.constant dense<0.000000e+00> : vector<1x32xf32>
    %178 = tpu.matmul %176, %177, %cst_40 {dimension_numbers = #tpu.dot_dimension_numbers<[1], [0], [0], [1], [0, 0, 1, 1], [], []>} : vector<1x64xf32>, vector<64x32xf32>, vector<1x32xf32> -> vector<1x32xf32>
    %c0_41 = arith.constant 0 : index
    %c0_42 = arith.constant 0 : index
    %179 = vector.load %arg7[%c0_41, %c0_42] : memref<1x32xf32, #tpu.memory_space<vmem>>, vector<1x32xf32>
    %180 = arith.addf %178, %179 : vector<1x32xf32>
    %cst_43 = arith.constant 0.000000e+00 : f32
    %181 = vector.broadcast %cst_43 : f32 to vector<1x32xf32>
    %182 = arith.maximumf %180, %181 : vector<1x32xf32>
    %c0_44 = arith.constant 0 : index
    %c0_45 = arith.constant 0 : index
    %183 = vector.load %arg8[%c0_44, %c0_45] : memref<32x10xf32, #tpu.memory_space<vmem>>, vector<32x10xf32>
    %cst_46 = arith.constant dense<0.000000e+00> : vector<1x10xf32>
    %184 = tpu.matmul %182, %183, %cst_46 {dimension_numbers = #tpu.dot_dimension_numbers<[1], [0], [0], [1], [0, 0, 1, 1], [], []>} : vector<1x32xf32>, vector<32x10xf32>, vector<1x10xf32> -> vector<1x10xf32>
    %c0_47 = arith.constant 0 : index
    %c0_48 = arith.constant 0 : index
    %185 = vector.load %arg9[%c0_47, %c0_48] : memref<1x10xf32, #tpu.memory_space<vmem>>, vector<1x10xf32>
    %186 = arith.addf %184, %185 : vector<1x10xf32>
    %c0_49 = arith.constant 0 : index
    %c0_50 = arith.constant 0 : index
    %c0_51 = arith.constant 0 : index
    %187 = vector.load %arg10[%c0_49, %c0_50, %c0_51] : memref<1x1x10xf32, #tpu.memory_space<vmem>>, vector<1x1x10xf32>
    %188 = vector.shape_cast %187 : vector<1x1x10xf32> to vector<1x10xf32>
    %189 = vector.shape_cast %186 : vector<1x10xf32> to vector<1x1x10xf32>
    tpu.vector_store %arg10[%c0_49, %c0_50, %c0_51], %189 {strides = array<i32>} : memref<1x1x10xf32, #tpu.memory_space<vmem>>, vector<1x1x10xf32>,
    return
  }
  func.func @transform_0(%arg0: i32) -> (i32, i32, i32) {
    %c0_i32 = arith.constant 0 : i32
    %c0_i32_0 = arith.constant 0 : i32
    %c0_i32_1 = arith.constant 0 : i32
    return %arg0, %c0_i32, %c0_i32_0 : i32, i32, i32
  }
  func.func @transform_1(%arg0: i32) -> (i32, i32) {
    %c0_i32 = arith.constant 0 : i32
    %c0_i32_0 = arith.constant 0 : i32
    %c0_i32_1 = arith.constant 0 : i32
    return %c0_i32, %c0_i32_0 : i32, i32
  }
  func.func @transform_2(%arg0: i32) -> (i32, i32) {
    %c0_i32 = arith.constant 0 : i32
    %c0_i32_0 = arith.constant 0 : i32
    %c0_i32_1 = arith.constant 0 : i32
    return %c0_i32, %c0_i32_0 : i32, i32
  }
  func.func @transform_3(%arg0: i32) -> (i32, i32, i32) {
    %c0_i32 = arith.constant 0 : i32
    %c0_i32_0 = arith.constant 0 : i32
    %c0_i32_1 = arith.constant 0 : i32
    %c0_i32_2 = arith.constant 0 : i32
    return %c0_i32, %c0_i32_0, %c0_i32_1 : i32, i32, i32
  }
  func.func @transform_4(%arg0: i32) -> (i32, i32) {
    %c0_i32 = arith.constant 0 : i32
    %c0_i32_0 = arith.constant 0 : i32
    %c0_i32_1 = arith.constant 0 : i32
    return %c0_i32, %c0_i32_0 : i32, i32
  }
  func.func @transform_5(%arg0: i32) -> (i32, i32) {
    %c0_i32 = arith.constant 0 : i32
    %c0_i32_0 = arith.constant 0 : i32
    %c0_i32_1 = arith.constant 0 : i32
    return %c0_i32, %c0_i32_0 : i32, i32
  }
  func.func @transform_6(%arg0: i32) -> (i32, i32) {
    %c0_i32 = arith.constant 0 : i32
    %c0_i32_0 = arith.constant 0 : i32
    %c0_i32_1 = arith.constant 0 : i32
    return %c0_i32, %c0_i32_0 : i32, i32
  }
  func.func @transform_7(%arg0: i32) -> (i32, i32) {
    %c0_i32 = arith.constant 0 : i32
    %c0_i32_0 = arith.constant 0 : i32
    %c0_i32_1 = arith.constant 0 : i32
    return %c0_i32, %c0_i32_0 : i32, i32
  }
  func.func @transform_8(%arg0: i32) -> (i32, i32) {
    %c0_i32 = arith.constant 0 : i32
    %c0_i32_0 = arith.constant 0 : i32
    %c0_i32_1 = arith.constant 0 : i32
    return %c0_i32, %c0_i32_0 : i32, i32
  }
  func.func @transform_9(%arg0: i32) -> (i32, i32, i32) {
    %c0_i32 = arith.constant 0 : i32
    %c0_i32_0 = arith.constant 0 : i32
    %c0_i32_1 = arith.constant 0 : i32
    return %arg0, %c0_i32, %c0_i32_0 : i32, i32, i32
  }
}

</mosaic_0001>

<llo_original>
// kernel: net_forward.1
$region0: #{net_forward.1}
  #allocation0 [shape = 'u32[]', space=smem, size = 0x4, offset = 0x4, fixed_abs, tag = 'smem constant byte address 0x4 - core index']
  #allocation1 [shape = 'u32[144,128]{1,0:T(1,128)}', space=vmem, size = 0x12000, scoped, tag = 'internal scratch']
  %s0 = inlined_call_operand.vmem [shape: f32[2,832,9], index: 0, kind: input, shape index: {}]
  %s1 = inlined_call_operand.vmem [shape: f32[9,32], index: 1, kind: input, shape index: {}]
  %s2 = inlined_call_operand.vmem [shape: f32[1,32], index: 2, kind: input, shape index: {}]
  %s3 = inlined_call_operand.vmem [shape: f32[25,32,64], index: 3, kind: input, shape index: {}]
  %s4 = inlined_call_operand.vmem [shape: f32[1,64], index: 4, kind: input, shape index: {}]
  %s5 = inlined_call_operand.vmem [shape: f32[64,32], index: 5, kind: input, shape index: {}]
  %s6 = inlined_call_operand.vmem [shape: f32[1,32], index: 6, kind: input, shape index: {}]
  %s7 = inlined_call_operand.vmem [shape: f32[32,10], index: 7, kind: input, shape index: {}]
  %s8 = inlined_call_operand.vmem [shape: f32[1,10], index: 8, kind: input, shape index: {}]
  %s9 = inlined_call_operand.hbm [shape: f32[2,1,10], index: 9, kind: output, shape index: {}]
  %s10 = sld [smem:[#allocation0]]
  $region69: #{net_forward.1} parent=0
    _
  %s12 = ssub.s32 1, %s10
  %s13 = scalar_select 0, %s12, %s10
  $region1: #{net_forward.1} parent=0
    #allocation2 [shape = 'u8[1024]{0}', space=vmem, size = 0x400, scoped, tag = 'output window, operand 0']
    #allocation3 [shape = 's32[2]{0}', space=sflag, size = 0x8, scoped, tag = 'scoped memory for net_forward.1']
    %14 = vsyncpa [#allocation3], 0
    %s15 = scalar_lea.sflag [#allocation3], 1
    %16 = vsyncpa %s15, 0
    loop: start=0, step=1, limit=4
    $region2: #{net_forward.1} parent=1 // loop_pre_header
      _
    $region3: #{net_forward.1} parent=1 // loop_header
      %s18 = sphi 0, %s22
      %p19 = scmp.ge.s32.totalorder %s18, 4
      %s28 = sphi 0, %s30
      %s31 = sphi 0, %s28
      %s32 = sphi 0, %s31
      %s48 = sphi 0, %s32
      %s52 = sphi 0, %s52
      %s54 = sphi 0, %s52
      %s55 = sphi 0, %s54
      %s69 = sphi 0, %s55
      %s73 = sphi 0, %s73
      %s75 = sphi 0, %s73
      %s76 = sphi 0, %s75
      %s90 = sphi 0, %s76
      %s94 = sphi 0, %s94
      %s96 = sphi 0, %s94
      %s97 = sphi 0, %s96
      %s111 = sphi 0, %s97
      %s115 = sphi 0, %s115
      %s117 = sphi 0, %s115
      %s118 = sphi 0, %s117
      %s132 = sphi 0, %s118
      %s136 = sphi 0, %s136
      %s138 = sphi 0, %s136
      %s139 = sphi 0, %s138
      %s153 = sphi 0, %s139
      %s157 = sphi 0, %s157
      %s159 = sphi 0, %s157
      %s160 = sphi 0, %s159
      %s174 = sphi 0, %s160
      %s178 = sphi 0, %s178
      %s180 = sphi 0, %s178
      %s181 = sphi 0, %s180
      %s195 = sphi 0, %s181
      %s199 = sphi 0, %s199
      %s201 = sphi 0, %s199
      %s202 = sphi 0, %s201
      %s216 = sphi 0, %s202
      %s222 = sphi 0, %s224
      %s225 = sphi 0, %s222
      %s226 = sphi 0, %s225
      %s242 = sphi 0, %s226
    $region4: #{net_forward.1} parent=1 // loop_header_branch
      %21 = sbr.rel (%p19) target = $region8
    $region5: #{net_forward.1} parent=1 // loop_body
      %s23 = ssub.s32 %s18, 1
      %s24 = ssub.s32 %s18, 2
      %s25 = sadd.s32 %s18, 1
      %s26 = ssub.s32 %s18, %s25
      %p27 = scmp.eq.s32.totalorder %s26, 0
      %s29 = sadd.s32 %s28, 1
      %s30 = scalar_select %p27, %s28, %s29
      %p33 = pneg %p27
      %p34 = scmp.eq.s32.totalorder %s18, 1
      %p35 = por %p33, %p34
      %p36 = scmp.ne.s32.totalorder %s28, %s31
      %p37 = scmp.eq.s32.totalorder %s18, 0
      %p38 = por %p36, %p37
      %p39 = scmp.ne.s32.totalorder %s28, %s31
      %p40 = scmp.eq.s32.totalorder %s23, 1
      %p41 = por %p39, %p40
      %p42 = scmp.ne.s32.totalorder %s31, %s32
      %p43 = scmp.eq.s32.totalorder %s23, 0
      %p44 = por %p42, %p43
      %p45 = scmp.ne.s32.totalorder %s31, %s32
      %p46 = scmp.eq.s32.totalorder %s24, 1
      %p47 = por %p45, %p46
      %p49 = scmp.ne.s32.totalorder %s32, %s48
      %p50 = scmp.eq.s32.totalorder %s24, 0
      %p51 = por %p49, %p50
      %s53 = sadd.s32 %s52, 1
      %p56 = scmp.eq.s32.totalorder %s18, 1
      %p57 = scmp.ne.s32.totalorder %s52, %s54
      %p58 = scmp.eq.s32.totalorder %s18, 0
      %p59 = por %p57, %p58
      %p60 = scmp.ne.s32.totalorder %s52, %s54
      %p61 = scmp.eq.s32.totalorder %s23, 1
      %p62 = por %p60, %p61
      %p63 = scmp.ne.s32.totalorder %s54, %s55
      %p64 = scmp.eq.s32.totalorder %s23, 0
      %p65 = por %p63, %p64
      %p66 = scmp.ne.s32.totalorder %s54, %s55
      %p67 = scmp.eq.s32.totalorder %s24, 1
      %p68 = por %p66, %p67
      %p70 = scmp.ne.s32.totalorder %s55, %s69
      %p71 = scmp.eq.s32.totalorder %s24, 0
      %p72 = por %p70, %p71
      %s74 = sadd.s32 %s73, 1
      %p77 = scmp.eq.s32.totalorder %s18, 1
      %p78 = scmp.ne.s32.totalorder %s73, %s75
      %p79 = scmp.eq.s32.totalorder %s18, 0
      %p80 = por %p78, %p79
      %p81 = scmp.ne.s32.totalorder %s73, %s75
      %p82 = scmp.eq.s32.totalorder %s23, 1
      %p83 = por %p81, %p82
      %p84 = scmp.ne.s32.totalorder %s75, %s76
      %p85 = scmp.eq.s32.totalorder %s23, 0
      %p86 = por %p84, %p85
      %p87 = scmp.ne.s32.totalorder %s75, %s76
      %p88 = scmp.eq.s32.totalorder %s24, 1
      %p89 = por %p87, %p88
      %p91 = scmp.ne.s32.totalorder %s76, %s90
      %p92 = scmp.eq.s32.totalorder %s24, 0
      %p93 = por %p91, %p92
      %s95 = sadd.s32 %s94, 1
      %p98 = scmp.eq.s32.totalorder %s18, 1
      %p99 = scmp.ne.s32.totalorder %s94, %s96
      %p100 = scmp.eq.s32.totalorder %s18, 0
      %p101 = por %p99, %p100
      %p102 = scmp.ne.s32.totalorder %s94, %s96
      %p103 = scmp.eq.s32.totalorder %s23, 1
      %p104 = por %p102, %p103
      %p105 = scmp.ne.s32.totalorder %s96, %s97
      %p106 = scmp.eq.s32.totalorder %s23, 0
      %p107 = por %p105, %p106
      %p108 = scmp.ne.s32.totalorder %s96, %s97
      %p109 = scmp.eq.s32.totalorder %s24, 1
      %p110 = por %p108, %p109
      %p112 = scmp.ne.s32.totalorder %s97, %s111
      %p113 = scmp.eq.s32.totalorder %s24, 0
      %p114 = por %p112, %p113
      %s116 = sadd.s32 %s115, 1
      %p119 = scmp.eq.s32.totalorder %s18, 1
      %p120 = scmp.ne.s32.totalorder %s115, %s117
      %p121 = scmp.eq.s32.totalorder %s18, 0
      %p122 = por %p120, %p121
      %p123 = scmp.ne.s32.totalorder %s115, %s117
      %p124 = scmp.eq.s32.totalorder %s23, 1
      %p125 = por %p123, %p124
      %p126 = scmp.ne.s32.totalorder %s117, %s118
      %p127 = scmp.eq.s32.totalorder %s23, 0
      %p128 = por %p126, %p127
      %p129 = scmp.ne.s32.totalorder %s117, %s118
      %p130 = scmp.eq.s32.totalorder %s24, 1
      %p131 = por %p129, %p130
      %p133 = scmp.ne.s32.totalorder %s118, %s132
      %p134 = scmp.eq.s32.totalorder %s24, 0
      %p135 = por %p133, %p134
      %s137 = sadd.s32 %s136, 1
      %p140 = scmp.eq.s32.totalorder %s18, 1
      %p141 = scmp.ne.s32.totalorder %s136, %s138
      %p142 = scmp.eq.s32.totalorder %s18, 0
      %p143 = por %p141, %p142
      %p144 = scmp.ne.s32.totalorder %s136, %s138
      %p145 = scmp.eq.s32.totalorder %s23, 1
      %p146 = por %p144, %p145
      %p147 = scmp.ne.s32.totalorder %s138, %s139
      %p148 = scmp.eq.s32.totalorder %s23, 0
      %p149 = por %p147, %p148
      %p150 = scmp.ne.s32.totalorder %s138, %s139
      %p151 = scmp.eq.s32.totalorder %s24, 1
      %p152 = por %p150, %p151
      %p154 = scmp.ne.s32.totalorder %s139, %s153
      %p155 = scmp.eq.s32.totalorder %s24, 0
      %p156 = por %p154, %p155
      %s158 = sadd.s32 %s157, 1
      %p161 = scmp.eq.s32.totalorder %s18, 1
      %p162 = scmp.ne.s32.totalorder %s157, %s159
      %p163 = scmp.eq.s32.totalorder %s18, 0
      %p164 = por %p162, %p163
      %p165 = scmp.ne.s32.totalorder %s157, %s159
      %p166 = scmp.eq.s32.totalorder %s23, 1
      %p167 = por %p165, %p166
      %p168 = scmp.ne.s32.totalorder %s159, %s160
      %p169 = scmp.eq.s32.totalorder %s23, 0
      %p170 = por %p168, %p169
      %p171 = scmp.ne.s32.totalorder %s159, %s160
      %p172 = scmp.eq.s32.totalorder %s24, 1
      %p173 = por %p171, %p172
      %p175 = scmp.ne.s32.totalorder %s160, %s174
      %p176 = scmp.eq.s32.totalorder %s24, 0
      %p177 = por %p175, %p176
      %s179 = sadd.s32 %s178, 1
      %p182 = scmp.eq.s32.totalorder %s18, 1
      %p183 = scmp.ne.s32.totalorder %s178, %s180
      %p184 = scmp.eq.s32.totalorder %s18, 0
      %p185 = por %p183, %p184
      %p186 = scmp.ne.s32.totalorder %s178, %s180
      %p187 = scmp.eq.s32.totalorder %s23, 1
      %p188 = por %p186, %p187
      %p189 = scmp.ne.s32.totalorder %s180, %s181
      %p190 = scmp.eq.s32.totalorder %s23, 0
      %p191 = por %p189, %p190
      %p192 = scmp.ne.s32.totalorder %s180, %s181
      %p193 = scmp.eq.s32.totalorder %s24, 1
      %p194 = por %p192, %p193
      %p196 = scmp.ne.s32.totalorder %s181, %s195
      %p197 = scmp.eq.s32.totalorder %s24, 0
      %p198 = por %p196, %p197
      %s200 = sadd.s32 %s199, 1
      %p203 = scmp.eq.s32.totalorder %s18, 1
      %p204 = scmp.ne.s32.totalorder %s199, %s201
      %p205 = scmp.eq.s32.totalorder %s18, 0
      %p206 = por %p204, %p205
      %p207 = scmp.ne.s32.totalorder %s199, %s201
      %p208 = scmp.eq.s32.totalorder %s23, 1
      %p209 = por %p207, %p208
      %p210 = scmp.ne.s32.totalorder %s201, %s202
      %p211 = scmp.eq.s32.totalorder %s23, 0
      %p212 = por %p210, %p211
      %p213 = scmp.ne.s32.totalorder %s201, %s202
      %p214 = scmp.eq.s32.totalorder %s24, 1
      %p215 = por %p213, %p214
      %p217 = scmp.ne.s32.totalorder %s202, %s216
      %p218 = scmp.eq.s32.totalorder %s24, 0
      %p219 = por %p217, %p218
      %s220 = ssub.s32 %s18, %s25
      %p221 = scmp.eq.s32.totalorder %s220, 0
      %s223 = sadd.s32 %s222, 1
      %s224 = scalar_select %p221, %s222, %s223
      %p227 = pneg %p221
      %p228 = scmp.eq.s32.totalorder %s18, 1
      %p229 = por %p227, %p228
      %p230 = scmp.ne.s32.totalorder %s222, %s225
      %p231 = scmp.eq.s32.totalorder %s18, 0
      %p232 = por %p230, %p231
      %p233 = scmp.ne.s32.totalorder %s222, %s225
      %p234 = scmp.eq.s32.totalorder %s23, 1
      %p235 = por %p233, %p234
      %p236 = scmp.ne.s32.totalorder %s225, %s226
      %p237 = scmp.eq.s32.totalorder %s23, 0
      %p238 = por %p236, %p237
      %p239 = scmp.ne.s32.totalorder %s225, %s226
      %p240 = scmp.eq.s32.totalorder %s24, 1
      %p241 = por %p239, %p240
      %p243 = scmp.ne.s32.totalorder %s226, %s242
      %p244 = scmp.eq.s32.totalorder %s24, 0
      %p245 = por %p243, %p244
      %p246 = scmp.le.s32.totalorder 1, %s18
      %p247 = scmp.lt.s32.totalorder %s18, 3
      %p248 = pnand %p246, %p247
      %p249 = pneg %p248
      // Predicated region
      $region9: #{net_forward.1} parent=5 // pred_check
        _
      $region10: #{net_forward.1} parent=5 // pred_check_branch
        %251 = sbr.rel (%p248) target = $region12
      $region11: #{net_forward.1} parent=5 // pred_region
        %s252 = ssub.s32 %s18, 1
        // Predicated region
        $region13: #{net_forward.1} parent=11 // pred_check
          %p253 = pneg %p65
        $region14: #{net_forward.1} parent=11 // pred_check_branch
          %255 = sbr.rel (%p253) target = $region16
        $region15: #{net_forward.1} parent=11 // pred_region
          _
        $region16: #{net_forward.1} parent=11 // pred_fallthru
          _
        // Predicated region
        $region17: #{net_forward.1} parent=11 // pred_check
          %p256 = pneg %p86
        $region18: #{net_forward.1} parent=11 // pred_check_branch
          %258 = sbr.rel (%p256) target = $region20
        $region19: #{net_forward.1} parent=11 // pred_region
          _
        $region20: #{net_forward.1} parent=11 // pred_fallthru
          _
        // Predicated region
        $region21: #{net_forward.1} parent=11 // pred_check
          %p259 = pneg %p107
        $region22: #{net_forward.1} parent=11 // pred_check_branch
          %261 = sbr.rel (%p259) target = $region24
        $region23: #{net_forward.1} parent=11 // pred_region
          _
        $region24: #{net_forward.1} parent=11 // pred_fallthru
          _
        // Predicated region
        $region25: #{net_forward.1} parent=11 // pred_check
          %p262 = pneg %p128
        $region26: #{net_forward.1} parent=11 // pred_check_branch
          %264 = sbr.rel (%p262) target = $region28
        $region27: #{net_forward.1} parent=11 // pred_region
          _
        $region28: #{net_forward.1} parent=11 // pred_fallthru
          _
        // Predicated region
        $region29: #{net_forward.1} parent=11 // pred_check
          %p265 = pneg %p149
        $region30: #{net_forward.1} parent=11 // pred_check_branch
          %267 = sbr.rel (%p265) target = $region32
        $region31: #{net_forward.1} parent=11 // pred_region
          _
        $region32: #{net_forward.1} parent=11 // pred_fallthru
          _
        // Predicated region
        $region33: #{net_forward.1} parent=11 // pred_check
          %p268 = pneg %p170
        $region34: #{net_forward.1} parent=11 // pred_check_branch
          %270 = sbr.rel (%p268) target = $region36
        $region35: #{net_forward.1} parent=11 // pred_region
          _
        $region36: #{net_forward.1} parent=11 // pred_fallthru
          _
        // Predicated region
        $region37: #{net_forward.1} parent=11 // pred_check
          %p271 = pneg %p191
        $region38: #{net_forward.1} parent=11 // pred_check_branch
          %273 = sbr.rel (%p271) target = $region40
        $region39: #{net_forward.1} parent=11 // pred_region
          _
        $region40: #{net_forward.1} parent=11 // pred_fallthru
          _
        // Predicated region
        $region41: #{net_forward.1} parent=11 // pred_check
          %p274 = pneg %p212
        $region42: #{net_forward.1} parent=11 // pred_check_branch
          %276 = sbr.rel (%p274) target = $region44
        $region43: #{net_forward.1} parent=11 // pred_region
          _
        $region44: #{net_forward.1} parent=11 // pred_fallthru
          _
      $region12: #{net_forward.1} parent=5 // pred_fallthru
        _
      %p277 = scmp.lt.s32.totalorder %s18, 2
      // Predicated region
      $region45: #{net_forward.1} parent=5 // pred_check
        %p278 = pneg %p277
      $region46: #{net_forward.1} parent=5 // pred_check_branch
        %280 = sbr.rel (%p278) target = $region48
      $region47: #{net_forward.1} parent=5 // pred_region
        // Predicated region
        $region49: #{net_forward.1} parent=47 // pred_check
          %p281 = pneg %p38
        $region50: #{net_forward.1} parent=47 // pred_check_branch
          %283 = sbr.rel (%p281) target = $region52
        $region51: #{net_forward.1} parent=47 // pred_region
          %p284 = scmp.lt.s32.totalorder %s18, 1
          %s285 = scalar_select %p284, %s18, 1
          %s286 = smul.addr %s285, 104
          %s287 = smul.addr %s286, 8
          %s288 = scalar_lea.vmem %s0, %s287
        $region52: #{net_forward.1} parent=47 // pred_fallthru
          _
      $region48: #{net_forward.1} parent=5 // pred_fallthru
        _
      %p289 = scmp.le.s32.totalorder 1, %s18
      %p290 = scmp.lt.s32.totalorder %s18, 3
      %p291 = pnand %p289, %p290
      %p292 = pneg %p291
      // Predicated region
      $region53: #{net_forward.1} parent=5 // pred_check
        _
      $region54: #{net_forward.1} parent=5 // pred_check_branch
        %294 = sbr.rel (%p291) target = $region56
      $region55: #{net_forward.1} parent=5 // pred_region
        %s295 = ssub.s32 %s18, 1
        %p296 = scmp.lt.s32.totalorder %s23, 1
        %s297 = scalar_select %p296, %s23, 1
        %s298 = smul.addr %s297, 104
        %s299 = smul.addr %s298, 8
        %s300 = scalar_lea.vmem %s0, %s299
        %p301 = pneg %p44
        %p302 = pneg %p41
        %p303 = pneg %p65
        %p304 = pneg %p62
        %p305 = pneg %p86
        %p306 = pneg %p83
        %p307 = pneg %p107
        %p308 = pneg %p104
        %p309 = pneg %p128
        %p310 = pneg %p125
        %p311 = pneg %p149
        %p312 = pneg %p146
        %p313 = pneg %p170
        %p314 = pneg %p167
        %p315 = pneg %p191
        %p316 = pneg %p188
        %p317 = pneg %p212
        %p318 = pneg %p209
        %p319 = pneg %p238
        %p320 = pneg %p235
        %s321 = sand.u32 %s225, 1
        %s322 = scalar_lea.sflag [#allocation3], %s321
        %s323 = sand.u32 %s225, 1
        %s324 = scalar_lea.vmem [#allocation2], %s323
        %p325 = scmp.lt.s32.totalorder %s23, 1
        %s326 = scalar_select %p325, %s23, 1
        %s327 = smul.addr %s326, 104
        %s328 = smul.addr %s327, 8
        %s329 = scalar_lea.vmem %s0, %s328
        %v330 = vld [vmem:[%s329] sm:$0xff]
        %v331 = vld [vmem:[%s329 + $0x8] sm:$0xff]
        %v332 = vld [vmem:[%s329 + $0x10] sm:$0xff]
        %v333 = vld [vmem:[%s329 + $0x18] sm:$0xff]
        %v334 = vld [vmem:[%s329 + $0x20] sm:$0xff]
        %v335 = vld [vmem:[%s329 + $0x28] sm:$0xff]
        %v336 = vld [vmem:[%s329 + $0x30] sm:$0xff]
        %v337 = vld [vmem:[%s329 + $0x38] sm:$0xff]
        %v338 = vld [vmem:[%s329 + $0x40] sm:$0xff]
        %v339 = vld [vmem:[%s329 + $0x48] sm:$0xff]
        %v340 = vld [vmem:[%s329 + $0x50] sm:$0xff]
        %v341 = vld [vmem:[%s329 + $0x58] sm:$0xff]
        %v342 = vld [vmem:[%s329 + $0x60] sm:$0xff]
        %v343 = vld [vmem:[%s329 + $0x68] sm:$0xff]
        %v344 = vld [vmem:[%s329 + $0x70] sm:$0xff]
        %v345 = vld [vmem:[%s329 + $0x78] sm:$0xff]
        %v346 = vld [vmem:[%s329 + $0x80] sm:$0xff]
        %v347 = vld [vmem:[%s329 + $0x88] sm:$0xff]
        %v348 = vld [vmem:[%s329 + $0x90] sm:$0xff]
        %v349 = vld [vmem:[%s329 + $0x98] sm:$0xff]
        %v350 = vld [vmem:[%s329 + $0xa0] sm:$0xff]
        %v351 = vld [vmem:[%s329 + $0xa8] sm:$0xff]
        %v352 = vld [vmem:[%s329 + $0xb0] sm:$0xff]
        %v353 = vld [vmem:[%s329 + $0xb8] sm:$0xff]
        %v354 = vld [vmem:[%s329 + $0xc0] sm:$0xff]
        %v355 = vld [vmem:[%s329 + $0xc8] sm:$0xff]
        %v356 = vld [vmem:[%s329 + $0xd0] sm:$0xff]
        %v357 = vld [vmem:[%s329 + $0xd8] sm:$0xff]
        %v358 = vld [vmem:[%s329 + $0xe0] sm:$0xff]
        %v359 = vld [vmem:[%s329 + $0xe8] sm:$0xff]
        %v360 = vld [vmem:[%s329 + $0xf0] sm:$0xff]
        %v361 = vld [vmem:[%s329 + $0xf8] sm:$0xff]
        %v362 = vld [vmem:[%s329 + $0x100] sm:$0xff]
        %v363 = vld [vmem:[%s329 + $0x108] sm:$0xff]
        %v364 = vld [vmem:[%s329 + $0x110] sm:$0xff]
        %v365 = vld [vmem:[%s329 + $0x118] sm:$0xff]
        %v366 = vld [vmem:[%s329 + $0x120] sm:$0xff]
        %v367 = vld [vmem:[%s329 + $0x128] sm:$0xff]
        %v368 = vld [vmem:[%s329 + $0x130] sm:$0xff]
        %v369 = vld [vmem:[%s329 + $0x138] sm:$0xff]
        %v370 = vld [vmem:[%s329 + $0x140] sm:$0xff]
        %v371 = vld [vmem:[%s329 + $0x148] sm:$0xff]
        %v372 = vld [vmem:[%s329 + $0x150] sm:$0xff]
        %v373 = vld [vmem:[%s329 + $0x158] sm:$0xff]
        %v374 = vld [vmem:[%s329 + $0x160] sm:$0xff]
        %v375 = vld [vmem:[%s329 + $0x168] sm:$0xff]
        %v376 = vld [vmem:[%s329 + $0x170] sm:$0xff]
        %v377 = vld [vmem:[%s329 + $0x178] sm:$0xff]
        %v378 = vld [vmem:[%s329 + $0x180] sm:$0xff]
        %v379 = vld [vmem:[%s329 + $0x188] sm:$0xff]
        %v380 = vld [vmem:[%s329 + $0x190] sm:$0xff]
        %v381 = vld [vmem:[%s329 + $0x198] sm:$0xff]
        %v382 = vld [vmem:[%s329 + $0x1a0] sm:$0xff]
        %v383 = vld [vmem:[%s329 + $0x1a8] sm:$0xff]
        %v384 = vld [vmem:[%s329 + $0x1b0] sm:$0xff]
        %v385 = vld [vmem:[%s329 + $0x1b8] sm:$0xff]
        %v386 = vld [vmem:[%s329 + $0x1c0] sm:$0xff]
        %v387 = vld [vmem:[%s329 + $0x1c8] sm:$0xff]
        %v388 = vld [vmem:[%s329 + $0x1d0] sm:$0xff]
        %v389 = vld [vmem:[%s329 + $0x1d8] sm:$0xff]
        %v390 = vld [vmem:[%s329 + $0x1e0] sm:$0xff]
        %v391 = vld [vmem:[%s329 + $0x1e8] sm:$0xff]
        %v392 = vld [vmem:[%s329 + $0x1f0] sm:$0xff]
        %v393 = vld [vmem:[%s329 + $0x1f8] sm:$0xff]
        %v394 = vld [vmem:[%s329 + $0x200] sm:$0xff]
        %v395 = vld [vmem:[%s329 + $0x208] sm:$0xff]
        %v396 = vld [vmem:[%s329 + $0x210] sm:$0xff]
        %v397 = vld [vmem:[%s329 + $0x218] sm:$0xff]
        %v398 = vld [vmem:[%s329 + $0x220] sm:$0xff]
        %v399 = vld [vmem:[%s329 + $0x228] sm:$0xff]
        %v400 = vld [vmem:[%s329 + $0x230] sm:$0xff]
        %v401 = vld [vmem:[%s329 + $0x238] sm:$0xff]
        %v402 = vld [vmem:[%s329 + $0x240] sm:$0xff]
        %v403 = vld [vmem:[%s329 + $0x248] sm:$0xff]
        %v404 = vld [vmem:[%s329 + $0x250] sm:$0xff]
        %v405 = vld [vmem:[%s329 + $0x258] sm:$0xff]
        %v406 = vld [vmem:[%s329 + $0x260] sm:$0xff]
        %v407 = vld [vmem:[%s329 + $0x268] sm:$0xff]
        %v408 = vld [vmem:[%s329 + $0x270] sm:$0xff]
        %v409 = vld [vmem:[%s329 + $0x278] sm:$0xff]
        %v410 = vld [vmem:[%s329 + $0x280] sm:$0xff]
        %v411 = vld [vmem:[%s329 + $0x288] sm:$0xff]
        %v412 = vld [vmem:[%s329 + $0x290] sm:$0xff]
        %v413 = vld [vmem:[%s329 + $0x298] sm:$0xff]
        %v414 = vld [vmem:[%s329 + $0x2a0] sm:$0xff]
        %v415 = vld [vmem:[%s329 + $0x2a8] sm:$0xff]
        %v416 = vld [vmem:[%s329 + $0x2b0] sm:$0xff]
        %v417 = vld [vmem:[%s329 + $0x2b8] sm:$0xff]
        %v418 = vld [vmem:[%s329 + $0x2c0] sm:$0xff]
        %v419 = vld [vmem:[%s329 + $0x2c8] sm:$0xff]
        %v420 = vld [vmem:[%s329 + $0x2d0] sm:$0xff]
        %v421 = vld [vmem:[%s329 + $0x2d8] sm:$0xff]
        %v422 = vld [vmem:[%s329 + $0x2e0] sm:$0xff]
        %v423 = vld [vmem:[%s329 + $0x2e8] sm:$0xff]
        %v424 = vld [vmem:[%s329 + $0x2f0] sm:$0xff]
        %v425 = vld [vmem:[%s329 + $0x2f8] sm:$0xff]
        %v426 = vld [vmem:[%s329 + $0x300] sm:$0xff]
        %v427 = vld [vmem:[%s329 + $0x308] sm:$0xff]
        %v428 = vld [vmem:[%s329 + $0x310] sm:$0xff]
        %v429 = vld [vmem:[%s329 + $0x318] sm:$0xff]
        %v430 = vld [vmem:[%s329 + $0x320] sm:$0xff]
        %v431 = vld [vmem:[%s329 + $0x328] sm:$0xff]
        %v432 = vld [vmem:[%s329 + $0x330] sm:$0xff]
        %v433 = vld [vmem:[%s329 + $0x338] sm:$0xff]
        %v434 = vld [vmem:[%s1] sm:$0xff]
        %v435 = vld [vmem:[%s1 + $0x8] sm:$0x1]
        %vm436 = vcmask 72704
        %v438 = vsel %vm436, %v330, 0
        %v441 = vsel %vm436, %v331, 0
        %v444 = vsel %vm436, %v332, 0
        %v447 = vsel %vm436, %v333, 0
        %v450 = vsel %vm436, %v334, 0
        %v453 = vsel %vm436, %v335, 0
        %v456 = vsel %vm436, %v336, 0
        %v459 = vsel %vm436, %v337, 0
        %v462 = vsel %vm436, %v338, 0
        %v465 = vsel %vm436, %v339, 0
        %v468 = vsel %vm436, %v340, 0
        %v471 = vsel %vm436, %v341, 0
        %v474 = vsel %vm436, %v342, 0
        %v477 = vsel %vm436, %v343, 0
        %v480 = vsel %vm436, %v344, 0
        %v483 = vsel %vm436, %v345, 0
        %v486 = vsel %vm436, %v346, 0
        %v489 = vsel %vm436, %v347, 0
        %v492 = vsel %vm436, %v348, 0
        %v495 = vsel %vm436, %v349, 0
        %v498 = vsel %vm436, %v350, 0
        %v501 = vsel %vm436, %v351, 0
        %v504 = vsel %vm436, %v352, 0
        %v507 = vsel %vm436, %v353, 0
        %v510 = vsel %vm436, %v354, 0
        %v513 = vsel %vm436, %v355, 0
        %v516 = vsel %vm436, %v356, 0
        %v519 = vsel %vm436, %v357, 0
        %v522 = vsel %vm436, %v358, 0
        %v525 = vsel %vm436, %v359, 0
        %v528 = vsel %vm436, %v360, 0
        %v531 = vsel %vm436, %v361, 0
        %v534 = vsel %vm436, %v362, 0
        %v537 = vsel %vm436, %v363, 0
        %v540 = vsel %vm436, %v364, 0
        %v543 = vsel %vm436, %v365, 0
        %v546 = vsel %vm436, %v366, 0
        %v549 = vsel %vm436, %v367, 0
        %v552 = vsel %vm436, %v368, 0
        %v555 = vsel %vm436, %v369, 0
        %v558 = vsel %vm436, %v370, 0
        %v561 = vsel %vm436, %v371, 0
        %v564 = vsel %vm436, %v372, 0
        %v567 = vsel %vm436, %v373, 0
        %v570 = vsel %vm436, %v374, 0
        %v573 = vsel %vm436, %v375, 0
        %v576 = vsel %vm436, %v376, 0
        %v579 = vsel %vm436, %v377, 0
        %v582 = vsel %vm436, %v378, 0
        %v585 = vsel %vm436, %v379, 0
        %v588 = vsel %vm436, %v380, 0
        %v591 = vsel %vm436, %v381, 0
        %v594 = vsel %vm436, %v382, 0
        %v597 = vsel %vm436, %v383, 0
        %v600 = vsel %vm436, %v384, 0
        %v603 = vsel %vm436, %v385, 0
        %v606 = vsel %vm436, %v386, 0
        %v609 = vsel %vm436, %v387, 0
        %v612 = vsel %vm436, %v388, 0
        %v615 = vsel %vm436, %v389, 0
        %v618 = vsel %vm436, %v390, 0
        %v621 = vsel %vm436, %v391, 0
        %v624 = vsel %vm436, %v392, 0
        %v627 = vsel %vm436, %v393, 0
        %v630 = vsel %vm436, %v394, 0
        %v633 = vsel %vm436, %v395, 0
        %v636 = vsel %vm436, %v396, 0
        %v639 = vsel %vm436, %v397, 0
        %v642 = vsel %vm436, %v398, 0
        %v645 = vsel %vm436, %v399, 0
        %v648 = vsel %vm436, %v400, 0
        %v651 = vsel %vm436, %v401, 0
        %v654 = vsel %vm436, %v402, 0
        %v657 = vsel %vm436, %v403, 0
        %v660 = vsel %vm436, %v404, 0
        %v663 = vsel %vm436, %v405, 0
        %v666 = vsel %vm436, %v406, 0
        %v669 = vsel %vm436, %v407, 0
        %v672 = vsel %vm436, %v408, 0
        %v675 = vsel %vm436, %v409, 0
        %v678 = vsel %vm436, %v410, 0
        %v681 = vsel %vm436, %v411, 0
        %v684 = vsel %vm436, %v412, 0
        %v687 = vsel %vm436, %v413, 0
        %v690 = vsel %vm436, %v414, 0
        %v693 = vsel %vm436, %v415, 0
        %v696 = vsel %vm436, %v416, 0
        %v699 = vsel %vm436, %v417, 0
        %v702 = vsel %vm436, %v418, 0
        %v705 = vsel %vm436, %v419, 0
        %v708 = vsel %vm436, %v420, 0
        %v711 = vsel %vm436, %v421, 0
        %v714 = vsel %vm436, %v422, 0
        %v717 = vsel %vm436, %v423, 0
        %v720 = vsel %vm436, %v424, 0
        %v723 = vsel %vm436, %v425, 0
        %v726 = vsel %vm436, %v426, 0
        %v729 = vsel %vm436, %v427, 0
        %v732 = vsel %vm436, %v428, 0
        %v735 = vsel %vm436, %v429, 0
        %v738 = vsel %vm436, %v430, 0
        %v741 = vsel %vm436, %v431, 0
        %v744 = vsel %vm436, %v432, 0
        %v747 = vsel %vm436, %v433, 0
        %vm749 = vcmask 1040384
        %v751 = vsel %vm749, %v435, 0
        %753 = vmatprep.subr.mxu0 0.0
        %754 = vmatpush1.msra.mxu0 0.0
        %755 = vmatprep.subr.mxu0 0.0
        %756 = vmatpush1.msra.mxu0 0.0
        %757 = vmatprep.subr.mxu0 0.0
        %758 = vmatpush1.msra.mxu0 0.0
        %759 = vmatprep.subr.mxu0 0.0
        %760 = vmatpush1.msra.mxu0 0.0
        %761 = vmatprep.subr.mxu0 0.0
        %762 = vmatpush1.msra.mxu0 0.0
        %763 = vmatprep.subr.mxu0 0.0
        %764 = vmatpush1.msra.mxu0 0.0
        %765 = vmatprep.subr.mxu0 0.0
        %766 = vmatpush1.msra.mxu0 0.0
        %767 = vmatprep.subr.mxu0 0.0
        %768 = vmatpush1.msra.mxu0 0.0
        %769 = vmatprep.subr.mxu0 0.0
        %770 = vmatpush1.msra.mxu0 0.0
        %771 = vmatprep.subr.mxu0 0.0
        %772 = vmatpush1.msra.mxu0 0.0
        %773 = vmatprep.subr.mxu0 0.0
        %774 = vmatpush1.msra.mxu0 0.0
        %775 = vmatprep.subr.mxu0 0.0
        %776 = vmatpush1.msra.mxu0 0.0
        %777 = vmatprep.subr.mxu0 0.0
        %778 = vmatpush1.msra.mxu0 0.0
        %779 = vmatprep.subr.mxu0 0.0
        %780 = vmatpush1.msra.mxu0 0.0
        %781 = vmatprep.subr.mxu0 0.0
        %782 = vmatpush1.msra.mxu0 %v751
        %783 = vmatprep.subr.mxu0 0.0
        %784 = vmatpush1.msra.mxu0 %v434
        %785 = vmatprep.subr.mxu0 0.0
        %786 = vmatpush2.msra.mxu0 0.0
        %787 = vmatprep.subr.mxu0 0.0
        %788 = vmatpush2.msra.mxu0 0.0
        %789 = vmatprep.subr.mxu0 0.0
        %790 = vmatpush2.msra.mxu0 0.0
        %791 = vmatprep.subr.mxu0 0.0
        %792 = vmatpush2.msra.mxu0 0.0
        %793 = vmatprep.subr.mxu0 0.0
        %794 = vmatpush2.msra.mxu0 0.0
        %795 = vmatprep.subr.mxu0 0.0
        %796 = vmatpush2.msra.mxu0 0.0
        %797 = vmatprep.subr.mxu0 0.0
        %798 = vmatpush2.msra.mxu0 0.0
        %799 = vmatprep.subr.mxu0 0.0
        %800 = vmatpush2.msra.mxu0 0.0
        %801 = vmatprep.subr.mxu0 0.0
        %802 = vmatpush2.msra.mxu0 0.0
        %803 = vmatprep.subr.mxu0 0.0
        %804 = vmatpush2.msra.mxu0 0.0
        %805 = vmatprep.subr.mxu0 0.0
        %806 = vmatpush2.msra.mxu0 0.0
        %807 = vmatprep.subr.mxu0 0.0
        %808 = vmatpush2.msra.mxu0 0.0
        %809 = vmatprep.subr.mxu0 0.0
        %810 = vmatpush2.msra.mxu0 0.0
        %811 = vmatprep.subr.mxu0 0.0
        %812 = vmatpush2.msra.mxu0 0.0
        %813 = vmatprep.subr.mxu0 0.0
        %814 = vmatpush2.msra.mxu0 0.0
        %815 = vmatprep.subr.mxu0 0.0
        %816 = vmatpush2.msra.mxu0 0.0
        %817 = vmatprep.mubr.f32.mxu0 0.0
        %818 = vmatmul.mubr.f32.gmra.mxu0 %v438
        %v819 = vpop.f32.mrf.mxu0
        %v820 = vadd.f32 0.0, %v819
        %v821 = vpop.f32.mrf.mxu0
        %822 = vmatprep.mubr.f32.mxu0 0.0
        %823 = vmatmul.mubr.f32.gmra.mxu0 %v441
        %v824 = vpop.f32.mrf.mxu0
        %v825 = vadd.f32 0.0, %v824
        %v826 = vpop.f32.mrf.mxu0
        %827 = vmatprep.mubr.f32.mxu0 0.0
        %828 = vmatmul.mubr.f32.gmra.mxu0 %v444
        %v829 = vpop.f32.mrf.mxu0
        %v830 = vadd.f32 0.0, %v829
        %v831 = vpop.f32.mrf.mxu0
        %832 = vmatprep.mubr.f32.mxu0 0.0
        %833 = vmatmul.mubr.f32.gmra.mxu0 %v447
        %v834 = vpop.f32.mrf.mxu0
        %v835 = vadd.f32 0.0, %v834
        %v836 = vpop.f32.mrf.mxu0
        %837 = vmatprep.mubr.f32.mxu0 0.0
        %838 = vmatmul.mubr.f32.gmra.mxu0 %v450
        %v839 = vpop.f32.mrf.mxu0
        %v840 = vadd.f32 0.0, %v839
        %v841 = vpop.f32.mrf.mxu0
        %842 = vmatprep.mubr.f32.mxu0 0.0
        %843 = vmatmul.mubr.f32.gmra.mxu0 %v453
        %v844 = vpop.f32.mrf.mxu0
        %v845 = vadd.f32 0.0, %v844
        %v846 = vpop.f32.mrf.mxu0
        %847 = vmatprep.mubr.f32.mxu0 0.0
        %848 = vmatmul.mubr.f32.gmra.mxu0 %v456
        %v849 = vpop.f32.mrf.mxu0
        %v850 = vadd.f32 0.0, %v849
        %v851 = vpop.f32.mrf.mxu0
        %852 = vmatprep.mubr.f32.mxu0 0.0
        %853 = vmatmul.mubr.f32.gmra.mxu0 %v459
        %v854 = vpop.f32.mrf.mxu0
        %v855 = vadd.f32 0.0, %v854
        %v856 = vpop.f32.mrf.mxu0
        %857 = vmatprep.mubr.f32.mxu0 0.0
        %858 = vmatmul.mubr.f32.gmra.mxu0 %v462
        %v859 = vpop.f32.mrf.mxu0
        %v860 = vadd.f32 0.0, %v859
        %v861 = vpop.f32.mrf.mxu0
        %862 = vmatprep.mubr.f32.mxu0 0.0
        %863 = vmatmul.mubr.f32.gmra.mxu0 %v465
        %v864 = vpop.f32.mrf.mxu0
        %v865 = vadd.f32 0.0, %v864
        %v866 = vpop.f32.mrf.mxu0
        %867 = vmatprep.mubr.f32.mxu0 0.0
        %868 = vmatmul.mubr.f32.gmra.mxu0 %v468
        %v869 = vpop.f32.mrf.mxu0
        %v870 = vadd.f32 0.0, %v869
        %v871 = vpop.f32.mrf.mxu0
        %872 = vmatprep.mubr.f32.mxu0 0.0
        %873 = vmatmul.mubr.f32.gmra.mxu0 %v471
        %v874 = vpop.f32.mrf.mxu0
        %v875 = vadd.f32 0.0, %v874
        %v876 = vpop.f32.mrf.mxu0
        %877 = vmatprep.mubr.f32.mxu0 0.0
        %878 = vmatmul.mubr.f32.gmra.mxu0 %v474
        %v879 = vpop.f32.mrf.mxu0
        %v880 = vadd.f32 0.0, %v879
        %v881 = vpop.f32.mrf.mxu0
        %882 = vmatprep.mubr.f32.mxu0 0.0
        %883 = vmatmul.mubr.f32.gmra.mxu0 %v477
        %v884 = vpop.f32.mrf.mxu0
        %v885 = vadd.f32 0.0, %v884
        %v886 = vpop.f32.mrf.mxu0
        %887 = vmatprep.mubr.f32.mxu0 0.0
        %888 = vmatmul.mubr.f32.gmra.mxu0 %v480
        %v889 = vpop.f32.mrf.mxu0
        %v890 = vadd.f32 0.0, %v889
        %v891 = vpop.f32.mrf.mxu0
        %892 = vmatprep.mubr.f32.mxu0 0.0
        %893 = vmatmul.mubr.f32.gmra.mxu0 %v483
        %v894 = vpop.f32.mrf.mxu0
        %v895 = vadd.f32 0.0, %v894
        %v896 = vpop.f32.mrf.mxu0
        %897 = vmatprep.mubr.f32.mxu0 0.0
        %898 = vmatmul.mubr.f32.gmra.mxu0 %v486
        %v899 = vpop.f32.mrf.mxu0
        %v900 = vadd.f32 0.0, %v899
        %v901 = vpop.f32.mrf.mxu0
        %902 = vmatprep.mubr.f32.mxu0 0.0
        %903 = vmatmul.mubr.f32.gmra.mxu0 %v489
        %v904 = vpop.f32.mrf.mxu0
        %v905 = vadd.f32 0.0, %v904
        %v906 = vpop.f32.mrf.mxu0
        %907 = vmatprep.mubr.f32.mxu0 0.0
        %908 = vmatmul.mubr.f32.gmra.mxu0 %v492
        %v909 = vpop.f32.mrf.mxu0
        %v910 = vadd.f32 0.0, %v909
        %v911 = vpop.f32.mrf.mxu0
        %912 = vmatprep.mubr.f32.mxu0 0.0
        %913 = vmatmul.mubr.f32.gmra.mxu0 %v495
        %v914 = vpop.f32.mrf.mxu0
        %v915 = vadd.f32 0.0, %v914
        %v916 = vpop.f32.mrf.mxu0
        %917 = vmatprep.mubr.f32.mxu0 0.0
        %918 = vmatmul.mubr.f32.gmra.mxu0 %v498
        %v919 = vpop.f32.mrf.mxu0
        %v920 = vadd.f32 0.0, %v919
        %v921 = vpop.f32.mrf.mxu0
        %922 = vmatprep.mubr.f32.mxu0 0.0
        %923 = vmatmul.mubr.f32.gmra.mxu0 %v501
        %v924 = vpop.f32.mrf.mxu0
        %v925 = vadd.f32 0.0, %v924
        %v926 = vpop.f32.mrf.mxu0
        %927 = vmatprep.mubr.f32.mxu0 0.0
        %928 = vmatmul.mubr.f32.gmra.mxu0 %v504
        %v929 = vpop.f32.mrf.mxu0
        %v930 = vadd.f32 0.0, %v929
        %v931 = vpop.f32.mrf.mxu0
        %932 = vmatprep.mubr.f32.mxu0 0.0
        %933 = vmatmul.mubr.f32.gmra.mxu0 %v507
        %v934 = vpop.f32.mrf.mxu0
        %v935 = vadd.f32 0.0, %v934
        %v936 = vpop.f32.mrf.mxu0
        %937 = vmatprep.mubr.f32.mxu0 0.0
        %938 = vmatmul.mubr.f32.gmra.mxu0 %v510
        %v939 = vpop.f32.mrf.mxu0
        %v940 = vpop.f32.mrf.mxu0
        %941 = vmatprep.mubr.f32.mxu0 0.0
        %942 = vmatmul.mubr.f32.gmra.mxu0 %v513
        %v943 = vpop.f32.mrf.mxu0
        %v944 = vpop.f32.mrf.mxu0
        %945 = vmatprep.mubr.f32.mxu0 0.0
        %946 = vmatmul.mubr.f32.gmra.mxu0 %v516
        %v947 = vpop.f32.mrf.mxu0
        %v948 = vadd.f32 0.0, %v947
        %v949 = vpop.f32.mrf.mxu0
        %950 = vmatprep.mubr.f32.mxu0 0.0
        %951 = vmatmul.mubr.f32.gmra.mxu0 %v519
        %v952 = vpop.f32.mrf.mxu0
        %v953 = vadd.f32 0.0, %v952
        %v954 = vpop.f32.mrf.mxu0
        %955 = vmatprep.mubr.f32.mxu0 0.0
        %956 = vmatmul.mubr.f32.gmra.mxu0 %v522
        %v957 = vpop.f32.mrf.mxu0
        %v958 = vadd.f32 0.0, %v957
        %v959 = vpop.f32.mrf.mxu0
        %960 = vmatprep.mubr.f32.mxu0 0.0
        %961 = vmatmul.mubr.f32.gmra.mxu0 %v525
        %v962 = vpop.f32.mrf.mxu0
        %v963 = vadd.f32 0.0, %v962
        %v964 = vpop.f32.mrf.mxu0
        %965 = vmatprep.mubr.f32.mxu0 0.0
        %966 = vmatmul.mubr.f32.gmra.mxu0 %v528
        %v967 = vpop.f32.mrf.mxu0
        %v968 = vadd.f32 0.0, %v967
        %v969 = vpop.f32.mrf.mxu0
        %970 = vmatprep.mubr.f32.mxu0 0.0
        %971 = vmatmul.mubr.f32.gmra.mxu0 %v531
        %v972 = vpop.f32.mrf.mxu0
        %v973 = vadd.f32 0.0, %v972
        %v974 = vpop.f32.mrf.mxu0
        %975 = vmatprep.mubr.f32.mxu0 0.0
        %976 = vmatmul.mubr.f32.gmra.mxu0 %v534
        %v977 = vpop.f32.mrf.mxu0
        %v978 = vadd.f32 0.0, %v977
        %v979 = vpop.f32.mrf.mxu0
        %980 = vmatprep.mubr.f32.mxu0 0.0
        %981 = vmatmul.mubr.f32.gmra.mxu0 %v537
        %v982 = vpop.f32.mrf.mxu0
        %v983 = vadd.f32 0.0, %v982
        %v984 = vpop.f32.mrf.mxu0
        %985 = vmatprep.mubr.f32.mxu0 0.0
        %986 = vmatmul.mubr.f32.gmra.mxu0 %v540
        %v987 = vpop.f32.mrf.mxu0
        %v988 = vadd.f32 0.0, %v987
        %v989 = vpop.f32.mrf.mxu0
        %990 = vmatprep.mubr.f32.mxu0 0.0
        %991 = vmatmul.mubr.f32.gmra.mxu0 %v543
        %v992 = vpop.f32.mrf.mxu0
        %v993 = vadd.f32 0.0, %v992
        %v994 = vpop.f32.mrf.mxu0
        %995 = vmatprep.mubr.f32.mxu0 0.0
        %996 = vmatmul.mubr.f32.gmra.mxu0 %v546
        %v997 = vpop.f32.mrf.mxu0
        %v998 = vadd.f32 0.0, %v997
        %v999 = vpop.f32.mrf.mxu0
        %1000 = vmatprep.mubr.f32.mxu0 0.0
        %1001 = vmatmul.mubr.f32.gmra.mxu0 %v549
        %v1002 = vpop.f32.mrf.mxu0
        %v1003 = vadd.f32 0.0, %v1002
        %v1004 = vpop.f32.mrf.mxu0
        %1005 = vmatprep.mubr.f32.mxu0 0.0
        %1006 = vmatmul.mubr.f32.gmra.mxu0 %v552
        %v1007 = vpop.f32.mrf.mxu0
        %v1008 = vadd.f32 0.0, %v1007
        %v1009 = vpop.f32.mrf.mxu0
        %1010 = vmatprep.mubr.f32.mxu0 0.0
        %1011 = vmatmul.mubr.f32.gmra.mxu0 %v555
        %v1012 = vpop.f32.mrf.mxu0
        %v1013 = vadd.f32 0.0, %v1012
        %v1014 = vpop.f32.mrf.mxu0
        %1015 = vmatprep.mubr.f32.mxu0 0.0
        %1016 = vmatmul.mubr.f32.gmra.mxu0 %v558
        %v1017 = vpop.f32.mrf.mxu0
        %v1018 = vadd.f32 0.0, %v1017
        %v1019 = vpop.f32.mrf.mxu0
        %1020 = vmatprep.mubr.f32.mxu0 0.0
        %1021 = vmatmul.mubr.f32.gmra.mxu0 %v561
        %v1022 = vpop.f32.mrf.mxu0
        %v1023 = vadd.f32 0.0, %v1022
        %v1024 = vpop.f32.mrf.mxu0
        %1025 = vmatprep.mubr.f32.mxu0 0.0
        %1026 = vmatmul.mubr.f32.gmra.mxu0 %v564
        %v1027 = vpop.f32.mrf.mxu0
        %v1028 = vadd.f32 0.0, %v1027
        %v1029 = vpop.f32.mrf.mxu0
        %1030 = vmatprep.mubr.f32.mxu0 0.0
        %1031 = vmatmul.mubr.f32.gmra.mxu0 %v567
        %v1032 = vpop.f32.mrf.mxu0
        %v1033 = vadd.f32 0.0, %v1032
        %v1034 = vpop.f32.mrf.mxu0
        %1035 = vmatprep.mubr.f32.mxu0 0.0
        %1036 = vmatmul.mubr.f32.gmra.mxu0 %v570
        %v1037 = vpop.f32.mrf.mxu0
        %v1038 = vadd.f32 0.0, %v1037
        %v1039 = vpop.f32.mrf.mxu0
        %1040 = vmatprep.mubr.f32.mxu0 0.0
        %1041 = vmatmul.mubr.f32.gmra.mxu0 %v573
        %v1042 = vpop.f32.mrf.mxu0
        %v1043 = vadd.f32 0.0, %v1042
        %v1044 = vpop.f32.mrf.mxu0
        %1045 = vmatprep.mubr.f32.mxu0 0.0
        %1046 = vmatmul.mubr.f32.gmra.mxu0 %v576
        %v1047 = vpop.f32.mrf.mxu0
        %v1048 = vadd.f32 0.0, %v1047
        %v1049 = vpop.f32.mrf.mxu0
        %1050 = vmatprep.mubr.f32.mxu0 0.0
        %1051 = vmatmul.mubr.f32.gmra.mxu0 %v579
        %v1052 = vpop.f32.mrf.mxu0
        %v1053 = vadd.f32 0.0, %v1052
        %v1054 = vpop.f32.mrf.mxu0
        %1055 = vmatprep.mubr.f32.mxu0 0.0
        %1056 = vmatmul.mubr.f32.gmra.mxu0 %v582
        %v1057 = vpop.f32.mrf.mxu0
        %v1058 = vadd.f32 0.0, %v1057
        %v1059 = vpop.f32.mrf.mxu0
        %1060 = vmatprep.mubr.f32.mxu0 0.0
        %1061 = vmatmul.mubr.f32.gmra.mxu0 %v585
        %v1062 = vpop.f32.mrf.mxu0
        %v1063 = vadd.f32 0.0, %v1062
        %v1064 = vpop.f32.mrf.mxu0
        %1065 = vmatprep.mubr.f32.mxu0 0.0
        %1066 = vmatmul.mubr.f32.gmra.mxu0 %v588
        %v1067 = vpop.f32.mrf.mxu0
        %v1068 = vpop.f32.mrf.mxu0
        %1069 = vmatprep.mubr.f32.mxu0 0.0
        %1070 = vmatmul.mubr.f32.gmra.mxu0 %v591
        %v1071 = vpop.f32.mrf.mxu0
        %v1072 = vpop.f32.mrf.mxu0
        %1073 = vmatprep.mubr.f32.mxu0 0.0
        %1074 = vmatmul.mubr.f32.gmra.mxu0 %v594
        %v1075 = vpop.f32.mrf.mxu0
        %v1076 = vadd.f32 0.0, %v1075
        %v1077 = vpop.f32.mrf.mxu0
        %1078 = vmatprep.mubr.f32.mxu0 0.0
        %1079 = vmatmul.mubr.f32.gmra.mxu0 %v597
        %v1080 = vpop.f32.mrf.mxu0
        %v1081 = vadd.f32 0.0, %v1080
        %v1082 = vpop.f32.mrf.mxu0
        %1083 = vmatprep.mubr.f32.mxu0 0.0
        %1084 = vmatmul.mubr.f32.gmra.mxu0 %v600
        %v1085 = vpop.f32.mrf.mxu0
        %v1086 = vadd.f32 0.0, %v1085
        %v1087 = vpop.f32.mrf.mxu0
        %1088 = vmatprep.mubr.f32.mxu0 0.0
        %1089 = vmatmul.mubr.f32.gmra.mxu0 %v603
        %v1090 = vpop.f32.mrf.mxu0
        %v1091 = vadd.f32 0.0, %v1090
        %v1092 = vpop.f32.mrf.mxu0
        %1093 = vmatprep.mubr.f32.mxu0 0.0
        %1094 = vmatmul.mubr.f32.gmra.mxu0 %v606
        %v1095 = vpop.f32.mrf.mxu0
        %v1096 = vadd.f32 0.0, %v1095
        %v1097 = vpop.f32.mrf.mxu0
        %1098 = vmatprep.mubr.f32.mxu0 0.0
        %1099 = vmatmul.mubr.f32.gmra.mxu0 %v609
        %v1100 = vpop.f32.mrf.mxu0
        %v1101 = vadd.f32 0.0, %v1100
        %v1102 = vpop.f32.mrf.mxu0
        %1103 = vmatprep.mubr.f32.mxu0 0.0
        %1104 = vmatmul.mubr.f32.gmra.mxu0 %v612
        %v1105 = vpop.f32.mrf.mxu0
        %v1106 = vadd.f32 0.0, %v1105
        %v1107 = vpop.f32.mrf.mxu0
        %1108 = vmatprep.mubr.f32.mxu0 0.0
        %1109 = vmatmul.mubr.f32.gmra.mxu0 %v615
        %v1110 = vpop.f32.mrf.mxu0
        %v1111 = vadd.f32 0.0, %v1110
        %v1112 = vpop.f32.mrf.mxu0
        %1113 = vmatprep.mubr.f32.mxu0 0.0
        %1114 = vmatmul.mubr.f32.gmra.mxu0 %v618
        %v1115 = vpop.f32.mrf.mxu0
        %v1116 = vadd.f32 0.0, %v1115
        %v1117 = vpop.f32.mrf.mxu0
        %1118 = vmatprep.mubr.f32.mxu0 0.0
        %1119 = vmatmul.mubr.f32.gmra.mxu0 %v621
        %v1120 = vpop.f32.mrf.mxu0
        %v1121 = vadd.f32 0.0, %v1120
        %v1122 = vpop.f32.mrf.mxu0
        %1123 = vmatprep.mubr.f32.mxu0 0.0
        %1124 = vmatmul.mubr.f32.gmra.mxu0 %v624
        %v1125 = vpop.f32.mrf.mxu0
        %v1126 = vadd.f32 0.0, %v1125
        %v1127 = vpop.f32.mrf.mxu0
        %1128 = vmatprep.mubr.f32.mxu0 0.0
        %1129 = vmatmul.mubr.f32.gmra.mxu0 %v627
        %v1130 = vpop.f32.mrf.mxu0
        %v1131 = vadd.f32 0.0, %v1130
        %v1132 = vpop.f32.mrf.mxu0
        %1133 = vmatprep.mubr.f32.mxu0 0.0
        %1134 = vmatmul.mubr.f32.gmra.mxu0 %v630
        %v1135 = vpop.f32.mrf.mxu0
        %v1136 = vadd.f32 0.0, %v1135
        %v1137 = vpop.f32.mrf.mxu0
        %1138 = vmatprep.mubr.f32.mxu0 0.0
        %1139 = vmatmul.mubr.f32.gmra.mxu0 %v633
        %v1140 = vpop.f32.mrf.mxu0
        %v1141 = vadd.f32 0.0, %v1140
        %v1142 = vpop.f32.mrf.mxu0
        %1143 = vmatprep.mubr.f32.mxu0 0.0
        %1144 = vmatmul.mubr.f32.gmra.mxu0 %v636
        %v1145 = vpop.f32.mrf.mxu0
        %v1146 = vadd.f32 0.0, %v1145
        %v1147 = vpop.f32.mrf.mxu0
        %1148 = vmatprep.mubr.f32.mxu0 0.0
        %1149 = vmatmul.mubr.f32.gmra.mxu0 %v639
        %v1150 = vpop.f32.mrf.mxu0
        %v1151 = vadd.f32 0.0, %v1150
        %v1152 = vpop.f32.mrf.mxu0
        %1153 = vmatprep.mubr.f32.mxu0 0.0
        %1154 = vmatmul.mubr.f32.gmra.mxu0 %v642
        %v1155 = vpop.f32.mrf.mxu0
        %v1156 = vadd.f32 0.0, %v1155
        %v1157 = vpop.f32.mrf.mxu0
        %1158 = vmatprep.mubr.f32.mxu0 0.0
        %1159 = vmatmul.mubr.f32.gmra.mxu0 %v645
        %v1160 = vpop.f32.mrf.mxu0
        %v1161 = vadd.f32 0.0, %v1160
        %v1162 = vpop.f32.mrf.mxu0
        %1163 = vmatprep.mubr.f32.mxu0 0.0
        %1164 = vmatmul.mubr.f32.gmra.mxu0 %v648
        %v1165 = vpop.f32.mrf.mxu0
        %v1166 = vadd.f32 0.0, %v1165
        %v1167 = vpop.f32.mrf.mxu0
        %1168 = vmatprep.mubr.f32.mxu0 0.0
        %1169 = vmatmul.mubr.f32.gmra.mxu0 %v651
        %v1170 = vpop.f32.mrf.mxu0
        %v1171 = vadd.f32 0.0, %v1170
        %v1172 = vpop.f32.mrf.mxu0
        %1173 = vmatprep.mubr.f32.mxu0 0.0
        %1174 = vmatmul.mubr.f32.gmra.mxu0 %v654
        %v1175 = vpop.f32.mrf.mxu0
        %v1176 = vadd.f32 0.0, %v1175
        %v1177 = vpop.f32.mrf.mxu0
        %1178 = vmatprep.mubr.f32.mxu0 0.0
        %1179 = vmatmul.mubr.f32.gmra.mxu0 %v657
        %v1180 = vpop.f32.mrf.mxu0
        %v1181 = vadd.f32 0.0, %v1180
        %v1182 = vpop.f32.mrf.mxu0
        %1183 = vmatprep.mubr.f32.mxu0 0.0
        %1184 = vmatmul.mubr.f32.gmra.mxu0 %v660
        %v1185 = vpop.f32.mrf.mxu0
        %v1186 = vadd.f32 0.0, %v1185
        %v1187 = vpop.f32.mrf.mxu0
        %1188 = vmatprep.mubr.f32.mxu0 0.0
        %1189 = vmatmul.mubr.f32.gmra.mxu0 %v663
        %v1190 = vpop.f32.mrf.mxu0
        %v1191 = vadd.f32 0.0, %v1190
        %v1192 = vpop.f32.mrf.mxu0
        %1193 = vmatprep.mubr.f32.mxu0 0.0
        %1194 = vmatmul.mubr.f32.gmra.mxu0 %v666
        %v1195 = vpop.f32.mrf.mxu0
        %v1196 = vpop.f32.mrf.mxu0
        %1197 = vmatprep.mubr.f32.mxu0 0.0
        %1198 = vmatmul.mubr.f32.gmra.mxu0 %v669
        %v1199 = vpop.f32.mrf.mxu0
        %v1200 = vpop.f32.mrf.mxu0
        %1201 = vmatprep.mubr.f32.mxu0 0.0
        %1202 = vmatmul.mubr.f32.gmra.mxu0 %v672
        %v1203 = vpop.f32.mrf.mxu0
        %v1204 = vadd.f32 0.0, %v1203
        %v1205 = vpop.f32.mrf.mxu0
        %1206 = vmatprep.mubr.f32.mxu0 0.0
        %1207 = vmatmul.mubr.f32.gmra.mxu0 %v675
        %v1208 = vpop.f32.mrf.mxu0
        %v1209 = vadd.f32 0.0, %v1208
        %v1210 = vpop.f32.mrf.mxu0
        %1211 = vmatprep.mubr.f32.mxu0 0.0
        %1212 = vmatmul.mubr.f32.gmra.mxu0 %v678
        %v1213 = vpop.f32.mrf.mxu0
        %v1214 = vadd.f32 0.0, %v1213
        %v1215 = vpop.f32.mrf.mxu0
        %1216 = vmatprep.mubr.f32.mxu0 0.0
        %1217 = vmatmul.mubr.f32.gmra.mxu0 %v681
        %v1218 = vpop.f32.mrf.mxu0
        %v1219 = vadd.f32 0.0, %v1218
        %v1220 = vpop.f32.mrf.mxu0
        %1221 = vmatprep.mubr.f32.mxu0 0.0
        %1222 = vmatmul.mubr.f32.gmra.mxu0 %v684
        %v1223 = vpop.f32.mrf.mxu0
        %v1224 = vadd.f32 0.0, %v1223
        %v1225 = vpop.f32.mrf.mxu0
        %1226 = vmatprep.mubr.f32.mxu0 0.0
        %1227 = vmatmul.mubr.f32.gmra.mxu0 %v687
        %v1228 = vpop.f32.mrf.mxu0
        %v1229 = vadd.f32 0.0, %v1228
        %v1230 = vpop.f32.mrf.mxu0
        %1231 = vmatprep.mubr.f32.mxu0 0.0
        %1232 = vmatmul.mubr.f32.gmra.mxu0 %v690
        %v1233 = vpop.f32.mrf.mxu0
        %v1234 = vadd.f32 0.0, %v1233
        %v1235 = vpop.f32.mrf.mxu0
        %1236 = vmatprep.mubr.f32.mxu0 0.0
        %1237 = vmatmul.mubr.f32.gmra.mxu0 %v693
        %v1238 = vpop.f32.mrf.mxu0
        %v1239 = vadd.f32 0.0, %v1238
        %v1240 = vpop.f32.mrf.mxu0
        %1241 = vmatprep.mubr.f32.mxu0 0.0
        %1242 = vmatmul.mubr.f32.gmra.mxu0 %v696
        %v1243 = vpop.f32.mrf.mxu0
        %v1244 = vadd.f32 0.0, %v1243
        %v1245 = vpop.f32.mrf.mxu0
        %1246 = vmatprep.mubr.f32.mxu0 0.0
        %1247 = vmatmul.mubr.f32.gmra.mxu0 %v699
        %v1248 = vpop.f32.mrf.mxu0
        %v1249 = vadd.f32 0.0, %v1248
        %v1250 = vpop.f32.mrf.mxu0
        %1251 = vmatprep.mubr.f32.mxu0 0.0
        %1252 = vmatmul.mubr.f32.gmra.mxu0 %v702
        %v1253 = vpop.f32.mrf.mxu0
        %v1254 = vadd.f32 0.0, %v1253
        %v1255 = vpop.f32.mrf.mxu0
        %1256 = vmatprep.mubr.f32.mxu0 0.0
        %1257 = vmatmul.mubr.f32.gmra.mxu0 %v705
        %v1258 = vpop.f32.mrf.mxu0
        %v1259 = vadd.f32 0.0, %v1258
        %v1260 = vpop.f32.mrf.mxu0
        %1261 = vmatprep.mubr.f32.mxu0 0.0
        %1262 = vmatmul.mubr.f32.gmra.mxu0 %v708
        %v1263 = vpop.f32.mrf.mxu0
        %v1264 = vadd.f32 0.0, %v1263
        %v1265 = vpop.f32.mrf.mxu0
        %1266 = vmatprep.mubr.f32.mxu0 0.0
        %1267 = vmatmul.mubr.f32.gmra.mxu0 %v711
        %v1268 = vpop.f32.mrf.mxu0
        %v1269 = vadd.f32 0.0, %v1268
        %v1270 = vpop.f32.mrf.mxu0
        %1271 = vmatprep.mubr.f32.mxu0 0.0
        %1272 = vmatmul.mubr.f32.gmra.mxu0 %v714
        %v1273 = vpop.f32.mrf.mxu0
        %v1274 = vadd.f32 0.0, %v1273
        %v1275 = vpop.f32.mrf.mxu0
        %1276 = vmatprep.mubr.f32.mxu0 0.0
        %1277 = vmatmul.mubr.f32.gmra.mxu0 %v717
        %v1278 = vpop.f32.mrf.mxu0
        %v1279 = vadd.f32 0.0, %v1278
        %v1280 = vpop.f32.mrf.mxu0
        %1281 = vmatprep.mubr.f32.mxu0 0.0
        %1282 = vmatmul.mubr.f32.gmra.mxu0 %v720
        %v1283 = vpop.f32.mrf.mxu0
        %v1284 = vadd.f32 0.0, %v1283
        %v1285 = vpop.f32.mrf.mxu0
        %1286 = vmatprep.mubr.f32.mxu0 0.0
        %1287 = vmatmul.mubr.f32.gmra.mxu0 %v723
        %v1288 = vpop.f32.mrf.mxu0
        %v1289 = vadd.f32 0.0, %v1288
        %v1290 = vpop.f32.mrf.mxu0
        %1291 = vmatprep.mubr.f32.mxu0 0.0
        %1292 = vmatmul.mubr.f32.gmra.mxu0 %v726
        %v1293 = vpop.f32.mrf.mxu0
        %v1294 = vadd.f32 0.0, %v1293
        %v1295 = vpop.f32.mrf.mxu0
        %1296 = vmatprep.mubr.f32.mxu0 0.0
        %1297 = vmatmul.mubr.f32.gmra.mxu0 %v729
        %v1298 = vpop.f32.mrf.mxu0
        %v1299 = vadd.f32 0.0, %v1298
        %v1300 = vpop.f32.mrf.mxu0
        %1301 = vmatprep.mubr.f32.mxu0 0.0
        %1302 = vmatmul.mubr.f32.gmra.mxu0 %v732
        %v1303 = vpop.f32.mrf.mxu0
        %v1304 = vadd.f32 0.0, %v1303
        %v1305 = vpop.f32.mrf.mxu0
        %1306 = vmatprep.mubr.f32.mxu0 0.0
        %1307 = vmatmul.mubr.f32.gmra.mxu0 %v735
        %v1308 = vpop.f32.mrf.mxu0
        %v1309 = vadd.f32 0.0, %v1308
        %v1310 = vpop.f32.mrf.mxu0
        %1311 = vmatprep.mubr.f32.mxu0 0.0
        %1312 = vmatmul.mubr.f32.gmra.mxu0 %v738
        %v1313 = vpop.f32.mrf.mxu0
        %v1314 = vadd.f32 0.0, %v1313
        %v1315 = vpop.f32.mrf.mxu0
        %1316 = vmatprep.mubr.f32.mxu0 0.0
        %1317 = vmatmul.mubr.f32.gmra.mxu0 %v741
        %v1318 = vpop.f32.mrf.mxu0
        %v1319 = vadd.f32 0.0, %v1318
        %v1320 = vpop.f32.mrf.mxu0
        %1321 = vmatprep.mubr.f32.mxu0 0.0
        %1322 = vmatmul.mubr.f32.gmra.mxu0 %v744
        %v1323 = vpop.f32.mrf.mxu0
        %v1324 = vpop.f32.mrf.mxu0
        %1325 = vmatprep.mubr.f32.mxu0 0.0
        %1326 = vmatmul.mubr.f32.gmra.mxu0 %v747
        %v1327 = vpop.f32.mrf.mxu0
        %v1328 = vpop.f32.mrf.mxu0
        %1329 = vdwg.mxu0
        %v1330 = vmax.f32 %v820, %v948
        %v1331 = vmax.f32 %v825, %v953
        %v1332 = vmax.f32 %v830, %v958
        %v1333 = vmax.f32 %v835, %v963
        %v1334 = vmax.f32 %v840, %v968
        %v1335 = vmax.f32 %v845, %v973
        %v1336 = vmax.f32 %v850, %v978
        %v1337 = vmax.f32 %v855, %v983
        %v1338 = vmax.f32 %v860, %v988
        %v1339 = vmax.f32 %v865, %v993
        %v1340 = vmax.f32 %v870, %v998
        %v1341 = vmax.f32 %v875, %v1003
        %v1342 = vmax.f32 %v880, %v1008
        %v1343 = vmax.f32 %v885, %v1013
        %v1344 = vmax.f32 %v890, %v1018
        %v1345 = vmax.f32 %v895, %v1023
        %v1346 = vmax.f32 %v900, %v1028
        %v1347 = vmax.f32 %v905, %v1033
        %v1348 = vmax.f32 %v910, %v1038
        %v1349 = vmax.f32 %v915, %v1043
        %v1350 = vmax.f32 %v920, %v1048
        %v1351 = vmax.f32 %v925, %v1053
        %v1352 = vmax.f32 %v930, %v1058
        %v1353 = vmax.f32 %v935, %v1063
        %v1354 = vmax.f32 %v1076, %v1204
        %v1355 = vmax.f32 %v1081, %v1209
        %v1356 = vmax.f32 %v1086, %v1214
        %v1357 = vmax.f32 %v1091, %v1219
        %v1358 = vmax.f32 %v1096, %v1224
        %v1359 = vmax.f32 %v1101, %v1229
        %v1360 = vmax.f32 %v1106, %v1234
        %v1361 = vmax.f32 %v1111, %v1239
        %v1362 = vmax.f32 %v1116, %v1244
        %v1363 = vmax.f32 %v1121, %v1249
        %v1364 = vmax.f32 %v1126, %v1254
        %v1365 = vmax.f32 %v1131, %v1259
        %v1366 = vmax.f32 %v1136, %v1264
        %v1367 = vmax.f32 %v1141, %v1269
        %v1368 = vmax.f32 %v1146, %v1274
        %v1369 = vmax.f32 %v1151, %v1279
        %v1370 = vmax.f32 %v1156, %v1284
        %v1371 = vmax.f32 %v1161, %v1289
        %v1372 = vmax.f32 %v1166, %v1294
        %v1373 = vmax.f32 %v1171, %v1299
        %v1374 = vmax.f32 %v1176, %v1304
        %v1375 = vmax.f32 %v1181, %v1309
        %v1376 = vmax.f32 %v1186, %v1314
        %v1377 = vmax.f32 %v1191, %v1319
        %v1378 = vmax.f32 %v1330, %v1354
        %v1379 = vmax.f32 %v1331, %v1355
        %v1380 = vmax.f32 %v1332, %v1356
        %v1381 = vmax.f32 %v1333, %v1357
        %v1382 = vmax.f32 %v1334, %v1358
        %v1383 = vmax.f32 %v1335, %v1359
        %v1384 = vmax.f32 %v1336, %v1360
        %v1385 = vmax.f32 %v1337, %v1361
        %v1386 = vmax.f32 %v1338, %v1362
        %v1387 = vmax.f32 %v1339, %v1363
        %v1388 = vmax.f32 %v1340, %v1364
        %v1389 = vmax.f32 %v1341, %v1365
        %v1390 = vmax.f32 %v1342, %v1366
        %v1391 = vmax.f32 %v1343, %v1367
        %v1392 = vmax.f32 %v1344, %v1368
        %v1393 = vmax.f32 %v1345, %v1369
        %v1394 = vmax.f32 %v1346, %v1370
        %v1395 = vmax.f32 %v1347, %v1371
        %v1396 = vmax.f32 %v1348, %v1372
        %v1397 = vmax.f32 %v1349, %v1373
        %v1398 = vmax.f32 %v1350, %v1374
        %v1399 = vmax.f32 %v1351, %v1375
        %v1400 = vmax.f32 %v1352, %v1376
        %v1401 = vmax.f32 %v1353, %v1377
        %v1402 = vld [vmem:[%s2] sm:$0x1]
        %v1404 = vlaneseq
        %v1405 = vshrl.u32 %v1404, 7
        %v1406 = vsub.s32 0, %v1405
        %v1407 = vrot.slane %v1402, %v1406
        %v1409 = vadd.f32 %v1378, %v1407
        %v1410 = vadd.f32 %v1379, %v1407
        %v1411 = vadd.f32 %v1380, %v1407
        %v1412 = vadd.f32 %v1381, %v1407
        %v1413 = vadd.f32 %v1382, %v1407
        %v1414 = vadd.f32 %v1383, %v1407
        %v1415 = vadd.f32 %v1384, %v1407
        %v1416 = vadd.f32 %v1385, %v1407
        %v1417 = vadd.f32 %v1386, %v1407
        %v1418 = vadd.f32 %v1387, %v1407
        %v1419 = vadd.f32 %v1388, %v1407
        %v1420 = vadd.f32 %v1389, %v1407
        %v1421 = vadd.f32 %v1390, %v1407
        %v1422 = vadd.f32 %v1391, %v1407
        %v1423 = vadd.f32 %v1392, %v1407
        %v1424 = vadd.f32 %v1393, %v1407
        %v1425 = vadd.f32 %v1394, %v1407
        %v1426 = vadd.f32 %v1395, %v1407
        %v1427 = vadd.f32 %v1396, %v1407
        %v1428 = vadd.f32 %v1397, %v1407
        %v1429 = vadd.f32 %v1398, %v1407
        %v1430 = vadd.f32 %v1399, %v1407
        %v1431 = vadd.f32 %v1400, %v1407
        %v1432 = vadd.f32 %v1401, %v1407
        %v1433 = vld [vmem:[%s3] sm:$0xff]
        %v1434 = vld [vmem:[%s3 + $0x8] sm:$0xff]
        %v1435 = vld [vmem:[%s3 + $0x10] sm:$0xff]
        %v1436 = vld [vmem:[%s3 + $0x18] sm:$0xff]
        %v1437 = vld [vmem:[%s3 + $0x20] sm:$0xff]
        %v1438 = vld [vmem:[%s3 + $0x28] sm:$0xff]
        %v1439 = vld [vmem:[%s3 + $0x30] sm:$0xff]
        %v1440 = vld [vmem:[%s3 + $0x38] sm:$0xff]
        %v1441 = vld [vmem:[%s3 + $0x40] sm:$0xff]
        %v1442 = vld [vmem:[%s3 + $0x48] sm:$0xff]
        %v1443 = vld [vmem:[%s3 + $0x50] sm:$0xff]
        %v1444 = vld [vmem:[%s3 + $0x58] sm:$0xff]
        %v1445 = vld [vmem:[%s3 + $0x60] sm:$0xff]
        %v1446 = vld [vmem:[%s3 + $0x68] sm:$0xff]
        %v1447 = vld [vmem:[%s3 + $0x70] sm:$0xff]
        %v1448 = vld [vmem:[%s3 + $0x78] sm:$0xff]
        %v1449 = vld [vmem:[%s3 + $0x80] sm:$0xff]
        %v1450 = vld [vmem:[%s3 + $0x88] sm:$0xff]
        %v1451 = vld [vmem:[%s3 + $0x90] sm:$0xff]
        %v1452 = vld [vmem:[%s3 + $0x98] sm:$0xff]
        %v1453 = vld [vmem:[%s3 + $0xa0] sm:$0xff]
        %v1454 = vld [vmem:[%s3 + $0xa8] sm:$0xff]
        %v1455 = vld [vmem:[%s3 + $0xb0] sm:$0xff]
        %v1456 = vld [vmem:[%s3 + $0xb8] sm:$0xff]
        %v1457 = vld [vmem:[%s3 + $0xc0] sm:$0xff]
        %v1458 = vld [vmem:[%s3 + $0xc8] sm:$0xff]
        %v1459 = vld [vmem:[%s3 + $0xd0] sm:$0xff]
        %v1460 = vld [vmem:[%s3 + $0xd8] sm:$0xff]
        %v1461 = vld [vmem:[%s3 + $0xe0] sm:$0xff]
        %v1462 = vld [vmem:[%s3 + $0xe8] sm:$0xff]
        %v1463 = vld [vmem:[%s3 + $0xf0] sm:$0xff]
        %v1464 = vld [vmem:[%s3 + $0xf8] sm:$0xff]
        %v1465 = vld [vmem:[%s3 + $0x100] sm:$0xff]
        %v1466 = vld [vmem:[%s3 + $0x108] sm:$0xff]
        %v1467 = vld [vmem:[%s3 + $0x110] sm:$0xff]
        %v1468 = vld [vmem:[%s3 + $0x118] sm:$0xff]
        %v1469 = vld [vmem:[%s3 + $0x120] sm:$0xff]
        %v1470 = vld [vmem:[%s3 + $0x128] sm:$0xff]
        %v1471 = vld [vmem:[%s3 + $0x130] sm:$0xff]
        %v1472 = vld [vmem:[%s3 + $0x138] sm:$0xff]
        %v1473 = vld [vmem:[%s3 + $0x140] sm:$0xff]
        %v1474 = vld [vmem:[%s3 + $0x148] sm:$0xff]
        %v1475 = vld [vmem:[%s3 + $0x150] sm:$0xff]
        %v1476 = vld [vmem:[%s3 + $0x158] sm:$0xff]
        %v1477 = vld [vmem:[%s3 + $0x160] sm:$0xff]
        %v1478 = vld [vmem:[%s3 + $0x168] sm:$0xff]
        %v1479 = vld [vmem:[%s3 + $0x170] sm:$0xff]
        %v1480 = vld [vmem:[%s3 + $0x178] sm:$0xff]
        %v1481 = vld [vmem:[%s3 + $0x180] sm:$0xff]
        %v1482 = vld [vmem:[%s3 + $0x188] sm:$0xff]
        %v1483 = vld [vmem:[%s3 + $0x190] sm:$0xff]
        %v1484 = vld [vmem:[%s3 + $0x198] sm:$0xff]
        %v1485 = vld [vmem:[%s3 + $0x1a0] sm:$0xff]
        %v1486 = vld [vmem:[%s3 + $0x1a8] sm:$0xff]
        %v1487 = vld [vmem:[%s3 + $0x1b0] sm:$0xff]
        %v1488 = vld [vmem:[%s3 + $0x1b8] sm:$0xff]
        %v1489 = vld [vmem:[%s3 + $0x1c0] sm:$0xff]
        %v1490 = vld [vmem:[%s3 + $0x1c8] sm:$0xff]
        %v1491 = vld [vmem:[%s3 + $0x1d0] sm:$0xff]
        %v1492 = vld [vmem:[%s3 + $0x1d8] sm:$0xff]
        %v1493 = vld [vmem:[%s3 + $0x1e0] sm:$0xff]
        %v1494 = vld [vmem:[%s3 + $0x1e8] sm:$0xff]
        %v1495 = vld [vmem:[%s3 + $0x1f0] sm:$0xff]
        %v1496 = vld [vmem:[%s3 + $0x1f8] sm:$0xff]
        %v1497 = vld [vmem:[%s3 + $0x200] sm:$0xff]
        %v1498 = vld [vmem:[%s3 + $0x208] sm:$0xff]
        %v1499 = vld [vmem:[%s3 + $0x210] sm:$0xff]
        %v1500 = vld [vmem:[%s3 + $0x218] sm:$0xff]
        %v1501 = vld [vmem:[%s3 + $0x220] sm:$0xff]
        %v1502 = vld [vmem:[%s3 + $0x228] sm:$0xff]
        %v1503 = vld [vmem:[%s3 + $0x230] sm:$0xff]
        %v1504 = vld [vmem:[%s3 + $0x238] sm:$0xff]
        %v1505 = vld [vmem:[%s3 + $0x240] sm:$0xff]
        %v1506 = vld [vmem:[%s3 + $0x248] sm:$0xff]
        %v1507 = vld [vmem:[%s3 + $0x250] sm:$0xff]
        %v1508 = vld [vmem:[%s3 + $0x258] sm:$0xff]
        %v1509 = vld [vmem:[%s3 + $0x260] sm:$0xff]
        %v1510 = vld [vmem:[%s3 + $0x268] sm:$0xff]
        %v1511 = vld [vmem:[%s3 + $0x270] sm:$0xff]
        %v1512 = vld [vmem:[%s3 + $0x278] sm:$0xff]
        %v1513 = vld [vmem:[%s3 + $0x280] sm:$0xff]
        %v1514 = vld [vmem:[%s3 + $0x288] sm:$0xff]
        %v1515 = vld [vmem:[%s3 + $0x290] sm:$0xff]
        %v1516 = vld [vmem:[%s3 + $0x298] sm:$0xff]
        %v1517 = vld [vmem:[%s3 + $0x2a0] sm:$0xff]
        %v1518 = vld [vmem:[%s3 + $0x2a8] sm:$0xff]
        %v1519 = vld [vmem:[%s3 + $0x2b0] sm:$0xff]
        %v1520 = vld [vmem:[%s3 + $0x2b8] sm:$0xff]
        %v1521 = vld [vmem:[%s3 + $0x2c0] sm:$0xff]
        %v1522 = vld [vmem:[%s3 + $0x2c8] sm:$0xff]
        %v1523 = vld [vmem:[%s3 + $0x2d0] sm:$0xff]
        %v1524 = vld [vmem:[%s3 + $0x2d8] sm:$0xff]
        %v1525 = vld [vmem:[%s3 + $0x2e0] sm:$0xff]
        %v1526 = vld [vmem:[%s3 + $0x2e8] sm:$0xff]
        %v1527 = vld [vmem:[%s3 + $0x2f0] sm:$0xff]
        %v1528 = vld [vmem:[%s3 + $0x2f8] sm:$0xff]
        %v1529 = vld [vmem:[%s3 + $0x300] sm:$0xff]
        %v1530 = vld [vmem:[%s3 + $0x308] sm:$0xff]
        %v1531 = vld [vmem:[%s3 + $0x310] sm:$0xff]
        %v1532 = vld [vmem:[%s3 + $0x318] sm:$0xff]
        %vm1549 = vcmask 1046528
        %v1550 = vrot.slane %v1409, 1
        %v1551 = vrot.slane %v1410, 1
        %v1552 = vsel %vm1549, %v1550, %v1551
        %v1553 = vrot.slane %v1411, 1
        %v1554 = vrot.slane %v1412, 1
        %v1555 = vsel %vm1549, %v1553, %v1554
        %v1556 = vrot.slane %v1413, 1
        %v1557 = vrot.slane %v1414, 1
        %v1558 = vsel %vm1549, %v1556, %v1557
        %v1559 = vrot.slane %v1415, 1
        %v1560 = vrot.slane %v1416, 1
        %v1561 = vsel %vm1549, %v1559, %v1560
        %v1562 = vrot.slane %v1417, 1
        %v1563 = vrot.slane %v1418, 1
        %v1564 = vsel %vm1549, %v1562, %v1563
        %v1565 = vrot.slane %v1419, 1
        %v1566 = vrot.slane %v1420, 1
        %v1567 = vsel %vm1549, %v1565, %v1566
        %v1568 = vrot.slane %v1421, 1
        %v1569 = vrot.slane %v1422, 1
        %v1570 = vsel %vm1549, %v1568, %v1569
        %v1571 = vrot.slane %v1423, 1
        %v1572 = vrot.slane %v1424, 1
        %v1573 = vsel %vm1549, %v1571, %v1572
        %vm1574 = vcmask 261120
        %v1575 = vsel %vm1574, %v1552, 0
        %v1577 = vsel %vm1574, %v1555, 0
        %v1579 = vsel %vm1574, %v1558, 0
        %v1581 = vsel %vm1574, %v1561, 0
        %v1583 = vsel %vm1574, %v1564, 0
        %v1585 = vsel %vm1574, %v1567, 0
        %v1587 = vsel %vm1574, %v1570, 0
        %v1589 = vsel %vm1574, %v1573, 0
        %1591 = vmatprep.subr.mxu0 0.0
        %1592 = vmatpush1.msra.mxu0 0.0
        %1593 = vmatprep.subr.mxu0 0.0
        %1594 = vmatpush1.msra.mxu0 0.0
        %1595 = vmatprep.subr.mxu0 0.0
        %1596 = vmatpush1.msra.mxu0 0.0
        %1597 = vmatprep.subr.mxu0 0.0
        %1598 = vmatpush1.msra.mxu0 0.0
        %1599 = vmatprep.subr.mxu0 0.0
        %1600 = vmatpush1.msra.mxu0 0.0
        %1601 = vmatprep.subr.mxu0 0.0
        %1602 = vmatpush1.msra.mxu0 0.0
        %1603 = vmatprep.subr.mxu0 0.0
        %1604 = vmatpush1.msra.mxu0 0.0
        %1605 = vmatprep.subr.mxu0 0.0
        %1606 = vmatpush1.msra.mxu0 0.0
        %1607 = vmatprep.subr.mxu0 0.0
        %1608 = vmatpush1.msra.mxu0 0.0
        %1609 = vmatprep.subr.mxu0 0.0
        %1610 = vmatpush1.msra.mxu0 0.0
        %1611 = vmatprep.subr.mxu0 0.0
        %1612 = vmatpush1.msra.mxu0 0.0
        %1613 = vmatprep.subr.mxu0 0.0
        %1614 = vmatpush1.msra.mxu0 0.0
        %1615 = vmatprep.subr.mxu0 0.0
        %1616 = vmatpush1.msra.mxu0 %v1440
        %1617 = vmatprep.subr.mxu0 0.0
        %1618 = vmatpush1.msra.mxu0 %v1439
        %1619 = vmatprep.subr.mxu0 0.0
        %1620 = vmatpush1.msra.mxu0 %v1438
        %1621 = vmatprep.subr.mxu0 0.0
        %1622 = vmatpush1.msra.mxu0 %v1437
        %1623 = vmatprep.subr.mxu0 0.0
        %1624 = vmatpush2.msra.mxu0 0.0
        %1625 = vmatprep.subr.mxu0 0.0
        %1626 = vmatpush2.msra.mxu0 0.0
        %1627 = vmatprep.subr.mxu0 0.0
        %1628 = vmatpush2.msra.mxu0 0.0
        %1629 = vmatprep.subr.mxu0 0.0
        %1630 = vmatpush2.msra.mxu0 0.0
        %1631 = vmatprep.subr.mxu0 0.0
        %1632 = vmatpush2.msra.mxu0 0.0
        %1633 = vmatprep.subr.mxu0 0.0
        %1634 = vmatpush2.msra.mxu0 0.0
        %1635 = vmatprep.subr.mxu0 0.0
        %1636 = vmatpush2.msra.mxu0 0.0
        %1637 = vmatprep.subr.mxu0 0.0
        %1638 = vmatpush2.msra.mxu0 0.0
        %1639 = vmatprep.subr.mxu0 0.0
        %1640 = vmatpush2.msra.mxu0 0.0
        %1641 = vmatprep.subr.mxu0 0.0
        %1642 = vmatpush2.msra.mxu0 0.0
        %1643 = vmatprep.subr.mxu0 0.0
        %1644 = vmatpush2.msra.mxu0 0.0
        %1645 = vmatprep.subr.mxu0 0.0
        %1646 = vmatpush2.msra.mxu0 0.0
        %1647 = vmatprep.subr.mxu0 0.0
        %1648 = vmatpush2.msra.mxu0 0.0
        %1649 = vmatprep.subr.mxu0 0.0
        %1650 = vmatpush2.msra.mxu0 0.0
        %1651 = vmatprep.subr.mxu0 0.0
        %1652 = vmatpush2.msra.mxu0 0.0
        %1653 = vmatprep.subr.mxu0 0.0
        %1654 = vmatpush2.msra.mxu0 0.0
        %1655 = vmatprep.mubr.f32.mxu0 0.0
        %1656 = vmatmul.mubr.f32.gmra.mxu0 %v1575
        %v1657 = vpop.f32.mrf.mxu0
        %v1658 = vadd.f32 0.0, %v1657
        %v1659 = vpop.f32.mrf.mxu0
        %1660 = vmatprep.mubr.f32.mxu0 0.0
        %1661 = vmatmul.mubr.f32.gmra.mxu0 %v1577
        %v1662 = vpop.f32.mrf.mxu0
        %v1663 = vadd.f32 0.0, %v1662
        %v1664 = vpop.f32.mrf.mxu0
        %1665 = vmatprep.mubr.f32.mxu0 0.0
        %1666 = vmatmul.mubr.f32.gmra.mxu0 %v1579
        %v1667 = vpop.f32.mrf.mxu0
        %v1668 = vadd.f32 0.0, %v1667
        %v1669 = vpop.f32.mrf.mxu0
        %1670 = vmatprep.mubr.f32.mxu0 0.0
        %1671 = vmatmul.mubr.f32.gmra.mxu0 %v1581
        %v1672 = vpop.f32.mrf.mxu0
        %v1673 = vadd.f32 0.0, %v1672
        %v1674 = vpop.f32.mrf.mxu0
        %1675 = vmatprep.mubr.f32.mxu0 0.0
        %1676 = vmatmul.mubr.f32.gmra.mxu0 %v1583
        %v1677 = vpop.f32.mrf.mxu0
        %v1678 = vadd.f32 0.0, %v1677
        %v1679 = vpop.f32.mrf.mxu0
        %1680 = vmatprep.mubr.f32.mxu0 0.0
        %1681 = vmatmul.mubr.f32.gmra.mxu0 %v1585
        %v1682 = vpop.f32.mrf.mxu0
        %v1683 = vadd.f32 0.0, %v1682
        %v1684 = vpop.f32.mrf.mxu0
        %1685 = vmatprep.mubr.f32.mxu0 0.0
        %1686 = vmatmul.mubr.f32.gmra.mxu0 %v1587
        %v1687 = vpop.f32.mrf.mxu0
        %v1688 = vadd.f32 0.0, %v1687
        %v1689 = vpop.f32.mrf.mxu0
        %1690 = vmatprep.mubr.f32.mxu0 0.0
        %1691 = vmatmul.mubr.f32.gmra.mxu0 %v1589
        %v1692 = vpop.f32.mrf.mxu0
        %v1693 = vadd.f32 0.0, %v1692
        %v1694 = vpop.f32.mrf.mxu0
        %1695 = vdwg.mxu0
        %v1696 = vsel %vm1574, %v1409, 0
        %v1698 = vsel %vm1574, %v1411, 0
        %v1700 = vsel %vm1574, %v1413, 0
        %v1702 = vsel %vm1574, %v1415, 0
        %v1704 = vsel %vm1574, %v1417, 0
        %v1706 = vsel %vm1574, %v1419, 0
        %v1708 = vsel %vm1574, %v1421, 0
        %v1710 = vsel %vm1574, %v1423, 0
        %1712 = vmatprep.subr.mxu0 0.0
        %1713 = vmatpush1.msra.mxu0 0.0
        %1714 = vmatprep.subr.mxu0 0.0
        %1715 = vmatpush1.msra.mxu0 0.0
        %1716 = vmatprep.subr.mxu0 0.0
        %1717 = vmatpush1.msra.mxu0 0.0
        %1718 = vmatprep.subr.mxu0 0.0
        %1719 = vmatpush1.msra.mxu0 0.0
        %1720 = vmatprep.subr.mxu0 0.0
        %1721 = vmatpush1.msra.mxu0 0.0
        %1722 = vmatprep.subr.mxu0 0.0
        %1723 = vmatpush1.msra.mxu0 0.0
        %1724 = vmatprep.subr.mxu0 0.0
        %1725 = vmatpush1.msra.mxu0 0.0
        %1726 = vmatprep.subr.mxu0 0.0
        %1727 = vmatpush1.msra.mxu0 0.0
        %1728 = vmatprep.subr.mxu0 0.0
        %1729 = vmatpush1.msra.mxu0 0.0
        %1730 = vmatprep.subr.mxu0 0.0
        %1731 = vmatpush1.msra.mxu0 0.0
        %1732 = vmatprep.subr.mxu0 0.0
        %1733 = vmatpush1.msra.mxu0 0.0
        %1734 = vmatprep.subr.mxu0 0.0
        %1735 = vmatpush1.msra.mxu0 0.0
        %1736 = vmatprep.subr.mxu0 0.0
        %1737 = vmatpush1.msra.mxu0 %v1436
        %1738 = vmatprep.subr.mxu0 0.0
        %1739 = vmatpush1.msra.mxu0 %v1435
        %1740 = vmatprep.subr.mxu0 0.0
        %1741 = vmatpush1.msra.mxu0 %v1434
        %1742 = vmatprep.subr.mxu0 0.0
        %1743 = vmatpush1.msra.mxu0 %v1433
        %1744 = vmatprep.subr.mxu0 0.0
        %1745 = vmatpush2.msra.mxu0 0.0
        %1746 = vmatprep.subr.mxu0 0.0
        %1747 = vmatpush2.msra.mxu0 0.0
        %1748 = vmatprep.subr.mxu0 0.0
        %1749 = vmatpush2.msra.mxu0 0.0
        %1750 = vmatprep.subr.mxu0 0.0
        %1751 = vmatpush2.msra.mxu0 0.0
        %1752 = vmatprep.subr.mxu0 0.0
        %1753 = vmatpush2.msra.mxu0 0.0
        %1754 = vmatprep.subr.mxu0 0.0
        %1755 = vmatpush2.msra.mxu0 0.0
        %1756 = vmatprep.subr.mxu0 0.0
        %1757 = vmatpush2.msra.mxu0 0.0
        %1758 = vmatprep.subr.mxu0 0.0
        %1759 = vmatpush2.msra.mxu0 0.0
        %1760 = vmatprep.subr.mxu0 0.0
        %1761 = vmatpush2.msra.mxu0 0.0
        %1762 = vmatprep.subr.mxu0 0.0
        %1763 = vmatpush2.msra.mxu0 0.0
        %1764 = vmatprep.subr.mxu0 0.0
        %1765 = vmatpush2.msra.mxu0 0.0
        %1766 = vmatprep.subr.mxu0 0.0
        %1767 = vmatpush2.msra.mxu0 0.0
        %1768 = vmatprep.subr.mxu0 0.0
        %1769 = vmatpush2.msra.mxu0 0.0
        %1770 = vmatprep.subr.mxu0 0.0
        %1771 = vmatpush2.msra.mxu0 0.0
        %1772 = vmatprep.subr.mxu0 0.0
        %1773 = vmatpush2.msra.mxu0 0.0
        %1774 = vmatprep.subr.mxu0 0.0
        %1775 = vmatpush2.msra.mxu0 0.0
        %1776 = vmatprep.mubr.f32.mxu0 0.0
        %1777 = vmatmul.mubr.f32.gmra.mxu0 %v1696
        %v1778 = vpop.f32.mrf.mxu0
        %v1779 = vadd.f32 %v1658, %v1778
        %v1780 = vpop.f32.mrf.mxu0
        %1781 = vmatprep.mubr.f32.mxu0 0.0
        %1782 = vmatmul.mubr.f32.gmra.mxu0 %v1698
        %v1783 = vpop.f32.mrf.mxu0
        %v1784 = vadd.f32 %v1663, %v1783
        %v1785 = vpop.f32.mrf.mxu0
        %1786 = vmatprep.mubr.f32.mxu0 0.0
        %1787 = vmatmul.mubr.f32.gmra.mxu0 %v1700
        %v1788 = vpop.f32.mrf.mxu0
        %v1789 = vadd.f32 %v1668, %v1788
        %v1790 = vpop.f32.mrf.mxu0
        %1791 = vmatprep.mubr.f32.mxu0 0.0
        %1792 = vmatmul.mubr.f32.gmra.mxu0 %v1702
        %v1793 = vpop.f32.mrf.mxu0
        %v1794 = vadd.f32 %v1673, %v1793
        %v1795 = vpop.f32.mrf.mxu0
        %1796 = vmatprep.mubr.f32.mxu0 0.0
        %1797 = vmatmul.mubr.f32.gmra.mxu0 %v1704
        %v1798 = vpop.f32.mrf.mxu0
        %v1799 = vadd.f32 %v1678, %v1798
        %v1800 = vpop.f32.mrf.mxu0
        %1801 = vmatprep.mubr.f32.mxu0 0.0
        %1802 = vmatmul.mubr.f32.gmra.mxu0 %v1706
        %v1803 = vpop.f32.mrf.mxu0
        %v1804 = vadd.f32 %v1683, %v1803
        %v1805 = vpop.f32.mrf.mxu0
        %1806 = vmatprep.mubr.f32.mxu0 0.0
        %1807 = vmatmul.mubr.f32.gmra.mxu0 %v1708
        %v1808 = vpop.f32.mrf.mxu0
        %v1809 = vadd.f32 %v1688, %v1808
        %v1810 = vpop.f32.mrf.mxu0
        %1811 = vmatprep.mubr.f32.mxu0 0.0
        %1812 = vmatmul.mubr.f32.gmra.mxu0 %v1710
        %v1813 = vpop.f32.mrf.mxu0
        %v1814 = vadd.f32 %v1693, %v1813
        %v1815 = vpop.f32.mrf.mxu0
        %1816 = vdwg.mxu0
        %vm1817 = vcmask 1045504
        %v1818 = vrot.slane %v1409, 2
        %v1819 = vrot.slane %v1410, 2
        %v1820 = vsel %vm1817, %v1818, %v1819
        %v1821 = vrot.slane %v1411, 2
        %v1822 = vrot.slane %v1412, 2
        %v1823 = vsel %vm1817, %v1821, %v1822
        %v1824 = vrot.slane %v1413, 2
        %v1825 = vrot.slane %v1414, 2
        %v1826 = vsel %vm1817, %v1824, %v1825
        %v1827 = vrot.slane %v1415, 2
        %v1828 = vrot.slane %v1416, 2
        %v1829 = vsel %vm1817, %v1827, %v1828
        %v1830 = vrot.slane %v1417, 2
        %v1831 = vrot.slane %v1418, 2
        %v1832 = vsel %vm1817, %v1830, %v1831
        %v1833 = vrot.slane %v1419, 2
        %v1834 = vrot.slane %v1420, 2
        %v1835 = vsel %vm1817, %v1833, %v1834
        %v1836 = vrot.slane %v1421, 2
        %v1837 = vrot.slane %v1422, 2
        %v1838 = vsel %vm1817, %v1836, %v1837
        %v1839 = vrot.slane %v1423, 2
        %v1840 = vrot.slane %v1424, 2
        %v1841 = vsel %vm1817, %v1839, %v1840
        %v1842 = vsel %vm1574, %v1820, 0
        %v1844 = vsel %vm1574, %v1823, 0
        %v1846 = vsel %vm1574, %v1826, 0
        %v1848 = vsel %vm1574, %v1829, 0
        %v1850 = vsel %vm1574, %v1832, 0
        %v1852 = vsel %vm1574, %v1835, 0
        %v1854 = vsel %vm1574, %v1838, 0
        %v1856 = vsel %vm1574, %v1841, 0
        %1858 = vmatprep.subr.mxu0 0.0
        %1859 = vmatpush1.msra.mxu0 0.0
        %1860 = vmatprep.subr.mxu0 0.0
        %1861 = vmatpush1.msra.mxu0 0.0
        %1862 = vmatprep.subr.mxu0 0.0
        %1863 = vmatpush1.msra.mxu0 0.0
        %1864 = vmatprep.subr.mxu0 0.0
        %1865 = vmatpush1.msra.mxu0 0.0
        %1866 = vmatprep.subr.mxu0 0.0
        %1867 = vmatpush1.msra.mxu0 0.0
        %1868 = vmatprep.subr.mxu0 0.0
        %1869 = vmatpush1.msra.mxu0 0.0
        %1870 = vmatprep.subr.mxu0 0.0
        %1871 = vmatpush1.msra.mxu0 0.0
        %1872 = vmatprep.subr.mxu0 0.0
        %1873 = vmatpush1.msra.mxu0 0.0
        %1874 = vmatprep.subr.mxu0 0.0
        %1875 = vmatpush1.msra.mxu0 0.0
        %1876 = vmatprep.subr.mxu0 0.0
        %1877 = vmatpush1.msra.mxu0 0.0
        %1878 = vmatprep.subr.mxu0 0.0
        %1879 = vmatpush1.msra.mxu0 0.0
        %1880 = vmatprep.subr.mxu0 0.0
        %1881 = vmatpush1.msra.mxu0 0.0
        %1882 = vmatprep.subr.mxu0 0.0
        %1883 = vmatpush1.msra.mxu0 %v1444
        %1884 = vmatprep.subr.mxu0 0.0
        %1885 = vmatpush1.msra.mxu0 %v1443
        %1886 = vmatprep.subr.mxu0 0.0
        %1887 = vmatpush1.msra.mxu0 %v1442
        %1888 = vmatprep.subr.mxu0 0.0
        %1889 = vmatpush1.msra.mxu0 %v1441
        %1890 = vmatprep.subr.mxu0 0.0
        %1891 = vmatpush2.msra.mxu0 0.0
        %1892 = vmatprep.subr.mxu0 0.0
        %1893 = vmatpush2.msra.mxu0 0.0
        %1894 = vmatprep.subr.mxu0 0.0
        %1895 = vmatpush2.msra.mxu0 0.0
        %1896 = vmatprep.subr.mxu0 0.0
        %1897 = vmatpush2.msra.mxu0 0.0
        %1898 = vmatprep.subr.mxu0 0.0
        %1899 = vmatpush2.msra.mxu0 0.0
        %1900 = vmatprep.subr.mxu0 0.0
        %1901 = vmatpush2.msra.mxu0 0.0
        %1902 = vmatprep.subr.mxu0 0.0
        %1903 = vmatpush2.msra.mxu0 0.0
        %1904 = vmatprep.subr.mxu0 0.0
        %1905 = vmatpush2.msra.mxu0 0.0
        %1906 = vmatprep.subr.mxu0 0.0
        %1907 = vmatpush2.msra.mxu0 0.0
        %1908 = vmatprep.subr.mxu0 0.0
        %1909 = vmatpush2.msra.mxu0 0.0
        %1910 = vmatprep.subr.mxu0 0.0
        %1911 = vmatpush2.msra.mxu0 0.0
        %1912 = vmatprep.subr.mxu0 0.0
        %1913 = vmatpush2.msra.mxu0 0.0
        %1914 = vmatprep.subr.mxu0 0.0
        %1915 = vmatpush2.msra.mxu0 0.0
        %1916 = vmatprep.subr.mxu0 0.0
        %1917 = vmatpush2.msra.mxu0 0.0
        %1918 = vmatprep.subr.mxu0 0.0
        %1919 = vmatpush2.msra.mxu0 0.0
        %1920 = vmatprep.subr.mxu0 0.0
        %1921 = vmatpush2.msra.mxu0 0.0
        %1922 = vmatprep.mubr.f32.mxu0 0.0
        %1923 = vmatmul.mubr.f32.gmra.mxu0 %v1842
        %v1924 = vpop.f32.mrf.mxu0
        %v1925 = vadd.f32 0.0, %v1924
        %v1926 = vpop.f32.mrf.mxu0
        %1927 = vmatprep.mubr.f32.mxu0 0.0
        %1928 = vmatmul.mubr.f32.gmra.mxu0 %v1844
        %v1929 = vpop.f32.mrf.mxu0
        %v1930 = vadd.f32 0.0, %v1929
        %v1931 = vpop.f32.mrf.mxu0
        %1932 = vmatprep.mubr.f32.mxu0 0.0
        %1933 = vmatmul.mubr.f32.gmra.mxu0 %v1846
        %v1934 = vpop.f32.mrf.mxu0
        %v1935 = vadd.f32 0.0, %v1934
        %v1936 = vpop.f32.mrf.mxu0
        %1937 = vmatprep.mubr.f32.mxu0 0.0
        %1938 = vmatmul.mubr.f32.gmra.mxu0 %v1848
        %v1939 = vpop.f32.mrf.mxu0
        %v1940 = vadd.f32 0.0, %v1939
        %v1941 = vpop.f32.mrf.mxu0
        %1942 = vmatprep.mubr.f32.mxu0 0.0
        %1943 = vmatmul.mubr.f32.gmra.mxu0 %v1850
        %v1944 = vpop.f32.mrf.mxu0
        %v1945 = vadd.f32 0.0, %v1944
        %v1946 = vpop.f32.mrf.mxu0
        %1947 = vmatprep.mubr.f32.mxu0 0.0
        %1948 = vmatmul.mubr.f32.gmra.mxu0 %v1852
        %v1949 = vpop.f32.mrf.mxu0
        %v1950 = vadd.f32 0.0, %v1949
        %v1951 = vpop.f32.mrf.mxu0
        %1952 = vmatprep.mubr.f32.mxu0 0.0
        %1953 = vmatmul.mubr.f32.gmra.mxu0 %v1854
        %v1954 = vpop.f32.mrf.mxu0
        %v1955 = vadd.f32 0.0, %v1954
        %v1956 = vpop.f32.mrf.mxu0
        %1957 = vmatprep.mubr.f32.mxu0 0.0
        %1958 = vmatmul.mubr.f32.gmra.mxu0 %v1856
        %v1959 = vpop.f32.mrf.mxu0
        %v1960 = vadd.f32 0.0, %v1959
        %v1961 = vpop.f32.mrf.mxu0
        %1962 = vdwg.mxu0
        %v1963 = vadd.f32 %v1779, %v1925
        %v1964 = vadd.f32 %v1784, %v1930
        %v1965 = vadd.f32 %v1789, %v1935
        %v1966 = vadd.f32 %v1794, %v1940
        %v1967 = vadd.f32 %v1799, %v1945
        %v1968 = vadd.f32 %v1804, %v1950
        %v1969 = vadd.f32 %v1809, %v1955
        %v1970 = vadd.f32 %v1814, %v1960
        %vm1971 = vcmask 1044480
        %v1972 = vrot.slane %v1409, 3
        %v1973 = vrot.slane %v1410, 3
        %v1974 = vsel %vm1971, %v1972, %v1973
        %v1975 = vrot.slane %v1411, 3
        %v1976 = vrot.slane %v1412, 3
        %v1977 = vsel %vm1971, %v1975, %v1976
        %v1978 = vrot.slane %v1413, 3
        %v1979 = vrot.slane %v1414, 3
        %v1980 = vsel %vm1971, %v1978, %v1979
        %v1981 = vrot.slane %v1415, 3
        %v1982 = vrot.slane %v1416, 3
        %v1983 = vsel %vm1971, %v1981, %v1982
        %v1984 = vrot.slane %v1417, 3
        %v1985 = vrot.slane %v1418, 3
        %v1986 = vsel %vm1971, %v1984, %v1985
        %v1987 = vrot.slane %v1419, 3
        %v1988 = vrot.slane %v1420, 3
        %v1989 = vsel %vm1971, %v1987, %v1988
        %v1990 = vrot.slane %v1421, 3
        %v1991 = vrot.slane %v1422, 3
        %v1992 = vsel %vm1971, %v1990, %v1991
        %v1993 = vrot.slane %v1423, 3
        %v1994 = vrot.slane %v1424, 3
        %v1995 = vsel %vm1971, %v1993, %v1994
        %v1996 = vsel %vm1574, %v1974, 0
        %v1998 = vsel %vm1574, %v1977, 0
        %v2000 = vsel %vm1574, %v1980, 0
        %v2002 = vsel %vm1574, %v1983, 0
        %v2004 = vsel %vm1574, %v1986, 0
        %v2006 = vsel %vm1574, %v1989, 0
        %v2008 = vsel %vm1574, %v1992, 0
        %v2010 = vsel %vm1574, %v1995, 0
        %2012 = vmatprep.subr.mxu0 0.0
        %2013 = vmatpush1.msra.mxu0 0.0
        %2014 = vmatprep.subr.mxu0 0.0
        %2015 = vmatpush1.msra.mxu0 0.0
        %2016 = vmatprep.subr.mxu0 0.0
        %2017 = vmatpush1.msra.mxu0 0.0
        %2018 = vmatprep.subr.mxu0 0.0
        %2019 = vmatpush1.msra.mxu0 0.0
        %2020 = vmatprep.subr.mxu0 0.0
        %2021 = vmatpush1.msra.mxu0 0.0
        %2022 = vmatprep.subr.mxu0 0.0
        %2023 = vmatpush1.msra.mxu0 0.0
        %2024 = vmatprep.subr.mxu0 0.0
        %2025 = vmatpush1.msra.mxu0 0.0
        %2026 = vmatprep.subr.mxu0 0.0
        %2027 = vmatpush1.msra.mxu0 0.0
        %2028 = vmatprep.subr.mxu0 0.0
        %2029 = vmatpush1.msra.mxu0 0.0
        %2030 = vmatprep.subr.mxu0 0.0
        %2031 = vmatpush1.msra.mxu0 0.0
        %2032 = vmatprep.subr.mxu0 0.0
        %2033 = vmatpush1.msra.mxu0 0.0
        %2034 = vmatprep.subr.mxu0 0.0
        %2035 = vmatpush1.msra.mxu0 0.0
        %2036 = vmatprep.subr.mxu0 0.0
        %2037 = vmatpush1.msra.mxu0 %v1448
        %2038 = vmatprep.subr.mxu0 0.0
        %2039 = vmatpush1.msra.mxu0 %v1447
        %2040 = vmatprep.subr.mxu0 0.0
        %2041 = vmatpush1.msra.mxu0 %v1446
        %2042 = vmatprep.subr.mxu0 0.0
        %2043 = vmatpush1.msra.mxu0 %v1445
        %2044 = vmatprep.subr.mxu0 0.0
        %2045 = vmatpush2.msra.mxu0 0.0
        %2046 = vmatprep.subr.mxu0 0.0
        %2047 = vmatpush2.msra.mxu0 0.0
        %2048 = vmatprep.subr.mxu0 0.0
        %2049 = vmatpush2.msra.mxu0 0.0
        %2050 = vmatprep.subr.mxu0 0.0
        %2051 = vmatpush2.msra.mxu0 0.0
        %2052 = vmatprep.subr.mxu0 0.0
        %2053 = vmatpush2.msra.mxu0 0.0
        %2054 = vmatprep.subr.mxu0 0.0
        %2055 = vmatpush2.msra.mxu0 0.0
        %2056 = vmatprep.subr.mxu0 0.0
        %2057 = vmatpush2.msra.mxu0 0.0
        %2058 = vmatprep.subr.mxu0 0.0
        %2059 = vmatpush2.msra.mxu0 0.0
        %2060 = vmatprep.subr.mxu0 0.0
        %2061 = vmatpush2.msra.mxu0 0.0
        %2062 = vmatprep.subr.mxu0 0.0
        %2063 = vmatpush2.msra.mxu0 0.0
        %2064 = vmatprep.subr.mxu0 0.0
        %2065 = vmatpush2.msra.mxu0 0.0
        %2066 = vmatprep.subr.mxu0 0.0
        %2067 = vmatpush2.msra.mxu0 0.0
        %2068 = vmatprep.subr.mxu0 0.0
        %2069 = vmatpush2.msra.mxu0 0.0
        %2070 = vmatprep.subr.mxu0 0.0
        %2071 = vmatpush2.msra.mxu0 0.0
        %2072 = vmatprep.subr.mxu0 0.0
        %2073 = vmatpush2.msra.mxu0 0.0
        %2074 = vmatprep.subr.mxu0 0.0
        %2075 = vmatpush2.msra.mxu0 0.0
        %2076 = vmatprep.mubr.f32.mxu0 0.0
        %2077 = vmatmul.mubr.f32.gmra.mxu0 %v1996
        %v2078 = vpop.f32.mrf.mxu0
        %v2079 = vadd.f32 0.0, %v2078
        %v2080 = vpop.f32.mrf.mxu0
        %2081 = vmatprep.mubr.f32.mxu0 0.0
        %2082 = vmatmul.mubr.f32.gmra.mxu0 %v1998
        %v2083 = vpop.f32.mrf.mxu0
        %v2084 = vadd.f32 0.0, %v2083
        %v2085 = vpop.f32.mrf.mxu0
        %2086 = vmatprep.mubr.f32.mxu0 0.0
        %2087 = vmatmul.mubr.f32.gmra.mxu0 %v2000
        %v2088 = vpop.f32.mrf.mxu0
        %v2089 = vadd.f32 0.0, %v2088
        %v2090 = vpop.f32.mrf.mxu0
        %2091 = vmatprep.mubr.f32.mxu0 0.0
        %2092 = vmatmul.mubr.f32.gmra.mxu0 %v2002
        %v2093 = vpop.f32.mrf.mxu0
        %v2094 = vadd.f32 0.0, %v2093
        %v2095 = vpop.f32.mrf.mxu0
        %2096 = vmatprep.mubr.f32.mxu0 0.0
        %2097 = vmatmul.mubr.f32.gmra.mxu0 %v2004
        %v2098 = vpop.f32.mrf.mxu0
        %v2099 = vadd.f32 0.0, %v2098
        %v2100 = vpop.f32.mrf.mxu0
        %2101 = vmatprep.mubr.f32.mxu0 0.0
        %2102 = vmatmul.mubr.f32.gmra.mxu0 %v2006
        %v2103 = vpop.f32.mrf.mxu0
        %v2104 = vadd.f32 0.0, %v2103
        %v2105 = vpop.f32.mrf.mxu0
        %2106 = vmatprep.mubr.f32.mxu0 0.0
        %2107 = vmatmul.mubr.f32.gmra.mxu0 %v2008
        %v2108 = vpop.f32.mrf.mxu0
        %v2109 = vadd.f32 0.0, %v2108
        %v2110 = vpop.f32.mrf.mxu0
        %2111 = vmatprep.mubr.f32.mxu0 0.0
        %2112 = vmatmul.mubr.f32.gmra.mxu0 %v2010
        %v2113 = vpop.f32.mrf.mxu0
        %v2114 = vadd.f32 0.0, %v2113
        %v2115 = vpop.f32.mrf.mxu0
        %2116 = vdwg.mxu0
        %v2117 = vadd.f32 %v1963, %v2079
        %v2118 = vadd.f32 %v1964, %v2084
        %v2119 = vadd.f32 %v1965, %v2089
        %v2120 = vadd.f32 %v1966, %v2094
        %v2121 = vadd.f32 %v1967, %v2099
        %v2122 = vadd.f32 %v1968, %v2104
        %v2123 = vadd.f32 %v1969, %v2109
        %v2124 = vadd.f32 %v1970, %v2114
        %vm2125 = vcmask 1043456
        %v2126 = vrot.slane %v1409, 4
        %v2127 = vrot.slane %v1410, 4
        %v2128 = vsel %vm2125, %v2126, %v2127
        %v2129 = vrot.slane %v1411, 4
        %v2130 = vrot.slane %v1412, 4
        %v2131 = vsel %vm2125, %v2129, %v2130
        %v2132 = vrot.slane %v1413, 4
        %v2133 = vrot.slane %v1414, 4
        %v2134 = vsel %vm2125, %v2132, %v2133
        %v2135 = vrot.slane %v1415, 4
        %v2136 = vrot.slane %v1416, 4
        %v2137 = vsel %vm2125, %v2135, %v2136
        %v2138 = vrot.slane %v1417, 4
        %v2139 = vrot.slane %v1418, 4
        %v2140 = vsel %vm2125, %v2138, %v2139
        %v2141 = vrot.slane %v1419, 4
        %v2142 = vrot.slane %v1420, 4
        %v2143 = vsel %vm2125, %v2141, %v2142
        %v2144 = vrot.slane %v1421, 4
        %v2145 = vrot.slane %v1422, 4
        %v2146 = vsel %vm2125, %v2144, %v2145
        %v2147 = vrot.slane %v1423, 4
        %v2148 = vrot.slane %v1424, 4
        %v2149 = vsel %vm2125, %v2147, %v2148
        %v2150 = vsel %vm1574, %v2128, 0
        %v2152 = vsel %vm1574, %v2131, 0
        %v2154 = vsel %vm1574, %v2134, 0
        %v2156 = vsel %vm1574, %v2137, 0
        %v2158 = vsel %vm1574, %v2140, 0
        %v2160 = vsel %vm1574, %v2143, 0
        %v2162 = vsel %vm1574, %v2146, 0
        %v2164 = vsel %vm1574, %v2149, 0
        %2166 = vmatprep.subr.mxu0 0.0
        %2167 = vmatpush1.msra.mxu0 0.0
        %2168 = vmatprep.subr.mxu0 0.0
        %2169 = vmatpush1.msra.mxu0 0.0
        %2170 = vmatprep.subr.mxu0 0.0
        %2171 = vmatpush1.msra.mxu0 0.0
        %2172 = vmatprep.subr.mxu0 0.0
        %2173 = vmatpush1.msra.mxu0 0.0
        %2174 = vmatprep.subr.mxu0 0.0
        %2175 = vmatpush1.msra.mxu0 0.0
        %2176 = vmatprep.subr.mxu0 0.0
        %2177 = vmatpush1.msra.mxu0 0.0
        %2178 = vmatprep.subr.mxu0 0.0
        %2179 = vmatpush1.msra.mxu0 0.0
        %2180 = vmatprep.subr.mxu0 0.0
        %2181 = vmatpush1.msra.mxu0 0.0
        %2182 = vmatprep.subr.mxu0 0.0
        %2183 = vmatpush1.msra.mxu0 0.0
        %2184 = vmatprep.subr.mxu0 0.0
        %2185 = vmatpush1.msra.mxu0 0.0
        %2186 = vmatprep.subr.mxu0 0.0
        %2187 = vmatpush1.msra.mxu0 0.0
        %2188 = vmatprep.subr.mxu0 0.0
        %2189 = vmatpush1.msra.mxu0 0.0
        %2190 = vmatprep.subr.mxu0 0.0
        %2191 = vmatpush1.msra.mxu0 %v1452
        %2192 = vmatprep.subr.mxu0 0.0
        %2193 = vmatpush1.msra.mxu0 %v1451
        %2194 = vmatprep.subr.mxu0 0.0
        %2195 = vmatpush1.msra.mxu0 %v1450
        %2196 = vmatprep.subr.mxu0 0.0
        %2197 = vmatpush1.msra.mxu0 %v1449
        %2198 = vmatprep.subr.mxu0 0.0
        %2199 = vmatpush2.msra.mxu0 0.0
        %2200 = vmatprep.subr.mxu0 0.0
        %2201 = vmatpush2.msra.mxu0 0.0
        %2202 = vmatprep.subr.mxu0 0.0
        %2203 = vmatpush2.msra.mxu0 0.0
        %2204 = vmatprep.subr.mxu0 0.0
        %2205 = vmatpush2.msra.mxu0 0.0
        %2206 = vmatprep.subr.mxu0 0.0
        %2207 = vmatpush2.msra.mxu0 0.0
        %2208 = vmatprep.subr.mxu0 0.0
        %2209 = vmatpush2.msra.mxu0 0.0
        %2210 = vmatprep.subr.mxu0 0.0
        %2211 = vmatpush2.msra.mxu0 0.0
        %2212 = vmatprep.subr.mxu0 0.0
        %2213 = vmatpush2.msra.mxu0 0.0
        %2214 = vmatprep.subr.mxu0 0.0
        %2215 = vmatpush2.msra.mxu0 0.0
        %2216 = vmatprep.subr.mxu0 0.0
        %2217 = vmatpush2.msra.mxu0 0.0
        %2218 = vmatprep.subr.mxu0 0.0
        %2219 = vmatpush2.msra.mxu0 0.0
        %2220 = vmatprep.subr.mxu0 0.0
        %2221 = vmatpush2.msra.mxu0 0.0
        %2222 = vmatprep.subr.mxu0 0.0
        %2223 = vmatpush2.msra.mxu0 0.0
        %2224 = vmatprep.subr.mxu0 0.0
        %2225 = vmatpush2.msra.mxu0 0.0
        %2226 = vmatprep.subr.mxu0 0.0
        %2227 = vmatpush2.msra.mxu0 0.0
        %2228 = vmatprep.subr.mxu0 0.0
        %2229 = vmatpush2.msra.mxu0 0.0
        %2230 = vmatprep.mubr.f32.mxu0 0.0
        %2231 = vmatmul.mubr.f32.gmra.mxu0 %v2150
        %v2232 = vpop.f32.mrf.mxu0
        %v2233 = vadd.f32 0.0, %v2232
        %v2234 = vpop.f32.mrf.mxu0
        %2235 = vmatprep.mubr.f32.mxu0 0.0
        %2236 = vmatmul.mubr.f32.gmra.mxu0 %v2152
        %v2237 = vpop.f32.mrf.mxu0
        %v2238 = vadd.f32 0.0, %v2237
        %v2239 = vpop.f32.mrf.mxu0
        %2240 = vmatprep.mubr.f32.mxu0 0.0
        %2241 = vmatmul.mubr.f32.gmra.mxu0 %v2154
        %v2242 = vpop.f32.mrf.mxu0
        %v2243 = vadd.f32 0.0, %v2242
        %v2244 = vpop.f32.mrf.mxu0
        %2245 = vmatprep.mubr.f32.mxu0 0.0
        %2246 = vmatmul.mubr.f32.gmra.mxu0 %v2156
        %v2247 = vpop.f32.mrf.mxu0
        %v2248 = vadd.f32 0.0, %v2247
        %v2249 = vpop.f32.mrf.mxu0
        %2250 = vmatprep.mubr.f32.mxu0 0.0
        %2251 = vmatmul.mubr.f32.gmra.mxu0 %v2158
        %v2252 = vpop.f32.mrf.mxu0
        %v2253 = vadd.f32 0.0, %v2252
        %v2254 = vpop.f32.mrf.mxu0
        %2255 = vmatprep.mubr.f32.mxu0 0.0
        %2256 = vmatmul.mubr.f32.gmra.mxu0 %v2160
        %v2257 = vpop.f32.mrf.mxu0
        %v2258 = vadd.f32 0.0, %v2257
        %v2259 = vpop.f32.mrf.mxu0
        %2260 = vmatprep.mubr.f32.mxu0 0.0
        %2261 = vmatmul.mubr.f32.gmra.mxu0 %v2162
        %v2262 = vpop.f32.mrf.mxu0
        %v2263 = vadd.f32 0.0, %v2262
        %v2264 = vpop.f32.mrf.mxu0
        %2265 = vmatprep.mubr.f32.mxu0 0.0
        %2266 = vmatmul.mubr.f32.gmra.mxu0 %v2164
        %v2267 = vpop.f32.mrf.mxu0
        %v2268 = vadd.f32 0.0, %v2267
        %v2269 = vpop.f32.mrf.mxu0
        %2270 = vdwg.mxu0
        %v2271 = vadd.f32 %v2117, %v2233
        %v2272 = vadd.f32 %v2118, %v2238
        %v2273 = vadd.f32 %v2119, %v2243
        %v2274 = vadd.f32 %v2120, %v2248
        %v2275 = vadd.f32 %v2121, %v2253
        %v2276 = vadd.f32 %v2122, %v2258
        %v2277 = vadd.f32 %v2123, %v2263
        %v2278 = vadd.f32 %v2124, %v2268
        %v2280 = vsel %vm1574, %v1425, 0
        %2282 = vmatprep.subr.mxu0 0.0
        %2283 = vmatpush1.msra.mxu0 0.0
        %2284 = vmatprep.subr.mxu0 0.0
        %2285 = vmatpush1.msra.mxu0 0.0
        %2286 = vmatprep.subr.mxu0 0.0
        %2287 = vmatpush1.msra.mxu0 0.0
        %2288 = vmatprep.subr.mxu0 0.0
        %2289 = vmatpush1.msra.mxu0 0.0
        %2290 = vmatprep.subr.mxu0 0.0
        %2291 = vmatpush1.msra.mxu0 0.0
        %2292 = vmatprep.subr.mxu0 0.0
        %2293 = vmatpush1.msra.mxu0 0.0
        %2294 = vmatprep.subr.mxu0 0.0
        %2295 = vmatpush1.msra.mxu0 0.0
        %2296 = vmatprep.subr.mxu0 0.0
        %2297 = vmatpush1.msra.mxu0 0.0
        %2298 = vmatprep.subr.mxu0 0.0
        %2299 = vmatpush1.msra.mxu0 0.0
        %2300 = vmatprep.subr.mxu0 0.0
        %2301 = vmatpush1.msra.mxu0 0.0
        %2302 = vmatprep.subr.mxu0 0.0
        %2303 = vmatpush1.msra.mxu0 0.0
        %2304 = vmatprep.subr.mxu0 0.0
        %2305 = vmatpush1.msra.mxu0 0.0
        %2306 = vmatprep.subr.mxu0 0.0
        %2307 = vmatpush1.msra.mxu0 %v1456
        %2308 = vmatprep.subr.mxu0 0.0
        %2309 = vmatpush1.msra.mxu0 %v1455
        %2310 = vmatprep.subr.mxu0 0.0
        %2311 = vmatpush1.msra.mxu0 %v1454
        %2312 = vmatprep.subr.mxu0 0.0
        %2313 = vmatpush1.msra.mxu0 %v1453
        %2314 = vmatprep.subr.mxu0 0.0
        %2315 = vmatpush2.msra.mxu0 0.0
        %2316 = vmatprep.subr.mxu0 0.0
        %2317 = vmatpush2.msra.mxu0 0.0
        %2318 = vmatprep.subr.mxu0 0.0
        %2319 = vmatpush2.msra.mxu0 0.0
        %2320 = vmatprep.subr.mxu0 0.0
        %2321 = vmatpush2.msra.mxu0 0.0
        %2322 = vmatprep.subr.mxu0 0.0
        %2323 = vmatpush2.msra.mxu0 0.0
        %2324 = vmatprep.subr.mxu0 0.0
        %2325 = vmatpush2.msra.mxu0 0.0
        %2326 = vmatprep.subr.mxu0 0.0
        %2327 = vmatpush2.msra.mxu0 0.0
        %2328 = vmatprep.subr.mxu0 0.0
        %2329 = vmatpush2.msra.mxu0 0.0
        %2330 = vmatprep.subr.mxu0 0.0
        %2331 = vmatpush2.msra.mxu0 0.0
        %2332 = vmatprep.subr.mxu0 0.0
        %2333 = vmatpush2.msra.mxu0 0.0
        %2334 = vmatprep.subr.mxu0 0.0
        %2335 = vmatpush2.msra.mxu0 0.0
        %2336 = vmatprep.subr.mxu0 0.0
        %2337 = vmatpush2.msra.mxu0 0.0
        %2338 = vmatprep.subr.mxu0 0.0
        %2339 = vmatpush2.msra.mxu0 0.0
        %2340 = vmatprep.subr.mxu0 0.0
        %2341 = vmatpush2.msra.mxu0 0.0
        %2342 = vmatprep.subr.mxu0 0.0
        %2343 = vmatpush2.msra.mxu0 0.0
        %2344 = vmatprep.subr.mxu0 0.0
        %2345 = vmatpush2.msra.mxu0 0.0
        %2346 = vmatprep.mubr.f32.mxu0 0.0
        %2347 = vmatmul.mubr.f32.gmra.mxu0 %v1698
        %v2348 = vpop.f32.mrf.mxu0
        %v2349 = vadd.f32 0.0, %v2348
        %v2350 = vpop.f32.mrf.mxu0
        %2351 = vmatprep.mubr.f32.mxu0 0.0
        %2352 = vmatmul.mubr.f32.gmra.mxu0 %v1700
        %v2353 = vpop.f32.mrf.mxu0
        %v2354 = vadd.f32 0.0, %v2353
        %v2355 = vpop.f32.mrf.mxu0
        %2356 = vmatprep.mubr.f32.mxu0 0.0
        %2357 = vmatmul.mubr.f32.gmra.mxu0 %v1702
        %v2358 = vpop.f32.mrf.mxu0
        %v2359 = vadd.f32 0.0, %v2358
        %v2360 = vpop.f32.mrf.mxu0
        %2361 = vmatprep.mubr.f32.mxu0 0.0
        %2362 = vmatmul.mubr.f32.gmra.mxu0 %v1704
        %v2363 = vpop.f32.mrf.mxu0
        %v2364 = vadd.f32 0.0, %v2363
        %v2365 = vpop.f32.mrf.mxu0
        %2366 = vmatprep.mubr.f32.mxu0 0.0
        %2367 = vmatmul.mubr.f32.gmra.mxu0 %v1706
        %v2368 = vpop.f32.mrf.mxu0
        %v2369 = vadd.f32 0.0, %v2368
        %v2370 = vpop.f32.mrf.mxu0
        %2371 = vmatprep.mubr.f32.mxu0 0.0
        %2372 = vmatmul.mubr.f32.gmra.mxu0 %v1708
        %v2373 = vpop.f32.mrf.mxu0
        %v2374 = vadd.f32 0.0, %v2373
        %v2375 = vpop.f32.mrf.mxu0
        %2376 = vmatprep.mubr.f32.mxu0 0.0
        %2377 = vmatmul.mubr.f32.gmra.mxu0 %v1710
        %v2378 = vpop.f32.mrf.mxu0
        %v2379 = vadd.f32 0.0, %v2378
        %v2380 = vpop.f32.mrf.mxu0
        %2381 = vmatprep.mubr.f32.mxu0 0.0
        %2382 = vmatmul.mubr.f32.gmra.mxu0 %v2280
        %v2383 = vpop.f32.mrf.mxu0
        %v2384 = vadd.f32 0.0, %v2383
        %v2385 = vpop.f32.mrf.mxu0
        %2386 = vdwg.mxu0
        %v2387 = vadd.f32 %v2271, %v2349
        %v2388 = vadd.f32 %v2272, %v2354
        %v2389 = vadd.f32 %v2273, %v2359
        %v2390 = vadd.f32 %v2274, %v2364
        %v2391 = vadd.f32 %v2275, %v2369
        %v2392 = vadd.f32 %v2276, %v2374
        %v2393 = vadd.f32 %v2277, %v2379
        %v2394 = vadd.f32 %v2278, %v2384
        %v2396 = vrot.slane %v1425, 1
        %v2397 = vrot.slane %v1426, 1
        %v2398 = vsel %vm1549, %v2396, %v2397
        %v2399 = vsel %vm1574, %v2398, 0
        %2401 = vmatprep.subr.mxu0 0.0
        %2402 = vmatpush1.msra.mxu0 0.0
        %2403 = vmatprep.subr.mxu0 0.0
        %2404 = vmatpush1.msra.mxu0 0.0
        %2405 = vmatprep.subr.mxu0 0.0
        %2406 = vmatpush1.msra.mxu0 0.0
        %2407 = vmatprep.subr.mxu0 0.0
        %2408 = vmatpush1.msra.mxu0 0.0
        %2409 = vmatprep.subr.mxu0 0.0
        %2410 = vmatpush1.msra.mxu0 0.0
        %2411 = vmatprep.subr.mxu0 0.0
        %2412 = vmatpush1.msra.mxu0 0.0
        %2413 = vmatprep.subr.mxu0 0.0
        %2414 = vmatpush1.msra.mxu0 0.0
        %2415 = vmatprep.subr.mxu0 0.0
        %2416 = vmatpush1.msra.mxu0 0.0
        %2417 = vmatprep.subr.mxu0 0.0
        %2418 = vmatpush1.msra.mxu0 0.0
        %2419 = vmatprep.subr.mxu0 0.0
        %2420 = vmatpush1.msra.mxu0 0.0
        %2421 = vmatprep.subr.mxu0 0.0
        %2422 = vmatpush1.msra.mxu0 0.0
        %2423 = vmatprep.subr.mxu0 0.0
        %2424 = vmatpush1.msra.mxu0 0.0
        %2425 = vmatprep.subr.mxu0 0.0
        %2426 = vmatpush1.msra.mxu0 %v1460
        %2427 = vmatprep.subr.mxu0 0.0
        %2428 = vmatpush1.msra.mxu0 %v1459
        %2429 = vmatprep.subr.mxu0 0.0
        %2430 = vmatpush1.msra.mxu0 %v1458
        %2431 = vmatprep.subr.mxu0 0.0
        %2432 = vmatpush1.msra.mxu0 %v1457
        %2433 = vmatprep.subr.mxu0 0.0
        %2434 = vmatpush2.msra.mxu0 0.0
        %2435 = vmatprep.subr.mxu0 0.0
        %2436 = vmatpush2.msra.mxu0 0.0
        %2437 = vmatprep.subr.mxu0 0.0
        %2438 = vmatpush2.msra.mxu0 0.0
        %2439 = vmatprep.subr.mxu0 0.0
        %2440 = vmatpush2.msra.mxu0 0.0
        %2441 = vmatprep.subr.mxu0 0.0
        %2442 = vmatpush2.msra.mxu0 0.0
        %2443 = vmatprep.subr.mxu0 0.0
        %2444 = vmatpush2.msra.mxu0 0.0
        %2445 = vmatprep.subr.mxu0 0.0
        %2446 = vmatpush2.msra.mxu0 0.0
        %2447 = vmatprep.subr.mxu0 0.0
        %2448 = vmatpush2.msra.mxu0 0.0
        %2449 = vmatprep.subr.mxu0 0.0
        %2450 = vmatpush2.msra.mxu0 0.0
        %2451 = vmatprep.subr.mxu0 0.0
        %2452 = vmatpush2.msra.mxu0 0.0
        %2453 = vmatprep.subr.mxu0 0.0
        %2454 = vmatpush2.msra.mxu0 0.0
        %2455 = vmatprep.subr.mxu0 0.0
        %2456 = vmatpush2.msra.mxu0 0.0
        %2457 = vmatprep.subr.mxu0 0.0
        %2458 = vmatpush2.msra.mxu0 0.0
        %2459 = vmatprep.subr.mxu0 0.0
        %2460 = vmatpush2.msra.mxu0 0.0
        %2461 = vmatprep.subr.mxu0 0.0
        %2462 = vmatpush2.msra.mxu0 0.0
        %2463 = vmatprep.subr.mxu0 0.0
        %2464 = vmatpush2.msra.mxu0 0.0
        %2465 = vmatprep.mubr.f32.mxu0 0.0
        %2466 = vmatmul.mubr.f32.gmra.mxu0 %v1577
        %v2467 = vpop.f32.mrf.mxu0
        %v2468 = vadd.f32 0.0, %v2467
        %v2469 = vpop.f32.mrf.mxu0
        %2470 = vmatprep.mubr.f32.mxu0 0.0
        %2471 = vmatmul.mubr.f32.gmra.mxu0 %v1579
        %v2472 = vpop.f32.mrf.mxu0
        %v2473 = vadd.f32 0.0, %v2472
        %v2474 = vpop.f32.mrf.mxu0
        %2475 = vmatprep.mubr.f32.mxu0 0.0
        %2476 = vmatmul.mubr.f32.gmra.mxu0 %v1581
        %v2477 = vpop.f32.mrf.mxu0
        %v2478 = vadd.f32 0.0, %v2477
        %v2479 = vpop.f32.mrf.mxu0
        %2480 = vmatprep.mubr.f32.mxu0 0.0
        %2481 = vmatmul.mubr.f32.gmra.mxu0 %v1583
        %v2482 = vpop.f32.mrf.mxu0
        %v2483 = vadd.f32 0.0, %v2482
        %v2484 = vpop.f32.mrf.mxu0
        %2485 = vmatprep.mubr.f32.mxu0 0.0
        %2486 = vmatmul.mubr.f32.gmra.mxu0 %v1585
        %v2487 = vpop.f32.mrf.mxu0
        %v2488 = vadd.f32 0.0, %v2487
        %v2489 = vpop.f32.mrf.mxu0
        %2490 = vmatprep.mubr.f32.mxu0 0.0
        %2491 = vmatmul.mubr.f32.gmra.mxu0 %v1587
        %v2492 = vpop.f32.mrf.mxu0
        %v2493 = vadd.f32 0.0, %v2492
        %v2494 = vpop.f32.mrf.mxu0
        %2495 = vmatprep.mubr.f32.mxu0 0.0
        %2496 = vmatmul.mubr.f32.gmra.mxu0 %v1589
        %v2497 = vpop.f32.mrf.mxu0
        %v2498 = vadd.f32 0.0, %v2497
        %v2499 = vpop.f32.mrf.mxu0
        %2500 = vmatprep.mubr.f32.mxu0 0.0
        %2501 = vmatmul.mubr.f32.gmra.mxu0 %v2399
        %v2502 = vpop.f32.mrf.mxu0
        %v2503 = vadd.f32 0.0, %v2502
        %v2504 = vpop.f32.mrf.mxu0
        %2505 = vdwg.mxu0
        %v2506 = vadd.f32 %v2387, %v2468
        %v2507 = vadd.f32 %v2388, %v2473
        %v2508 = vadd.f32 %v2389, %v2478
        %v2509 = vadd.f32 %v2390, %v2483
        %v2510 = vadd.f32 %v2391, %v2488
        %v2511 = vadd.f32 %v2392, %v2493
        %v2512 = vadd.f32 %v2393, %v2498
        %v2513 = vadd.f32 %v2394, %v2503
        %v2514 = vrot.slane %v1425, 2
        %v2515 = vrot.slane %v1426, 2
        %v2516 = vsel %vm1817, %v2514, %v2515
        %v2517 = vsel %vm1574, %v2516, 0
        %2519 = vmatprep.subr.mxu0 0.0
        %2520 = vmatpush1.msra.mxu0 0.0
        %2521 = vmatprep.subr.mxu0 0.0
        %2522 = vmatpush1.msra.mxu0 0.0
        %2523 = vmatprep.subr.mxu0 0.0
        %2524 = vmatpush1.msra.mxu0 0.0
        %2525 = vmatprep.subr.mxu0 0.0
        %2526 = vmatpush1.msra.mxu0 0.0
        %2527 = vmatprep.subr.mxu0 0.0
        %2528 = vmatpush1.msra.mxu0 0.0
        %2529 = vmatprep.subr.mxu0 0.0
        %2530 = vmatpush1.msra.mxu0 0.0
        %2531 = vmatprep.subr.mxu0 0.0
        %2532 = vmatpush1.msra.mxu0 0.0
        %2533 = vmatprep.subr.mxu0 0.0
        %2534 = vmatpush1.msra.mxu0 0.0
        %2535 = vmatprep.subr.mxu0 0.0
        %2536 = vmatpush1.msra.mxu0 0.0
        %2537 = vmatprep.subr.mxu0 0.0
        %2538 = vmatpush1.msra.mxu0 0.0
        %2539 = vmatprep.subr.mxu0 0.0
        %2540 = vmatpush1.msra.mxu0 0.0
        %2541 = vmatprep.subr.mxu0 0.0
        %2542 = vmatpush1.msra.mxu0 0.0
        %2543 = vmatprep.subr.mxu0 0.0
        %2544 = vmatpush1.msra.mxu0 %v1464
        %2545 = vmatprep.subr.mxu0 0.0
        %2546 = vmatpush1.msra.mxu0 %v1463
        %2547 = vmatprep.subr.mxu0 0.0
        %2548 = vmatpush1.msra.mxu0 %v1462
        %2549 = vmatprep.subr.mxu0 0.0
        %2550 = vmatpush1.msra.mxu0 %v1461
        %2551 = vmatprep.subr.mxu0 0.0
        %2552 = vmatpush2.msra.mxu0 0.0
        %2553 = vmatprep.subr.mxu0 0.0
        %2554 = vmatpush2.msra.mxu0 0.0
        %2555 = vmatprep.subr.mxu0 0.0
        %2556 = vmatpush2.msra.mxu0 0.0
        %2557 = vmatprep.subr.mxu0 0.0
        %2558 = vmatpush2.msra.mxu0 0.0
        %2559 = vmatprep.subr.mxu0 0.0
        %2560 = vmatpush2.msra.mxu0 0.0
        %2561 = vmatprep.subr.mxu0 0.0
        %2562 = vmatpush2.msra.mxu0 0.0
        %2563 = vmatprep.subr.mxu0 0.0
        %2564 = vmatpush2.msra.mxu0 0.0
        %2565 = vmatprep.subr.mxu0 0.0
        %2566 = vmatpush2.msra.mxu0 0.0
        %2567 = vmatprep.subr.mxu0 0.0
        %2568 = vmatpush2.msra.mxu0 0.0
        %2569 = vmatprep.subr.mxu0 0.0
        %2570 = vmatpush2.msra.mxu0 0.0
        %2571 = vmatprep.subr.mxu0 0.0
        %2572 = vmatpush2.msra.mxu0 0.0
        %2573 = vmatprep.subr.mxu0 0.0
        %2574 = vmatpush2.msra.mxu0 0.0
        %2575 = vmatprep.subr.mxu0 0.0
        %2576 = vmatpush2.msra.mxu0 0.0
        %2577 = vmatprep.subr.mxu0 0.0
        %2578 = vmatpush2.msra.mxu0 0.0
        %2579 = vmatprep.subr.mxu0 0.0
        %2580 = vmatpush2.msra.mxu0 0.0
        %2581 = vmatprep.subr.mxu0 0.0
        %2582 = vmatpush2.msra.mxu0 0.0
        %2583 = vmatprep.mubr.f32.mxu0 0.0
        %2584 = vmatmul.mubr.f32.gmra.mxu0 %v1844
        %v2585 = vpop.f32.mrf.mxu0
        %v2586 = vadd.f32 0.0, %v2585
        %v2587 = vpop.f32.mrf.mxu0
        %2588 = vmatprep.mubr.f32.mxu0 0.0
        %2589 = vmatmul.mubr.f32.gmra.mxu0 %v1846
        %v2590 = vpop.f32.mrf.mxu0
        %v2591 = vadd.f32 0.0, %v2590
        %v2592 = vpop.f32.mrf.mxu0
        %2593 = vmatprep.mubr.f32.mxu0 0.0
        %2594 = vmatmul.mubr.f32.gmra.mxu0 %v1848
        %v2595 = vpop.f32.mrf.mxu0
        %v2596 = vadd.f32 0.0, %v2595
        %v2597 = vpop.f32.mrf.mxu0
        %2598 = vmatprep.mubr.f32.mxu0 0.0
        %2599 = vmatmul.mubr.f32.gmra.mxu0 %v1850
        %v2600 = vpop.f32.mrf.mxu0
        %v2601 = vadd.f32 0.0, %v2600
        %v2602 = vpop.f32.mrf.mxu0
        %2603 = vmatprep.mubr.f32.mxu0 0.0
        %2604 = vmatmul.mubr.f32.gmra.mxu0 %v1852
        %v2605 = vpop.f32.mrf.mxu0
        %v2606 = vadd.f32 0.0, %v2605
        %v2607 = vpop.f32.mrf.mxu0
        %2608 = vmatprep.mubr.f32.mxu0 0.0
        %2609 = vmatmul.mubr.f32.gmra.mxu0 %v1854
        %v2610 = vpop.f32.mrf.mxu0
        %v2611 = vadd.f32 0.0, %v2610
        %v2612 = vpop.f32.mrf.mxu0
        %2613 = vmatprep.mubr.f32.mxu0 0.0
        %2614 = vmatmul.mubr.f32.gmra.mxu0 %v1856
        %v2615 = vpop.f32.mrf.mxu0
        %v2616 = vadd.f32 0.0, %v2615
        %v2617 = vpop.f32.mrf.mxu0
        %2618 = vmatprep.mubr.f32.mxu0 0.0
        %2619 = vmatmul.mubr.f32.gmra.mxu0 %v2517
        %v2620 = vpop.f32.mrf.mxu0
        %v2621 = vadd.f32 0.0, %v2620
        %v2622 = vpop.f32.mrf.mxu0
        %2623 = vdwg.mxu0
        %v2624 = vadd.f32 %v2506, %v2586
        %v2625 = vadd.f32 %v2507, %v2591
        %v2626 = vadd.f32 %v2508, %v2596
        %v2627 = vadd.f32 %v2509, %v2601
        %v2628 = vadd.f32 %v2510, %v2606
        %v2629 = vadd.f32 %v2511, %v2611
        %v2630 = vadd.f32 %v2512, %v2616
        %v2631 = vadd.f32 %v2513, %v2621
        %v2632 = vrot.slane %v1425, 3
        %v2633 = vrot.slane %v1426, 3
        %v2634 = vsel %vm1971, %v2632, %v2633
        %v2635 = vsel %vm1574, %v2634, 0
        %2637 = vmatprep.subr.mxu0 0.0
        %2638 = vmatpush1.msra.mxu0 0.0
        %2639 = vmatprep.subr.mxu0 0.0
        %2640 = vmatpush1.msra.mxu0 0.0
        %2641 = vmatprep.subr.mxu0 0.0
        %2642 = vmatpush1.msra.mxu0 0.0
        %2643 = vmatprep.subr.mxu0 0.0
        %2644 = vmatpush1.msra.mxu0 0.0
        %2645 = vmatprep.subr.mxu0 0.0
        %2646 = vmatpush1.msra.mxu0 0.0
        %2647 = vmatprep.subr.mxu0 0.0
        %2648 = vmatpush1.msra.mxu0 0.0
        %2649 = vmatprep.subr.mxu0 0.0
        %2650 = vmatpush1.msra.mxu0 0.0
        %2651 = vmatprep.subr.mxu0 0.0
        %2652 = vmatpush1.msra.mxu0 0.0
        %2653 = vmatprep.subr.mxu0 0.0
        %2654 = vmatpush1.msra.mxu0 0.0
        %2655 = vmatprep.subr.mxu0 0.0
        %2656 = vmatpush1.msra.mxu0 0.0
        %2657 = vmatprep.subr.mxu0 0.0
        %2658 = vmatpush1.msra.mxu0 0.0
        %2659 = vmatprep.subr.mxu0 0.0
        %2660 = vmatpush1.msra.mxu0 0.0
        %2661 = vmatprep.subr.mxu0 0.0
        %2662 = vmatpush1.msra.mxu0 %v1468
        %2663 = vmatprep.subr.mxu0 0.0
        %2664 = vmatpush1.msra.mxu0 %v1467
        %2665 = vmatprep.subr.mxu0 0.0
        %2666 = vmatpush1.msra.mxu0 %v1466
        %2667 = vmatprep.subr.mxu0 0.0
        %2668 = vmatpush1.msra.mxu0 %v1465
        %2669 = vmatprep.subr.mxu0 0.0
        %2670 = vmatpush2.msra.mxu0 0.0
        %2671 = vmatprep.subr.mxu0 0.0
        %2672 = vmatpush2.msra.mxu0 0.0
        %2673 = vmatprep.subr.mxu0 0.0
        %2674 = vmatpush2.msra.mxu0 0.0
        %2675 = vmatprep.subr.mxu0 0.0
        %2676 = vmatpush2.msra.mxu0 0.0
        %2677 = vmatprep.subr.mxu0 0.0
        %2678 = vmatpush2.msra.mxu0 0.0
        %2679 = vmatprep.subr.mxu0 0.0
        %2680 = vmatpush2.msra.mxu0 0.0
        %2681 = vmatprep.subr.mxu0 0.0
        %2682 = vmatpush2.msra.mxu0 0.0
        %2683 = vmatprep.subr.mxu0 0.0
        %2684 = vmatpush2.msra.mxu0 0.0
        %2685 = vmatprep.subr.mxu0 0.0
        %2686 = vmatpush2.msra.mxu0 0.0
        %2687 = vmatprep.subr.mxu0 0.0
        %2688 = vmatpush2.msra.mxu0 0.0
        %2689 = vmatprep.subr.mxu0 0.0
        %2690 = vmatpush2.msra.mxu0 0.0
        %2691 = vmatprep.subr.mxu0 0.0
        %2692 = vmatpush2.msra.mxu0 0.0
        %2693 = vmatprep.subr.mxu0 0.0
        %2694 = vmatpush2.msra.mxu0 0.0
        %2695 = vmatprep.subr.mxu0 0.0
        %2696 = vmatpush2.msra.mxu0 0.0
        %2697 = vmatprep.subr.mxu0 0.0
        %2698 = vmatpush2.msra.mxu0 0.0
        %2699 = vmatprep.subr.mxu0 0.0
        %2700 = vmatpush2.msra.mxu0 0.0
        %2701 = vmatprep.mubr.f32.mxu0 0.0
        %2702 = vmatmul.mubr.f32.gmra.mxu0 %v1998
        %v2703 = vpop.f32.mrf.mxu0
        %v2704 = vadd.f32 0.0, %v2703
        %v2705 = vpop.f32.mrf.mxu0
        %2706 = vmatprep.mubr.f32.mxu0 0.0
        %2707 = vmatmul.mubr.f32.gmra.mxu0 %v2000
        %v2708 = vpop.f32.mrf.mxu0
        %v2709 = vadd.f32 0.0, %v2708
        %v2710 = vpop.f32.mrf.mxu0
        %2711 = vmatprep.mubr.f32.mxu0 0.0
        %2712 = vmatmul.mubr.f32.gmra.mxu0 %v2002
        %v2713 = vpop.f32.mrf.mxu0
        %v2714 = vadd.f32 0.0, %v2713
        %v2715 = vpop.f32.mrf.mxu0
        %2716 = vmatprep.mubr.f32.mxu0 0.0
        %2717 = vmatmul.mubr.f32.gmra.mxu0 %v2004
        %v2718 = vpop.f32.mrf.mxu0
        %v2719 = vadd.f32 0.0, %v2718
        %v2720 = vpop.f32.mrf.mxu0
        %2721 = vmatprep.mubr.f32.mxu0 0.0
        %2722 = vmatmul.mubr.f32.gmra.mxu0 %v2006
        %v2723 = vpop.f32.mrf.mxu0
        %v2724 = vadd.f32 0.0, %v2723
        %v2725 = vpop.f32.mrf.mxu0
        %2726 = vmatprep.mubr.f32.mxu0 0.0
        %2727 = vmatmul.mubr.f32.gmra.mxu0 %v2008
        %v2728 = vpop.f32.mrf.mxu0
        %v2729 = vadd.f32 0.0, %v2728
        %v2730 = vpop.f32.mrf.mxu0
        %2731 = vmatprep.mubr.f32.mxu0 0.0
        %2732 = vmatmul.mubr.f32.gmra.mxu0 %v2010
        %v2733 = vpop.f32.mrf.mxu0
        %v2734 = vadd.f32 0.0, %v2733
        %v2735 = vpop.f32.mrf.mxu0
        %2736 = vmatprep.mubr.f32.mxu0 0.0
        %2737 = vmatmul.mubr.f32.gmra.mxu0 %v2635
        %v2738 = vpop.f32.mrf.mxu0
        %v2739 = vadd.f32 0.0, %v2738
        %v2740 = vpop.f32.mrf.mxu0
        %2741 = vdwg.mxu0
        %v2742 = vadd.f32 %v2624, %v2704
        %v2743 = vadd.f32 %v2625, %v2709
        %v2744 = vadd.f32 %v2626, %v2714
        %v2745 = vadd.f32 %v2627, %v2719
        %v2746 = vadd.f32 %v2628, %v2724
        %v2747 = vadd.f32 %v2629, %v2729
        %v2748 = vadd.f32 %v2630, %v2734
        %v2749 = vadd.f32 %v2631, %v2739
        %v2750 = vrot.slane %v1425, 4
        %v2751 = vrot.slane %v1426, 4
        %v2752 = vsel %vm2125, %v2750, %v2751
        %v2753 = vsel %vm1574, %v2752, 0
        %2755 = vmatprep.subr.mxu0 0.0
        %2756 = vmatpush1.msra.mxu0 0.0
        %2757 = vmatprep.subr.mxu0 0.0
        %2758 = vmatpush1.msra.mxu0 0.0
        %2759 = vmatprep.subr.mxu0 0.0
        %2760 = vmatpush1.msra.mxu0 0.0
        %2761 = vmatprep.subr.mxu0 0.0
        %2762 = vmatpush1.msra.mxu0 0.0
        %2763 = vmatprep.subr.mxu0 0.0
        %2764 = vmatpush1.msra.mxu0 0.0
        %2765 = vmatprep.subr.mxu0 0.0
        %2766 = vmatpush1.msra.mxu0 0.0
        %2767 = vmatprep.subr.mxu0 0.0
        %2768 = vmatpush1.msra.mxu0 0.0
        %2769 = vmatprep.subr.mxu0 0.0
        %2770 = vmatpush1.msra.mxu0 0.0
        %2771 = vmatprep.subr.mxu0 0.0
        %2772 = vmatpush1.msra.mxu0 0.0
        %2773 = vmatprep.subr.mxu0 0.0
        %2774 = vmatpush1.msra.mxu0 0.0
        %2775 = vmatprep.subr.mxu0 0.0
        %2776 = vmatpush1.msra.mxu0 0.0
        %2777 = vmatprep.subr.mxu0 0.0
        %2778 = vmatpush1.msra.mxu0 0.0
        %2779 = vmatprep.subr.mxu0 0.0
        %2780 = vmatpush1.msra.mxu0 %v1472
        %2781 = vmatprep.subr.mxu0 0.0
        %2782 = vmatpush1.msra.mxu0 %v1471
        %2783 = vmatprep.subr.mxu0 0.0
        %2784 = vmatpush1.msra.mxu0 %v1470
        %2785 = vmatprep.subr.mxu0 0.0
        %2786 = vmatpush1.msra.mxu0 %v1469
        %2787 = vmatprep.subr.mxu0 0.0
        %2788 = vmatpush2.msra.mxu0 0.0
        %2789 = vmatprep.subr.mxu0 0.0
        %2790 = vmatpush2.msra.mxu0 0.0
        %2791 = vmatprep.subr.mxu0 0.0
        %2792 = vmatpush2.msra.mxu0 0.0
        %2793 = vmatprep.subr.mxu0 0.0
        %2794 = vmatpush2.msra.mxu0 0.0
        %2795 = vmatprep.subr.mxu0 0.0
        %2796 = vmatpush2.msra.mxu0 0.0
        %2797 = vmatprep.subr.mxu0 0.0
        %2798 = vmatpush2.msra.mxu0 0.0
        %2799 = vmatprep.subr.mxu0 0.0
        %2800 = vmatpush2.msra.mxu0 0.0
        %2801 = vmatprep.subr.mxu0 0.0
        %2802 = vmatpush2.msra.mxu0 0.0
        %2803 = vmatprep.subr.mxu0 0.0
        %2804 = vmatpush2.msra.mxu0 0.0
        %2805 = vmatprep.subr.mxu0 0.0
        %2806 = vmatpush2.msra.mxu0 0.0
        %2807 = vmatprep.subr.mxu0 0.0
        %2808 = vmatpush2.msra.mxu0 0.0
        %2809 = vmatprep.subr.mxu0 0.0
        %2810 = vmatpush2.msra.mxu0 0.0
        %2811 = vmatprep.subr.mxu0 0.0
        %2812 = vmatpush2.msra.mxu0 0.0
        %2813 = vmatprep.subr.mxu0 0.0
        %2814 = vmatpush2.msra.mxu0 0.0
        %2815 = vmatprep.subr.mxu0 0.0
        %2816 = vmatpush2.msra.mxu0 0.0
        %2817 = vmatprep.subr.mxu0 0.0
        %2818 = vmatpush2.msra.mxu0 0.0
        %2819 = vmatprep.mubr.f32.mxu0 0.0
        %2820 = vmatmul.mubr.f32.gmra.mxu0 %v2152
        %v2821 = vpop.f32.mrf.mxu0
        %v2822 = vadd.f32 0.0, %v2821
        %v2823 = vpop.f32.mrf.mxu0
        %2824 = vmatprep.mubr.f32.mxu0 0.0
        %2825 = vmatmul.mubr.f32.gmra.mxu0 %v2154
        %v2826 = vpop.f32.mrf.mxu0
        %v2827 = vadd.f32 0.0, %v2826
        %v2828 = vpop.f32.mrf.mxu0
        %2829 = vmatprep.mubr.f32.mxu0 0.0
        %2830 = vmatmul.mubr.f32.gmra.mxu0 %v2156
        %v2831 = vpop.f32.mrf.mxu0
        %v2832 = vadd.f32 0.0, %v2831
        %v2833 = vpop.f32.mrf.mxu0
        %2834 = vmatprep.mubr.f32.mxu0 0.0
        %2835 = vmatmul.mubr.f32.gmra.mxu0 %v2158
        %v2836 = vpop.f32.mrf.mxu0
        %v2837 = vadd.f32 0.0, %v2836
        %v2838 = vpop.f32.mrf.mxu0
        %2839 = vmatprep.mubr.f32.mxu0 0.0
        %2840 = vmatmul.mubr.f32.gmra.mxu0 %v2160
        %v2841 = vpop.f32.mrf.mxu0
        %v2842 = vadd.f32 0.0, %v2841
        %v2843 = vpop.f32.mrf.mxu0
        %2844 = vmatprep.mubr.f32.mxu0 0.0
        %2845 = vmatmul.mubr.f32.gmra.mxu0 %v2162
        %v2846 = vpop.f32.mrf.mxu0
        %v2847 = vadd.f32 0.0, %v2846
        %v2848 = vpop.f32.mrf.mxu0
        %2849 = vmatprep.mubr.f32.mxu0 0.0
        %2850 = vmatmul.mubr.f32.gmra.mxu0 %v2164
        %v2851 = vpop.f32.mrf.mxu0
        %v2852 = vadd.f32 0.0, %v2851
        %v2853 = vpop.f32.mrf.mxu0
        %2854 = vmatprep.mubr.f32.mxu0 0.0
        %2855 = vmatmul.mubr.f32.gmra.mxu0 %v2753
        %v2856 = vpop.f32.mrf.mxu0
        %v2857 = vadd.f32 0.0, %v2856
        %v2858 = vpop.f32.mrf.mxu0
        %2859 = vdwg.mxu0
        %v2860 = vadd.f32 %v2742, %v2822
        %v2861 = vadd.f32 %v2743, %v2827
        %v2862 = vadd.f32 %v2744, %v2832
        %v2863 = vadd.f32 %v2745, %v2837
        %v2864 = vadd.f32 %v2746, %v2842
        %v2865 = vadd.f32 %v2747, %v2847
        %v2866 = vadd.f32 %v2748, %v2852
        %v2867 = vadd.f32 %v2749, %v2857
        %v2869 = vsel %vm1574, %v1427, 0
        %2871 = vmatprep.subr.mxu0 0.0
        %2872 = vmatpush1.msra.mxu0 0.0
        %2873 = vmatprep.subr.mxu0 0.0
        %2874 = vmatpush1.msra.mxu0 0.0
        %2875 = vmatprep.subr.mxu0 0.0
        %2876 = vmatpush1.msra.mxu0 0.0
        %2877 = vmatprep.subr.mxu0 0.0
        %2878 = vmatpush1.msra.mxu0 0.0
        %2879 = vmatprep.subr.mxu0 0.0
        %2880 = vmatpush1.msra.mxu0 0.0
        %2881 = vmatprep.subr.mxu0 0.0
        %2882 = vmatpush1.msra.mxu0 0.0
        %2883 = vmatprep.subr.mxu0 0.0
        %2884 = vmatpush1.msra.mxu0 0.0
        %2885 = vmatprep.subr.mxu0 0.0
        %2886 = vmatpush1.msra.mxu0 0.0
        %2887 = vmatprep.subr.mxu0 0.0
        %2888 = vmatpush1.msra.mxu0 0.0
        %2889 = vmatprep.subr.mxu0 0.0
        %2890 = vmatpush1.msra.mxu0 0.0
        %2891 = vmatprep.subr.mxu0 0.0
        %2892 = vmatpush1.msra.mxu0 0.0
        %2893 = vmatprep.subr.mxu0 0.0
        %2894 = vmatpush1.msra.mxu0 0.0
        %2895 = vmatprep.subr.mxu0 0.0
        %2896 = vmatpush1.msra.mxu0 %v1476
        %2897 = vmatprep.subr.mxu0 0.0
        %2898 = vmatpush1.msra.mxu0 %v1475
        %2899 = vmatprep.subr.mxu0 0.0
        %2900 = vmatpush1.msra.mxu0 %v1474
        %2901 = vmatprep.subr.mxu0 0.0
        %2902 = vmatpush1.msra.mxu0 %v1473
        %2903 = vmatprep.subr.mxu0 0.0
        %2904 = vmatpush2.msra.mxu0 0.0
        %2905 = vmatprep.subr.mxu0 0.0
        %2906 = vmatpush2.msra.mxu0 0.0
        %2907 = vmatprep.subr.mxu0 0.0
        %2908 = vmatpush2.msra.mxu0 0.0
        %2909 = vmatprep.subr.mxu0 0.0
        %2910 = vmatpush2.msra.mxu0 0.0
        %2911 = vmatprep.subr.mxu0 0.0
        %2912 = vmatpush2.msra.mxu0 0.0
        %2913 = vmatprep.subr.mxu0 0.0
        %2914 = vmatpush2.msra.mxu0 0.0
        %2915 = vmatprep.subr.mxu0 0.0
        %2916 = vmatpush2.msra.mxu0 0.0
        %2917 = vmatprep.subr.mxu0 0.0
        %2918 = vmatpush2.msra.mxu0 0.0
        %2919 = vmatprep.subr.mxu0 0.0
        %2920 = vmatpush2.msra.mxu0 0.0
        %2921 = vmatprep.subr.mxu0 0.0
        %2922 = vmatpush2.msra.mxu0 0.0
        %2923 = vmatprep.subr.mxu0 0.0
        %2924 = vmatpush2.msra.mxu0 0.0
        %2925 = vmatprep.subr.mxu0 0.0
        %2926 = vmatpush2.msra.mxu0 0.0
        %2927 = vmatprep.subr.mxu0 0.0
        %2928 = vmatpush2.msra.mxu0 0.0
        %2929 = vmatprep.subr.mxu0 0.0
        %2930 = vmatpush2.msra.mxu0 0.0
        %2931 = vmatprep.subr.mxu0 0.0
        %2932 = vmatpush2.msra.mxu0 0.0
        %2933 = vmatprep.subr.mxu0 0.0
        %2934 = vmatpush2.msra.mxu0 0.0
        %2935 = vmatprep.mubr.f32.mxu0 0.0
        %2936 = vmatmul.mubr.f32.gmra.mxu0 %v1700
        %v2937 = vpop.f32.mrf.mxu0
        %v2938 = vadd.f32 0.0, %v2937
        %v2939 = vpop.f32.mrf.mxu0
        %2940 = vmatprep.mubr.f32.mxu0 0.0
        %2941 = vmatmul.mubr.f32.gmra.mxu0 %v1702
        %v2942 = vpop.f32.mrf.mxu0
        %v2943 = vadd.f32 0.0, %v2942
        %v2944 = vpop.f32.mrf.mxu0
        %2945 = vmatprep.mubr.f32.mxu0 0.0
        %2946 = vmatmul.mubr.f32.gmra.mxu0 %v1704
        %v2947 = vpop.f32.mrf.mxu0
        %v2948 = vadd.f32 0.0, %v2947
        %v2949 = vpop.f32.mrf.mxu0
        %2950 = vmatprep.mubr.f32.mxu0 0.0
        %2951 = vmatmul.mubr.f32.gmra.mxu0 %v1706
        %v2952 = vpop.f32.mrf.mxu0
        %v2953 = vadd.f32 0.0, %v2952
        %v2954 = vpop.f32.mrf.mxu0
        %2955 = vmatprep.mubr.f32.mxu0 0.0
        %2956 = vmatmul.mubr.f32.gmra.mxu0 %v1708
        %v2957 = vpop.f32.mrf.mxu0
        %v2958 = vadd.f32 0.0, %v2957
        %v2959 = vpop.f32.mrf.mxu0
        %2960 = vmatprep.mubr.f32.mxu0 0.0
        %2961 = vmatmul.mubr.f32.gmra.mxu0 %v1710
        %v2962 = vpop.f32.mrf.mxu0
        %v2963 = vadd.f32 0.0, %v2962
        %v2964 = vpop.f32.mrf.mxu0
        %2965 = vmatprep.mubr.f32.mxu0 0.0
        %2966 = vmatmul.mubr.f32.gmra.mxu0 %v2280
        %v2967 = vpop.f32.mrf.mxu0
        %v2968 = vadd.f32 0.0, %v2967
        %v2969 = vpop.f32.mrf.mxu0
        %2970 = vmatprep.mubr.f32.mxu0 0.0
        %2971 = vmatmul.mubr.f32.gmra.mxu0 %v2869
        %v2972 = vpop.f32.mrf.mxu0
        %v2973 = vadd.f32 0.0, %v2972
        %v2974 = vpop.f32.mrf.mxu0
        %2975 = vdwg.mxu0
        %v2976 = vadd.f32 %v2860, %v2938
        %v2977 = vadd.f32 %v2861, %v2943
        %v2978 = vadd.f32 %v2862, %v2948
        %v2979 = vadd.f32 %v2863, %v2953
        %v2980 = vadd.f32 %v2864, %v2958
        %v2981 = vadd.f32 %v2865, %v2963
        %v2982 = vadd.f32 %v2866, %v2968
        %v2983 = vadd.f32 %v2867, %v2973
        %v2985 = vrot.slane %v1427, 1
        %v2986 = vrot.slane %v1428, 1
        %v2987 = vsel %vm1549, %v2985, %v2986
        %v2988 = vsel %vm1574, %v2987, 0
        %2990 = vmatprep.subr.mxu0 0.0
        %2991 = vmatpush1.msra.mxu0 0.0
        %2992 = vmatprep.subr.mxu0 0.0
        %2993 = vmatpush1.msra.mxu0 0.0
        %2994 = vmatprep.subr.mxu0 0.0
        %2995 = vmatpush1.msra.mxu0 0.0
        %2996 = vmatprep.subr.mxu0 0.0
        %2997 = vmatpush1.msra.mxu0 0.0
        %2998 = vmatprep.subr.mxu0 0.0
        %2999 = vmatpush1.msra.mxu0 0.0
        %3000 = vmatprep.subr.mxu0 0.0
        %3001 = vmatpush1.msra.mxu0 0.0
        %3002 = vmatprep.subr.mxu0 0.0
        %3003 = vmatpush1.msra.mxu0 0.0
        %3004 = vmatprep.subr.mxu0 0.0
        %3005 = vmatpush1.msra.mxu0 0.0
        %3006 = vmatprep.subr.mxu0 0.0
        %3007 = vmatpush1.msra.mxu0 0.0
        %3008 = vmatprep.subr.mxu0 0.0
        %3009 = vmatpush1.msra.mxu0 0.0
        %3010 = vmatprep.subr.mxu0 0.0
        %3011 = vmatpush1.msra.mxu0 0.0
        %3012 = vmatprep.subr.mxu0 0.0
        %3013 = vmatpush1.msra.mxu0 0.0
        %3014 = vmatprep.subr.mxu0 0.0
        %3015 = vmatpush1.msra.mxu0 %v1480
        %3016 = vmatprep.subr.mxu0 0.0
        %3017 = vmatpush1.msra.mxu0 %v1479
        %3018 = vmatprep.subr.mxu0 0.0
        %3019 = vmatpush1.msra.mxu0 %v1478
        %3020 = vmatprep.subr.mxu0 0.0
        %3021 = vmatpush1.msra.mxu0 %v1477
        %3022 = vmatprep.subr.mxu0 0.0
        %3023 = vmatpush2.msra.mxu0 0.0
        %3024 = vmatprep.subr.mxu0 0.0
        %3025 = vmatpush2.msra.mxu0 0.0
        %3026 = vmatprep.subr.mxu0 0.0
        %3027 = vmatpush2.msra.mxu0 0.0
        %3028 = vmatprep.subr.mxu0 0.0
        %3029 = vmatpush2.msra.mxu0 0.0
        %3030 = vmatprep.subr.mxu0 0.0
        %3031 = vmatpush2.msra.mxu0 0.0
        %3032 = vmatprep.subr.mxu0 0.0
        %3033 = vmatpush2.msra.mxu0 0.0
        %3034 = vmatprep.subr.mxu0 0.0
        %3035 = vmatpush2.msra.mxu0 0.0
        %3036 = vmatprep.subr.mxu0 0.0
        %3037 = vmatpush2.msra.mxu0 0.0
        %3038 = vmatprep.subr.mxu0 0.0
        %3039 = vmatpush2.msra.mxu0 0.0
        %3040 = vmatprep.subr.mxu0 0.0
        %3041 = vmatpush2.msra.mxu0 0.0
        %3042 = vmatprep.subr.mxu0 0.0
        %3043 = vmatpush2.msra.mxu0 0.0
        %3044 = vmatprep.subr.mxu0 0.0
        %3045 = vmatpush2.msra.mxu0 0.0
        %3046 = vmatprep.subr.mxu0 0.0
        %3047 = vmatpush2.msra.mxu0 0.0
        %3048 = vmatprep.subr.mxu0 0.0
        %3049 = vmatpush2.msra.mxu0 0.0
        %3050 = vmatprep.subr.mxu0 0.0
        %3051 = vmatpush2.msra.mxu0 0.0
        %3052 = vmatprep.subr.mxu0 0.0
        %3053 = vmatpush2.msra.mxu0 0.0
        %3054 = vmatprep.mubr.f32.mxu0 0.0
        %3055 = vmatmul.mubr.f32.gmra.mxu0 %v1579
        %v3056 = vpop.f32.mrf.mxu0
        %v3057 = vadd.f32 0.0, %v3056
        %v3058 = vpop.f32.mrf.mxu0
        %3059 = vmatprep.mubr.f32.mxu0 0.0
        %3060 = vmatmul.mubr.f32.gmra.mxu0 %v1581
        %v3061 = vpop.f32.mrf.mxu0
        %v3062 = vadd.f32 0.0, %v3061
        %v3063 = vpop.f32.mrf.mxu0
        %3064 = vmatprep.mubr.f32.mxu0 0.0
        %3065 = vmatmul.mubr.f32.gmra.mxu0 %v1583
        %v3066 = vpop.f32.mrf.mxu0
        %v3067 = vadd.f32 0.0, %v3066
        %v3068 = vpop.f32.mrf.mxu0
        %3069 = vmatprep.mubr.f32.mxu0 0.0
        %3070 = vmatmul.mubr.f32.gmra.mxu0 %v1585
        %v3071 = vpop.f32.mrf.mxu0
        %v3072 = vadd.f32 0.0, %v3071
        %v3073 = vpop.f32.mrf.mxu0
        %3074 = vmatprep.mubr.f32.mxu0 0.0
        %3075 = vmatmul.mubr.f32.gmra.mxu0 %v1587
        %v3076 = vpop.f32.mrf.mxu0
        %v3077 = vadd.f32 0.0, %v3076
        %v3078 = vpop.f32.mrf.mxu0
        %3079 = vmatprep.mubr.f32.mxu0 0.0
        %3080 = vmatmul.mubr.f32.gmra.mxu0 %v1589
        %v3081 = vpop.f32.mrf.mxu0
        %v3082 = vadd.f32 0.0, %v3081
        %v3083 = vpop.f32.mrf.mxu0
        %3084 = vmatprep.mubr.f32.mxu0 0.0
        %3085 = vmatmul.mubr.f32.gmra.mxu0 %v2399
        %v3086 = vpop.f32.mrf.mxu0
        %v3087 = vadd.f32 0.0, %v3086
        %v3088 = vpop.f32.mrf.mxu0
        %3089 = vmatprep.mubr.f32.mxu0 0.0
        %3090 = vmatmul.mubr.f32.gmra.mxu0 %v2988
        %v3091 = vpop.f32.mrf.mxu0
        %v3092 = vadd.f32 0.0, %v3091
        %v3093 = vpop.f32.mrf.mxu0
        %3094 = vdwg.mxu0
        %v3095 = vadd.f32 %v2976, %v3057
        %v3096 = vadd.f32 %v2977, %v3062
        %v3097 = vadd.f32 %v2978, %v3067
        %v3098 = vadd.f32 %v2979, %v3072
        %v3099 = vadd.f32 %v2980, %v3077
        %v3100 = vadd.f32 %v2981, %v3082
        %v3101 = vadd.f32 %v2982, %v3087
        %v3102 = vadd.f32 %v2983, %v3092
        %v3103 = vrot.slane %v1427, 2
        %v3104 = vrot.slane %v1428, 2
        %v3105 = vsel %vm1817, %v3103, %v3104
        %v3106 = vsel %vm1574, %v3105, 0
        %3108 = vmatprep.subr.mxu0 0.0
        %3109 = vmatpush1.msra.mxu0 0.0
        %3110 = vmatprep.subr.mxu0 0.0
        %3111 = vmatpush1.msra.mxu0 0.0
        %3112 = vmatprep.subr.mxu0 0.0
        %3113 = vmatpush1.msra.mxu0 0.0
        %3114 = vmatprep.subr.mxu0 0.0
        %3115 = vmatpush1.msra.mxu0 0.0
        %3116 = vmatprep.subr.mxu0 0.0
        %3117 = vmatpush1.msra.mxu0 0.0
        %3118 = vmatprep.subr.mxu0 0.0
        %3119 = vmatpush1.msra.mxu0 0.0
        %3120 = vmatprep.subr.mxu0 0.0
        %3121 = vmatpush1.msra.mxu0 0.0
        %3122 = vmatprep.subr.mxu0 0.0
        %3123 = vmatpush1.msra.mxu0 0.0
        %3124 = vmatprep.subr.mxu0 0.0
        %3125 = vmatpush1.msra.mxu0 0.0
        %3126 = vmatprep.subr.mxu0 0.0
        %3127 = vmatpush1.msra.mxu0 0.0
        %3128 = vmatprep.subr.mxu0 0.0
        %3129 = vmatpush1.msra.mxu0 0.0
        %3130 = vmatprep.subr.mxu0 0.0
        %3131 = vmatpush1.msra.mxu0 0.0
        %3132 = vmatprep.subr.mxu0 0.0
        %3133 = vmatpush1.msra.mxu0 %v1484
        %3134 = vmatprep.subr.mxu0 0.0
        %3135 = vmatpush1.msra.mxu0 %v1483
        %3136 = vmatprep.subr.mxu0 0.0
        %3137 = vmatpush1.msra.mxu0 %v1482
        %3138 = vmatprep.subr.mxu0 0.0
        %3139 = vmatpush1.msra.mxu0 %v1481
        %3140 = vmatprep.subr.mxu0 0.0
        %3141 = vmatpush2.msra.mxu0 0.0
        %3142 = vmatprep.subr.mxu0 0.0
        %3143 = vmatpush2.msra.mxu0 0.0
        %3144 = vmatprep.subr.mxu0 0.0
        %3145 = vmatpush2.msra.mxu0 0.0
        %3146 = vmatprep.subr.mxu0 0.0
        %3147 = vmatpush2.msra.mxu0 0.0
        %3148 = vmatprep.subr.mxu0 0.0
        %3149 = vmatpush2.msra.mxu0 0.0
        %3150 = vmatprep.subr.mxu0 0.0
        %3151 = vmatpush2.msra.mxu0 0.0
        %3152 = vmatprep.subr.mxu0 0.0
        %3153 = vmatpush2.msra.mxu0 0.0
        %3154 = vmatprep.subr.mxu0 0.0
        %3155 = vmatpush2.msra.mxu0 0.0
        %3156 = vmatprep.subr.mxu0 0.0
        %3157 = vmatpush2.msra.mxu0 0.0
        %3158 = vmatprep.subr.mxu0 0.0
        %3159 = vmatpush2.msra.mxu0 0.0
        %3160 = vmatprep.subr.mxu0 0.0
        %3161 = vmatpush2.msra.mxu0 0.0
        %3162 = vmatprep.subr.mxu0 0.0
        %3163 = vmatpush2.msra.mxu0 0.0
        %3164 = vmatprep.subr.mxu0 0.0
        %3165 = vmatpush2.msra.mxu0 0.0
        %3166 = vmatprep.subr.mxu0 0.0
        %3167 = vmatpush2.msra.mxu0 0.0
        %3168 = vmatprep.subr.mxu0 0.0
        %3169 = vmatpush2.msra.mxu0 0.0
        %3170 = vmatprep.subr.mxu0 0.0
        %3171 = vmatpush2.msra.mxu0 0.0
        %3172 = vmatprep.mubr.f32.mxu0 0.0
        %3173 = vmatmul.mubr.f32.gmra.mxu0 %v1846
        %v3174 = vpop.f32.mrf.mxu0
        %v3175 = vadd.f32 0.0, %v3174
        %v3176 = vpop.f32.mrf.mxu0
        %3177 = vmatprep.mubr.f32.mxu0 0.0
        %3178 = vmatmul.mubr.f32.gmra.mxu0 %v1848
        %v3179 = vpop.f32.mrf.mxu0
        %v3180 = vadd.f32 0.0, %v3179
        %v3181 = vpop.f32.mrf.mxu0
        %3182 = vmatprep.mubr.f32.mxu0 0.0
        %3183 = vmatmul.mubr.f32.gmra.mxu0 %v1850
        %v3184 = vpop.f32.mrf.mxu0
        %v3185 = vadd.f32 0.0, %v3184
        %v3186 = vpop.f32.mrf.mxu0
        %3187 = vmatprep.mubr.f32.mxu0 0.0
        %3188 = vmatmul.mubr.f32.gmra.mxu0 %v1852
        %v3189 = vpop.f32.mrf.mxu0
        %v3190 = vadd.f32 0.0, %v3189
        %v3191 = vpop.f32.mrf.mxu0
        %3192 = vmatprep.mubr.f32.mxu0 0.0
        %3193 = vmatmul.mubr.f32.gmra.mxu0 %v1854
        %v3194 = vpop.f32.mrf.mxu0
        %v3195 = vadd.f32 0.0, %v3194
        %v3196 = vpop.f32.mrf.mxu0
        %3197 = vmatprep.mubr.f32.mxu0 0.0
        %3198 = vmatmul.mubr.f32.gmra.mxu0 %v1856
        %v3199 = vpop.f32.mrf.mxu0
        %v3200 = vadd.f32 0.0, %v3199
        %v3201 = vpop.f32.mrf.mxu0
        %3202 = vmatprep.mubr.f32.mxu0 0.0
        %3203 = vmatmul.mubr.f32.gmra.mxu0 %v2517
        %v3204 = vpop.f32.mrf.mxu0
        %v3205 = vadd.f32 0.0, %v3204
        %v3206 = vpop.f32.mrf.mxu0
        %3207 = vmatprep.mubr.f32.mxu0 0.0
        %3208 = vmatmul.mubr.f32.gmra.mxu0 %v3106
        %v3209 = vpop.f32.mrf.mxu0
        %v3210 = vadd.f32 0.0, %v3209
        %v3211 = vpop.f32.mrf.mxu0
        %3212 = vdwg.mxu0
        %v3213 = vadd.f32 %v3095, %v3175
        %v3214 = vadd.f32 %v3096, %v3180
        %v3215 = vadd.f32 %v3097, %v3185
        %v3216 = vadd.f32 %v3098, %v3190
        %v3217 = vadd.f32 %v3099, %v3195
        %v3218 = vadd.f32 %v3100, %v3200
        %v3219 = vadd.f32 %v3101, %v3205
        %v3220 = vadd.f32 %v3102, %v3210
        %v3221 = vrot.slane %v1427, 3
        %v3222 = vrot.slane %v1428, 3
        %v3223 = vsel %vm1971, %v3221, %v3222
        %v3224 = vsel %vm1574, %v3223, 0
        %3226 = vmatprep.subr.mxu0 0.0
        %3227 = vmatpush1.msra.mxu0 0.0
        %3228 = vmatprep.subr.mxu0 0.0
        %3229 = vmatpush1.msra.mxu0 0.0
        %3230 = vmatprep.subr.mxu0 0.0
        %3231 = vmatpush1.msra.mxu0 0.0
        %3232 = vmatprep.subr.mxu0 0.0
        %3233 = vmatpush1.msra.mxu0 0.0
        %3234 = vmatprep.subr.mxu0 0.0
        %3235 = vmatpush1.msra.mxu0 0.0
        %3236 = vmatprep.subr.mxu0 0.0
        %3237 = vmatpush1.msra.mxu0 0.0
        %3238 = vmatprep.subr.mxu0 0.0
        %3239 = vmatpush1.msra.mxu0 0.0
        %3240 = vmatprep.subr.mxu0 0.0
        %3241 = vmatpush1.msra.mxu0 0.0
        %3242 = vmatprep.subr.mxu0 0.0
        %3243 = vmatpush1.msra.mxu0 0.0
        %3244 = vmatprep.subr.mxu0 0.0
        %3245 = vmatpush1.msra.mxu0 0.0
        %3246 = vmatprep.subr.mxu0 0.0
        %3247 = vmatpush1.msra.mxu0 0.0
        %3248 = vmatprep.subr.mxu0 0.0
        %3249 = vmatpush1.msra.mxu0 0.0
        %3250 = vmatprep.subr.mxu0 0.0
        %3251 = vmatpush1.msra.mxu0 %v1488
        %3252 = vmatprep.subr.mxu0 0.0
        %3253 = vmatpush1.msra.mxu0 %v1487
        %3254 = vmatprep.subr.mxu0 0.0
        %3255 = vmatpush1.msra.mxu0 %v1486
        %3256 = vmatprep.subr.mxu0 0.0
        %3257 = vmatpush1.msra.mxu0 %v1485
        %3258 = vmatprep.subr.mxu0 0.0
        %3259 = vmatpush2.msra.mxu0 0.0
        %3260 = vmatprep.subr.mxu0 0.0
        %3261 = vmatpush2.msra.mxu0 0.0
        %3262 = vmatprep.subr.mxu0 0.0
        %3263 = vmatpush2.msra.mxu0 0.0
        %3264 = vmatprep.subr.mxu0 0.0
        %3265 = vmatpush2.msra.mxu0 0.0
        %3266 = vmatprep.subr.mxu0 0.0
        %3267 = vmatpush2.msra.mxu0 0.0
        %3268 = vmatprep.subr.mxu0 0.0
        %3269 = vmatpush2.msra.mxu0 0.0
        %3270 = vmatprep.subr.mxu0 0.0
        %3271 = vmatpush2.msra.mxu0 0.0
        %3272 = vmatprep.subr.mxu0 0.0
        %3273 = vmatpush2.msra.mxu0 0.0
        %3274 = vmatprep.subr.mxu0 0.0
        %3275 = vmatpush2.msra.mxu0 0.0
        %3276 = vmatprep.subr.mxu0 0.0
        %3277 = vmatpush2.msra.mxu0 0.0
        %3278 = vmatprep.subr.mxu0 0.0
        %3279 = vmatpush2.msra.mxu0 0.0
        %3280 = vmatprep.subr.mxu0 0.0
        %3281 = vmatpush2.msra.mxu0 0.0
        %3282 = vmatprep.subr.mxu0 0.0
        %3283 = vmatpush2.msra.mxu0 0.0
        %3284 = vmatprep.subr.mxu0 0.0
        %3285 = vmatpush2.msra.mxu0 0.0
        %3286 = vmatprep.subr.mxu0 0.0
        %3287 = vmatpush2.msra.mxu0 0.0
        %3288 = vmatprep.subr.mxu0 0.0
        %3289 = vmatpush2.msra.mxu0 0.0
        %3290 = vmatprep.mubr.f32.mxu0 0.0
        %3291 = vmatmul.mubr.f32.gmra.mxu0 %v2000
        %v3292 = vpop.f32.mrf.mxu0
        %v3293 = vadd.f32 0.0, %v3292
        %v3294 = vpop.f32.mrf.mxu0
        %3295 = vmatprep.mubr.f32.mxu0 0.0
        %3296 = vmatmul.mubr.f32.gmra.mxu0 %v2002
        %v3297 = vpop.f32.mrf.mxu0
        %v3298 = vadd.f32 0.0, %v3297
        %v3299 = vpop.f32.mrf.mxu0
        %3300 = vmatprep.mubr.f32.mxu0 0.0
        %3301 = vmatmul.mubr.f32.gmra.mxu0 %v2004
        %v3302 = vpop.f32.mrf.mxu0
        %v3303 = vadd.f32 0.0, %v3302
        %v3304 = vpop.f32.mrf.mxu0
        %3305 = vmatprep.mubr.f32.mxu0 0.0
        %3306 = vmatmul.mubr.f32.gmra.mxu0 %v2006
        %v3307 = vpop.f32.mrf.mxu0
        %v3308 = vadd.f32 0.0, %v3307
        %v3309 = vpop.f32.mrf.mxu0
        %3310 = vmatprep.mubr.f32.mxu0 0.0
        %3311 = vmatmul.mubr.f32.gmra.mxu0 %v2008
        %v3312 = vpop.f32.mrf.mxu0
        %v3313 = vadd.f32 0.0, %v3312
        %v3314 = vpop.f32.mrf.mxu0
        %3315 = vmatprep.mubr.f32.mxu0 0.0
        %3316 = vmatmul.mubr.f32.gmra.mxu0 %v2010
        %v3317 = vpop.f32.mrf.mxu0
        %v3318 = vadd.f32 0.0, %v3317
        %v3319 = vpop.f32.mrf.mxu0
        %3320 = vmatprep.mubr.f32.mxu0 0.0
        %3321 = vmatmul.mubr.f32.gmra.mxu0 %v2635
        %v3322 = vpop.f32.mrf.mxu0
        %v3323 = vadd.f32 0.0, %v3322
        %v3324 = vpop.f32.mrf.mxu0
        %3325 = vmatprep.mubr.f32.mxu0 0.0
        %3326 = vmatmul.mubr.f32.gmra.mxu0 %v3224
        %v3327 = vpop.f32.mrf.mxu0
        %v3328 = vadd.f32 0.0, %v3327
        %v3329 = vpop.f32.mrf.mxu0
        %3330 = vdwg.mxu0
        %v3331 = vadd.f32 %v3213, %v3293
        %v3332 = vadd.f32 %v3214, %v3298
        %v3333 = vadd.f32 %v3215, %v3303
        %v3334 = vadd.f32 %v3216, %v3308
        %v3335 = vadd.f32 %v3217, %v3313
        %v3336 = vadd.f32 %v3218, %v3318
        %v3337 = vadd.f32 %v3219, %v3323
        %v3338 = vadd.f32 %v3220, %v3328
        %v3339 = vrot.slane %v1427, 4
        %v3340 = vrot.slane %v1428, 4
        %v3341 = vsel %vm2125, %v3339, %v3340
        %v3342 = vsel %vm1574, %v3341, 0
        %3344 = vmatprep.subr.mxu0 0.0
        %3345 = vmatpush1.msra.mxu0 0.0
        %3346 = vmatprep.subr.mxu0 0.0
        %3347 = vmatpush1.msra.mxu0 0.0
        %3348 = vmatprep.subr.mxu0 0.0
        %3349 = vmatpush1.msra.mxu0 0.0
        %3350 = vmatprep.subr.mxu0 0.0
        %3351 = vmatpush1.msra.mxu0 0.0
        %3352 = vmatprep.subr.mxu0 0.0
        %3353 = vmatpush1.msra.mxu0 0.0
        %3354 = vmatprep.subr.mxu0 0.0
        %3355 = vmatpush1.msra.mxu0 0.0
        %3356 = vmatprep.subr.mxu0 0.0
        %3357 = vmatpush1.msra.mxu0 0.0
        %3358 = vmatprep.subr.mxu0 0.0
        %3359 = vmatpush1.msra.mxu0 0.0
        %3360 = vmatprep.subr.mxu0 0.0
        %3361 = vmatpush1.msra.mxu0 0.0
        %3362 = vmatprep.subr.mxu0 0.0
        %3363 = vmatpush1.msra.mxu0 0.0
        %3364 = vmatprep.subr.mxu0 0.0
        %3365 = vmatpush1.msra.mxu0 0.0
        %3366 = vmatprep.subr.mxu0 0.0
        %3367 = vmatpush1.msra.mxu0 0.0
        %3368 = vmatprep.subr.mxu0 0.0
        %3369 = vmatpush1.msra.mxu0 %v1492
        %3370 = vmatprep.subr.mxu0 0.0
        %3371 = vmatpush1.msra.mxu0 %v1491
        %3372 = vmatprep.subr.mxu0 0.0
        %3373 = vmatpush1.msra.mxu0 %v1490
        %3374 = vmatprep.subr.mxu0 0.0
        %3375 = vmatpush1.msra.mxu0 %v1489
        %3376 = vmatprep.subr.mxu0 0.0
        %3377 = vmatpush2.msra.mxu0 0.0
        %3378 = vmatprep.subr.mxu0 0.0
        %3379 = vmatpush2.msra.mxu0 0.0
        %3380 = vmatprep.subr.mxu0 0.0
        %3381 = vmatpush2.msra.mxu0 0.0
        %3382 = vmatprep.subr.mxu0 0.0
        %3383 = vmatpush2.msra.mxu0 0.0
        %3384 = vmatprep.subr.mxu0 0.0
        %3385 = vmatpush2.msra.mxu0 0.0
        %3386 = vmatprep.subr.mxu0 0.0
        %3387 = vmatpush2.msra.mxu0 0.0
        %3388 = vmatprep.subr.mxu0 0.0
        %3389 = vmatpush2.msra.mxu0 0.0
        %3390 = vmatprep.subr.mxu0 0.0
        %3391 = vmatpush2.msra.mxu0 0.0
        %3392 = vmatprep.subr.mxu0 0.0
        %3393 = vmatpush2.msra.mxu0 0.0
        %3394 = vmatprep.subr.mxu0 0.0
        %3395 = vmatpush2.msra.mxu0 0.0
        %3396 = vmatprep.subr.mxu0 0.0
        %3397 = vmatpush2.msra.mxu0 0.0
        %3398 = vmatprep.subr.mxu0 0.0
        %3399 = vmatpush2.msra.mxu0 0.0
        %3400 = vmatprep.subr.mxu0 0.0
        %3401 = vmatpush2.msra.mxu0 0.0
        %3402 = vmatprep.subr.mxu0 0.0
        %3403 = vmatpush2.msra.mxu0 0.0
        %3404 = vmatprep.subr.mxu0 0.0
        %3405 = vmatpush2.msra.mxu0 0.0
        %3406 = vmatprep.subr.mxu0 0.0
        %3407 = vmatpush2.msra.mxu0 0.0
        %3408 = vmatprep.mubr.f32.mxu0 0.0
        %3409 = vmatmul.mubr.f32.gmra.mxu0 %v2154
        %v3410 = vpop.f32.mrf.mxu0
        %v3411 = vadd.f32 0.0, %v3410
        %v3412 = vpop.f32.mrf.mxu0
        %3413 = vmatprep.mubr.f32.mxu0 0.0
        %3414 = vmatmul.mubr.f32.gmra.mxu0 %v2156
        %v3415 = vpop.f32.mrf.mxu0
        %v3416 = vadd.f32 0.0, %v3415
        %v3417 = vpop.f32.mrf.mxu0
        %3418 = vmatprep.mubr.f32.mxu0 0.0
        %3419 = vmatmul.mubr.f32.gmra.mxu0 %v2158
        %v3420 = vpop.f32.mrf.mxu0
        %v3421 = vadd.f32 0.0, %v3420
        %v3422 = vpop.f32.mrf.mxu0
        %3423 = vmatprep.mubr.f32.mxu0 0.0
        %3424 = vmatmul.mubr.f32.gmra.mxu0 %v2160
        %v3425 = vpop.f32.mrf.mxu0
        %v3426 = vadd.f32 0.0, %v3425
        %v3427 = vpop.f32.mrf.mxu0
        %3428 = vmatprep.mubr.f32.mxu0 0.0
        %3429 = vmatmul.mubr.f32.gmra.mxu0 %v2162
        %v3430 = vpop.f32.mrf.mxu0
        %v3431 = vadd.f32 0.0, %v3430
        %v3432 = vpop.f32.mrf.mxu0
        %3433 = vmatprep.mubr.f32.mxu0 0.0
        %3434 = vmatmul.mubr.f32.gmra.mxu0 %v2164
        %v3435 = vpop.f32.mrf.mxu0
        %v3436 = vadd.f32 0.0, %v3435
        %v3437 = vpop.f32.mrf.mxu0
        %3438 = vmatprep.mubr.f32.mxu0 0.0
        %3439 = vmatmul.mubr.f32.gmra.mxu0 %v2753
        %v3440 = vpop.f32.mrf.mxu0
        %v3441 = vadd.f32 0.0, %v3440
        %v3442 = vpop.f32.mrf.mxu0
        %3443 = vmatprep.mubr.f32.mxu0 0.0
        %3444 = vmatmul.mubr.f32.gmra.mxu0 %v3342
        %v3445 = vpop.f32.mrf.mxu0
        %v3446 = vadd.f32 0.0, %v3445
        %v3447 = vpop.f32.mrf.mxu0
        %3448 = vdwg.mxu0
        %v3449 = vadd.f32 %v3331, %v3411
        %v3450 = vadd.f32 %v3332, %v3416
        %v3451 = vadd.f32 %v3333, %v3421
        %v3452 = vadd.f32 %v3334, %v3426
        %v3453 = vadd.f32 %v3335, %v3431
        %v3454 = vadd.f32 %v3336, %v3436
        %v3455 = vadd.f32 %v3337, %v3441
        %v3456 = vadd.f32 %v3338, %v3446
        %v3458 = vsel %vm1574, %v1429, 0
        %3460 = vmatprep.subr.mxu0 0.0
        %3461 = vmatpush1.msra.mxu0 0.0
        %3462 = vmatprep.subr.mxu0 0.0
        %3463 = vmatpush1.msra.mxu0 0.0
        %3464 = vmatprep.subr.mxu0 0.0
        %3465 = vmatpush1.msra.mxu0 0.0
        %3466 = vmatprep.subr.mxu0 0.0
        %3467 = vmatpush1.msra.mxu0 0.0
        %3468 = vmatprep.subr.mxu0 0.0
        %3469 = vmatpush1.msra.mxu0 0.0
        %3470 = vmatprep.subr.mxu0 0.0
        %3471 = vmatpush1.msra.mxu0 0.0
        %3472 = vmatprep.subr.mxu0 0.0
        %3473 = vmatpush1.msra.mxu0 0.0
        %3474 = vmatprep.subr.mxu0 0.0
        %3475 = vmatpush1.msra.mxu0 0.0
        %3476 = vmatprep.subr.mxu0 0.0
        %3477 = vmatpush1.msra.mxu0 0.0
        %3478 = vmatprep.subr.mxu0 0.0
        %3479 = vmatpush1.msra.mxu0 0.0
        %3480 = vmatprep.subr.mxu0 0.0
        %3481 = vmatpush1.msra.mxu0 0.0
        %3482 = vmatprep.subr.mxu0 0.0
        %3483 = vmatpush1.msra.mxu0 0.0
        %3484 = vmatprep.subr.mxu0 0.0
        %3485 = vmatpush1.msra.mxu0 %v1496
        %3486 = vmatprep.subr.mxu0 0.0
        %3487 = vmatpush1.msra.mxu0 %v1495
        %3488 = vmatprep.subr.mxu0 0.0
        %3489 = vmatpush1.msra.mxu0 %v1494
        %3490 = vmatprep.subr.mxu0 0.0
        %3491 = vmatpush1.msra.mxu0 %v1493
        %3492 = vmatprep.subr.mxu0 0.0
        %3493 = vmatpush2.msra.mxu0 0.0
        %3494 = vmatprep.subr.mxu0 0.0
        %3495 = vmatpush2.msra.mxu0 0.0
        %3496 = vmatprep.subr.mxu0 0.0
        %3497 = vmatpush2.msra.mxu0 0.0
        %3498 = vmatprep.subr.mxu0 0.0
        %3499 = vmatpush2.msra.mxu0 0.0
        %3500 = vmatprep.subr.mxu0 0.0
        %3501 = vmatpush2.msra.mxu0 0.0
        %3502 = vmatprep.subr.mxu0 0.0
        %3503 = vmatpush2.msra.mxu0 0.0
        %3504 = vmatprep.subr.mxu0 0.0
        %3505 = vmatpush2.msra.mxu0 0.0
        %3506 = vmatprep.subr.mxu0 0.0
        %3507 = vmatpush2.msra.mxu0 0.0
        %3508 = vmatprep.subr.mxu0 0.0
        %3509 = vmatpush2.msra.mxu0 0.0
        %3510 = vmatprep.subr.mxu0 0.0
        %3511 = vmatpush2.msra.mxu0 0.0
        %3512 = vmatprep.subr.mxu0 0.0
        %3513 = vmatpush2.msra.mxu0 0.0
        %3514 = vmatprep.subr.mxu0 0.0
        %3515 = vmatpush2.msra.mxu0 0.0
        %3516 = vmatprep.subr.mxu0 0.0
        %3517 = vmatpush2.msra.mxu0 0.0
        %3518 = vmatprep.subr.mxu0 0.0
        %3519 = vmatpush2.msra.mxu0 0.0
        %3520 = vmatprep.subr.mxu0 0.0
        %3521 = vmatpush2.msra.mxu0 0.0
        %3522 = vmatprep.subr.mxu0 0.0
        %3523 = vmatpush2.msra.mxu0 0.0
        %3524 = vmatprep.mubr.f32.mxu0 0.0
        %3525 = vmatmul.mubr.f32.gmra.mxu0 %v1702
        %v3526 = vpop.f32.mrf.mxu0
        %v3527 = vadd.f32 0.0, %v3526
        %v3528 = vpop.f32.mrf.mxu0
        %3529 = vmatprep.mubr.f32.mxu0 0.0
        %3530 = vmatmul.mubr.f32.gmra.mxu0 %v1704
        %v3531 = vpop.f32.mrf.mxu0
        %v3532 = vadd.f32 0.0, %v3531
        %v3533 = vpop.f32.mrf.mxu0
        %3534 = vmatprep.mubr.f32.mxu0 0.0
        %3535 = vmatmul.mubr.f32.gmra.mxu0 %v1706
        %v3536 = vpop.f32.mrf.mxu0
        %v3537 = vadd.f32 0.0, %v3536
        %v3538 = vpop.f32.mrf.mxu0
        %3539 = vmatprep.mubr.f32.mxu0 0.0
        %3540 = vmatmul.mubr.f32.gmra.mxu0 %v1708
        %v3541 = vpop.f32.mrf.mxu0
        %v3542 = vadd.f32 0.0, %v3541
        %v3543 = vpop.f32.mrf.mxu0
        %3544 = vmatprep.mubr.f32.mxu0 0.0
        %3545 = vmatmul.mubr.f32.gmra.mxu0 %v1710
        %v3546 = vpop.f32.mrf.mxu0
        %v3547 = vadd.f32 0.0, %v3546
        %v3548 = vpop.f32.mrf.mxu0
        %3549 = vmatprep.mubr.f32.mxu0 0.0
        %3550 = vmatmul.mubr.f32.gmra.mxu0 %v2280
        %v3551 = vpop.f32.mrf.mxu0
        %v3552 = vadd.f32 0.0, %v3551
        %v3553 = vpop.f32.mrf.mxu0
        %3554 = vmatprep.mubr.f32.mxu0 0.0
        %3555 = vmatmul.mubr.f32.gmra.mxu0 %v2869
        %v3556 = vpop.f32.mrf.mxu0
        %v3557 = vadd.f32 0.0, %v3556
        %v3558 = vpop.f32.mrf.mxu0
        %3559 = vmatprep.mubr.f32.mxu0 0.0
        %3560 = vmatmul.mubr.f32.gmra.mxu0 %v3458
        %v3561 = vpop.f32.mrf.mxu0
        %v3562 = vadd.f32 0.0, %v3561
        %v3563 = vpop.f32.mrf.mxu0
        %3564 = vdwg.mxu0
        %v3565 = vadd.f32 %v3449, %v3527
        %v3566 = vadd.f32 %v3450, %v3532
        %v3567 = vadd.f32 %v3451, %v3537
        %v3568 = vadd.f32 %v3452, %v3542
        %v3569 = vadd.f32 %v3453, %v3547
        %v3570 = vadd.f32 %v3454, %v3552
        %v3571 = vadd.f32 %v3455, %v3557
        %v3572 = vadd.f32 %v3456, %v3562
        %v3574 = vrot.slane %v1429, 1
        %v3575 = vrot.slane %v1430, 1
        %v3576 = vsel %vm1549, %v3574, %v3575
        %v3577 = vsel %vm1574, %v3576, 0
        %3579 = vmatprep.subr.mxu0 0.0
        %3580 = vmatpush1.msra.mxu0 0.0
        %3581 = vmatprep.subr.mxu0 0.0
        %3582 = vmatpush1.msra.mxu0 0.0
        %3583 = vmatprep.subr.mxu0 0.0
        %3584 = vmatpush1.msra.mxu0 0.0
        %3585 = vmatprep.subr.mxu0 0.0
        %3586 = vmatpush1.msra.mxu0 0.0
        %3587 = vmatprep.subr.mxu0 0.0
        %3588 = vmatpush1.msra.mxu0 0.0
        %3589 = vmatprep.subr.mxu0 0.0
        %3590 = vmatpush1.msra.mxu0 0.0
        %3591 = vmatprep.subr.mxu0 0.0
        %3592 = vmatpush1.msra.mxu0 0.0
        %3593 = vmatprep.subr.mxu0 0.0
        %3594 = vmatpush1.msra.mxu0 0.0
        %3595 = vmatprep.subr.mxu0 0.0
        %3596 = vmatpush1.msra.mxu0 0.0
        %3597 = vmatprep.subr.mxu0 0.0
        %3598 = vmatpush1.msra.mxu0 0.0
        %3599 = vmatprep.subr.mxu0 0.0
        %3600 = vmatpush1.msra.mxu0 0.0
        %3601 = vmatprep.subr.mxu0 0.0
        %3602 = vmatpush1.msra.mxu0 0.0
        %3603 = vmatprep.subr.mxu0 0.0
        %3604 = vmatpush1.msra.mxu0 %v1500
        %3605 = vmatprep.subr.mxu0 0.0
        %3606 = vmatpush1.msra.mxu0 %v1499
        %3607 = vmatprep.subr.mxu0 0.0
        %3608 = vmatpush1.msra.mxu0 %v1498
        %3609 = vmatprep.subr.mxu0 0.0
        %3610 = vmatpush1.msra.mxu0 %v1497
        %3611 = vmatprep.subr.mxu0 0.0
        %3612 = vmatpush2.msra.mxu0 0.0
        %3613 = vmatprep.subr.mxu0 0.0
        %3614 = vmatpush2.msra.mxu0 0.0
        %3615 = vmatprep.subr.mxu0 0.0
        %3616 = vmatpush2.msra.mxu0 0.0
        %3617 = vmatprep.subr.mxu0 0.0
        %3618 = vmatpush2.msra.mxu0 0.0
        %3619 = vmatprep.subr.mxu0 0.0
        %3620 = vmatpush2.msra.mxu0 0.0
        %3621 = vmatprep.subr.mxu0 0.0
        %3622 = vmatpush2.msra.mxu0 0.0
        %3623 = vmatprep.subr.mxu0 0.0
        %3624 = vmatpush2.msra.mxu0 0.0
        %3625 = vmatprep.subr.mxu0 0.0
        %3626 = vmatpush2.msra.mxu0 0.0
        %3627 = vmatprep.subr.mxu0 0.0
        %3628 = vmatpush2.msra.mxu0 0.0
        %3629 = vmatprep.subr.mxu0 0.0
        %3630 = vmatpush2.msra.mxu0 0.0
        %3631 = vmatprep.subr.mxu0 0.0
        %3632 = vmatpush2.msra.mxu0 0.0
        %3633 = vmatprep.subr.mxu0 0.0
        %3634 = vmatpush2.msra.mxu0 0.0
        %3635 = vmatprep.subr.mxu0 0.0
        %3636 = vmatpush2.msra.mxu0 0.0
        %3637 = vmatprep.subr.mxu0 0.0
        %3638 = vmatpush2.msra.mxu0 0.0
        %3639 = vmatprep.subr.mxu0 0.0
        %3640 = vmatpush2.msra.mxu0 0.0
        %3641 = vmatprep.subr.mxu0 0.0
        %3642 = vmatpush2.msra.mxu0 0.0
        %3643 = vmatprep.mubr.f32.mxu0 0.0
        %3644 = vmatmul.mubr.f32.gmra.mxu0 %v1581
        %v3645 = vpop.f32.mrf.mxu0
        %v3646 = vadd.f32 0.0, %v3645
        %v3647 = vpop.f32.mrf.mxu0
        %3648 = vmatprep.mubr.f32.mxu0 0.0
        %3649 = vmatmul.mubr.f32.gmra.mxu0 %v1583
        %v3650 = vpop.f32.mrf.mxu0
        %v3651 = vadd.f32 0.0, %v3650
        %v3652 = vpop.f32.mrf.mxu0
        %3653 = vmatprep.mubr.f32.mxu0 0.0
        %3654 = vmatmul.mubr.f32.gmra.mxu0 %v1585
        %v3655 = vpop.f32.mrf.mxu0
        %v3656 = vadd.f32 0.0, %v3655
        %v3657 = vpop.f32.mrf.mxu0
        %3658 = vmatprep.mubr.f32.mxu0 0.0
        %3659 = vmatmul.mubr.f32.gmra.mxu0 %v1587
        %v3660 = vpop.f32.mrf.mxu0
        %v3661 = vadd.f32 0.0, %v3660
        %v3662 = vpop.f32.mrf.mxu0
        %3663 = vmatprep.mubr.f32.mxu0 0.0
        %3664 = vmatmul.mubr.f32.gmra.mxu0 %v1589
        %v3665 = vpop.f32.mrf.mxu0
        %v3666 = vadd.f32 0.0, %v3665
        %v3667 = vpop.f32.mrf.mxu0
        %3668 = vmatprep.mubr.f32.mxu0 0.0
        %3669 = vmatmul.mubr.f32.gmra.mxu0 %v2399
        %v3670 = vpop.f32.mrf.mxu0
        %v3671 = vadd.f32 0.0, %v3670
        %v3672 = vpop.f32.mrf.mxu0
        %3673 = vmatprep.mubr.f32.mxu0 0.0
        %3674 = vmatmul.mubr.f32.gmra.mxu0 %v2988
        %v3675 = vpop.f32.mrf.mxu0
        %v3676 = vadd.f32 0.0, %v3675
        %v3677 = vpop.f32.mrf.mxu0
        %3678 = vmatprep.mubr.f32.mxu0 0.0
        %3679 = vmatmul.mubr.f32.gmra.mxu0 %v3577
        %v3680 = vpop.f32.mrf.mxu0
        %v3681 = vadd.f32 0.0, %v3680
        %v3682 = vpop.f32.mrf.mxu0
        %3683 = vdwg.mxu0
        %v3684 = vadd.f32 %v3565, %v3646
        %v3685 = vadd.f32 %v3566, %v3651
        %v3686 = vadd.f32 %v3567, %v3656
        %v3687 = vadd.f32 %v3568, %v3661
        %v3688 = vadd.f32 %v3569, %v3666
        %v3689 = vadd.f32 %v3570, %v3671
        %v3690 = vadd.f32 %v3571, %v3676
        %v3691 = vadd.f32 %v3572, %v3681
        %v3692 = vrot.slane %v1429, 2
        %v3693 = vrot.slane %v1430, 2
        %v3694 = vsel %vm1817, %v3692, %v3693
        %v3695 = vsel %vm1574, %v3694, 0
        %3697 = vmatprep.subr.mxu0 0.0
        %3698 = vmatpush1.msra.mxu0 0.0
        %3699 = vmatprep.subr.mxu0 0.0
        %3700 = vmatpush1.msra.mxu0 0.0
        %3701 = vmatprep.subr.mxu0 0.0
        %3702 = vmatpush1.msra.mxu0 0.0
        %3703 = vmatprep.subr.mxu0 0.0
        %3704 = vmatpush1.msra.mxu0 0.0
        %3705 = vmatprep.subr.mxu0 0.0
        %3706 = vmatpush1.msra.mxu0 0.0
        %3707 = vmatprep.subr.mxu0 0.0
        %3708 = vmatpush1.msra.mxu0 0.0
        %3709 = vmatprep.subr.mxu0 0.0
        %3710 = vmatpush1.msra.mxu0 0.0
        %3711 = vmatprep.subr.mxu0 0.0
        %3712 = vmatpush1.msra.mxu0 0.0
        %3713 = vmatprep.subr.mxu0 0.0
        %3714 = vmatpush1.msra.mxu0 0.0
        %3715 = vmatprep.subr.mxu0 0.0
        %3716 = vmatpush1.msra.mxu0 0.0
        %3717 = vmatprep.subr.mxu0 0.0
        %3718 = vmatpush1.msra.mxu0 0.0
        %3719 = vmatprep.subr.mxu0 0.0
        %3720 = vmatpush1.msra.mxu0 0.0
        %3721 = vmatprep.subr.mxu0 0.0
        %3722 = vmatpush1.msra.mxu0 %v1504
        %3723 = vmatprep.subr.mxu0 0.0
        %3724 = vmatpush1.msra.mxu0 %v1503
        %3725 = vmatprep.subr.mxu0 0.0
        %3726 = vmatpush1.msra.mxu0 %v1502
        %3727 = vmatprep.subr.mxu0 0.0
        %3728 = vmatpush1.msra.mxu0 %v1501
        %3729 = vmatprep.subr.mxu0 0.0
        %3730 = vmatpush2.msra.mxu0 0.0
        %3731 = vmatprep.subr.mxu0 0.0
        %3732 = vmatpush2.msra.mxu0 0.0
        %3733 = vmatprep.subr.mxu0 0.0
        %3734 = vmatpush2.msra.mxu0 0.0
        %3735 = vmatprep.subr.mxu0 0.0
        %3736 = vmatpush2.msra.mxu0 0.0
        %3737 = vmatprep.subr.mxu0 0.0
        %3738 = vmatpush2.msra.mxu0 0.0
        %3739 = vmatprep.subr.mxu0 0.0
        %3740 = vmatpush2.msra.mxu0 0.0
        %3741 = vmatprep.subr.mxu0 0.0
        %3742 = vmatpush2.msra.mxu0 0.0
        %3743 = vmatprep.subr.mxu0 0.0
        %3744 = vmatpush2.msra.mxu0 0.0
        %3745 = vmatprep.subr.mxu0 0.0
        %3746 = vmatpush2.msra.mxu0 0.0
        %3747 = vmatprep.subr.mxu0 0.0
        %3748 = vmatpush2.msra.mxu0 0.0
        %3749 = vmatprep.subr.mxu0 0.0
        %3750 = vmatpush2.msra.mxu0 0.0
        %3751 = vmatprep.subr.mxu0 0.0
        %3752 = vmatpush2.msra.mxu0 0.0
        %3753 = vmatprep.subr.mxu0 0.0
        %3754 = vmatpush2.msra.mxu0 0.0
        %3755 = vmatprep.subr.mxu0 0.0
        %3756 = vmatpush2.msra.mxu0 0.0
        %3757 = vmatprep.subr.mxu0 0.0
        %3758 = vmatpush2.msra.mxu0 0.0
        %3759 = vmatprep.subr.mxu0 0.0
        %3760 = vmatpush2.msra.mxu0 0.0
        %3761 = vmatprep.mubr.f32.mxu0 0.0
        %3762 = vmatmul.mubr.f32.gmra.mxu0 %v1848
        %v3763 = vpop.f32.mrf.mxu0
        %v3764 = vadd.f32 0.0, %v3763
        %v3765 = vpop.f32.mrf.mxu0
        %3766 = vmatprep.mubr.f32.mxu0 0.0
        %3767 = vmatmul.mubr.f32.gmra.mxu0 %v1850
        %v3768 = vpop.f32.mrf.mxu0
        %v3769 = vadd.f32 0.0, %v3768
        %v3770 = vpop.f32.mrf.mxu0
        %3771 = vmatprep.mubr.f32.mxu0 0.0
        %3772 = vmatmul.mubr.f32.gmra.mxu0 %v1852
        %v3773 = vpop.f32.mrf.mxu0
        %v3774 = vadd.f32 0.0, %v3773
        %v3775 = vpop.f32.mrf.mxu0
        %3776 = vmatprep.mubr.f32.mxu0 0.0
        %3777 = vmatmul.mubr.f32.gmra.mxu0 %v1854
        %v3778 = vpop.f32.mrf.mxu0
        %v3779 = vadd.f32 0.0, %v3778
        %v3780 = vpop.f32.mrf.mxu0
        %3781 = vmatprep.mubr.f32.mxu0 0.0
        %3782 = vmatmul.mubr.f32.gmra.mxu0 %v1856
        %v3783 = vpop.f32.mrf.mxu0
        %v3784 = vadd.f32 0.0, %v3783
        %v3785 = vpop.f32.mrf.mxu0
        %3786 = vmatprep.mubr.f32.mxu0 0.0
        %3787 = vmatmul.mubr.f32.gmra.mxu0 %v2517
        %v3788 = vpop.f32.mrf.mxu0
        %v3789 = vadd.f32 0.0, %v3788
        %v3790 = vpop.f32.mrf.mxu0
        %3791 = vmatprep.mubr.f32.mxu0 0.0
        %3792 = vmatmul.mubr.f32.gmra.mxu0 %v3106
        %v3793 = vpop.f32.mrf.mxu0
        %v3794 = vadd.f32 0.0, %v3793
        %v3795 = vpop.f32.mrf.mxu0
        %3796 = vmatprep.mubr.f32.mxu0 0.0
        %3797 = vmatmul.mubr.f32.gmra.mxu0 %v3695
        %v3798 = vpop.f32.mrf.mxu0
        %v3799 = vadd.f32 0.0, %v3798
        %v3800 = vpop.f32.mrf.mxu0
        %3801 = vdwg.mxu0
        %v3802 = vadd.f32 %v3684, %v3764
        %v3803 = vadd.f32 %v3685, %v3769
        %v3804 = vadd.f32 %v3686, %v3774
        %v3805 = vadd.f32 %v3687, %v3779
        %v3806 = vadd.f32 %v3688, %v3784
        %v3807 = vadd.f32 %v3689, %v3789
        %v3808 = vadd.f32 %v3690, %v3794
        %v3809 = vadd.f32 %v3691, %v3799
        %v3810 = vrot.slane %v1429, 3
        %v3811 = vrot.slane %v1430, 3
        %v3812 = vsel %vm1971, %v3810, %v3811
        %v3813 = vsel %vm1574, %v3812, 0
        %3815 = vmatprep.subr.mxu0 0.0
        %3816 = vmatpush1.msra.mxu0 0.0
        %3817 = vmatprep.subr.mxu0 0.0
        %3818 = vmatpush1.msra.mxu0 0.0
        %3819 = vmatprep.subr.mxu0 0.0
        %3820 = vmatpush1.msra.mxu0 0.0
        %3821 = vmatprep.subr.mxu0 0.0
        %3822 = vmatpush1.msra.mxu0 0.0
        %3823 = vmatprep.subr.mxu0 0.0
        %3824 = vmatpush1.msra.mxu0 0.0
        %3825 = vmatprep.subr.mxu0 0.0
        %3826 = vmatpush1.msra.mxu0 0.0
        %3827 = vmatprep.subr.mxu0 0.0
        %3828 = vmatpush1.msra.mxu0 0.0
        %3829 = vmatprep.subr.mxu0 0.0
        %3830 = vmatpush1.msra.mxu0 0.0
        %3831 = vmatprep.subr.mxu0 0.0
        %3832 = vmatpush1.msra.mxu0 0.0
        %3833 = vmatprep.subr.mxu0 0.0
        %3834 = vmatpush1.msra.mxu0 0.0
        %3835 = vmatprep.subr.mxu0 0.0
        %3836 = vmatpush1.msra.mxu0 0.0
        %3837 = vmatprep.subr.mxu0 0.0
        %3838 = vmatpush1.msra.mxu0 0.0
        %3839 = vmatprep.subr.mxu0 0.0
        %3840 = vmatpush1.msra.mxu0 %v1508
        %3841 = vmatprep.subr.mxu0 0.0
        %3842 = vmatpush1.msra.mxu0 %v1507
        %3843 = vmatprep.subr.mxu0 0.0
        %3844 = vmatpush1.msra.mxu0 %v1506
        %3845 = vmatprep.subr.mxu0 0.0
        %3846 = vmatpush1.msra.mxu0 %v1505
        %3847 = vmatprep.subr.mxu0 0.0
        %3848 = vmatpush2.msra.mxu0 0.0
        %3849 = vmatprep.subr.mxu0 0.0
        %3850 = vmatpush2.msra.mxu0 0.0
        %3851 = vmatprep.subr.mxu0 0.0
        %3852 = vmatpush2.msra.mxu0 0.0
        %3853 = vmatprep.subr.mxu0 0.0
        %3854 = vmatpush2.msra.mxu0 0.0
        %3855 = vmatprep.subr.mxu0 0.0
        %3856 = vmatpush2.msra.mxu0 0.0
        %3857 = vmatprep.subr.mxu0 0.0
        %3858 = vmatpush2.msra.mxu0 0.0
        %3859 = vmatprep.subr.mxu0 0.0
        %3860 = vmatpush2.msra.mxu0 0.0
        %3861 = vmatprep.subr.mxu0 0.0
        %3862 = vmatpush2.msra.mxu0 0.0
        %3863 = vmatprep.subr.mxu0 0.0
        %3864 = vmatpush2.msra.mxu0 0.0
        %3865 = vmatprep.subr.mxu0 0.0
        %3866 = vmatpush2.msra.mxu0 0.0
        %3867 = vmatprep.subr.mxu0 0.0
        %3868 = vmatpush2.msra.mxu0 0.0
        %3869 = vmatprep.subr.mxu0 0.0
        %3870 = vmatpush2.msra.mxu0 0.0
        %3871 = vmatprep.subr.mxu0 0.0
        %3872 = vmatpush2.msra.mxu0 0.0
        %3873 = vmatprep.subr.mxu0 0.0
        %3874 = vmatpush2.msra.mxu0 0.0
        %3875 = vmatprep.subr.mxu0 0.0
        %3876 = vmatpush2.msra.mxu0 0.0
        %3877 = vmatprep.subr.mxu0 0.0
        %3878 = vmatpush2.msra.mxu0 0.0
        %3879 = vmatprep.mubr.f32.mxu0 0.0
        %3880 = vmatmul.mubr.f32.gmra.mxu0 %v2002
        %v3881 = vpop.f32.mrf.mxu0
        %v3882 = vadd.f32 0.0, %v3881
        %v3883 = vpop.f32.mrf.mxu0
        %3884 = vmatprep.mubr.f32.mxu0 0.0
        %3885 = vmatmul.mubr.f32.gmra.mxu0 %v2004
        %v3886 = vpop.f32.mrf.mxu0
        %v3887 = vadd.f32 0.0, %v3886
        %v3888 = vpop.f32.mrf.mxu0
        %3889 = vmatprep.mubr.f32.mxu0 0.0
        %3890 = vmatmul.mubr.f32.gmra.mxu0 %v2006
        %v3891 = vpop.f32.mrf.mxu0
        %v3892 = vadd.f32 0.0, %v3891
        %v3893 = vpop.f32.mrf.mxu0
        %3894 = vmatprep.mubr.f32.mxu0 0.0
        %3895 = vmatmul.mubr.f32.gmra.mxu0 %v2008
        %v3896 = vpop.f32.mrf.mxu0
        %v3897 = vadd.f32 0.0, %v3896
        %v3898 = vpop.f32.mrf.mxu0
        %3899 = vmatprep.mubr.f32.mxu0 0.0
        %3900 = vmatmul.mubr.f32.gmra.mxu0 %v2010
        %v3901 = vpop.f32.mrf.mxu0
        %v3902 = vadd.f32 0.0, %v3901
        %v3903 = vpop.f32.mrf.mxu0
        %3904 = vmatprep.mubr.f32.mxu0 0.0
        %3905 = vmatmul.mubr.f32.gmra.mxu0 %v2635
        %v3906 = vpop.f32.mrf.mxu0
        %v3907 = vadd.f32 0.0, %v3906
        %v3908 = vpop.f32.mrf.mxu0
        %3909 = vmatprep.mubr.f32.mxu0 0.0
        %3910 = vmatmul.mubr.f32.gmra.mxu0 %v3224
        %v3911 = vpop.f32.mrf.mxu0
        %v3912 = vadd.f32 0.0, %v3911
        %v3913 = vpop.f32.mrf.mxu0
        %3914 = vmatprep.mubr.f32.mxu0 0.0
        %3915 = vmatmul.mubr.f32.gmra.mxu0 %v3813
        %v3916 = vpop.f32.mrf.mxu0
        %v3917 = vadd.f32 0.0, %v3916
        %v3918 = vpop.f32.mrf.mxu0
        %3919 = vdwg.mxu0
        %v3920 = vadd.f32 %v3802, %v3882
        %v3921 = vadd.f32 %v3803, %v3887
        %v3922 = vadd.f32 %v3804, %v3892
        %v3923 = vadd.f32 %v3805, %v3897
        %v3924 = vadd.f32 %v3806, %v3902
        %v3925 = vadd.f32 %v3807, %v3907
        %v3926 = vadd.f32 %v3808, %v3912
        %v3927 = vadd.f32 %v3809, %v3917
        %v3928 = vrot.slane %v1429, 4
        %v3929 = vrot.slane %v1430, 4
        %v3930 = vsel %vm2125, %v3928, %v3929
        %v3931 = vsel %vm1574, %v3930, 0
        %3933 = vmatprep.subr.mxu0 0.0
        %3934 = vmatpush1.msra.mxu0 0.0
        %3935 = vmatprep.subr.mxu0 0.0
        %3936 = vmatpush1.msra.mxu0 0.0
        %3937 = vmatprep.subr.mxu0 0.0
        %3938 = vmatpush1.msra.mxu0 0.0
        %3939 = vmatprep.subr.mxu0 0.0
        %3940 = vmatpush1.msra.mxu0 0.0
        %3941 = vmatprep.subr.mxu0 0.0
        %3942 = vmatpush1.msra.mxu0 0.0
        %3943 = vmatprep.subr.mxu0 0.0
        %3944 = vmatpush1.msra.mxu0 0.0
        %3945 = vmatprep.subr.mxu0 0.0
        %3946 = vmatpush1.msra.mxu0 0.0
        %3947 = vmatprep.subr.mxu0 0.0
        %3948 = vmatpush1.msra.mxu0 0.0
        %3949 = vmatprep.subr.mxu0 0.0
        %3950 = vmatpush1.msra.mxu0 0.0
        %3951 = vmatprep.subr.mxu0 0.0
        %3952 = vmatpush1.msra.mxu0 0.0
        %3953 = vmatprep.subr.mxu0 0.0
        %3954 = vmatpush1.msra.mxu0 0.0
        %3955 = vmatprep.subr.mxu0 0.0
        %3956 = vmatpush1.msra.mxu0 0.0
        %3957 = vmatprep.subr.mxu0 0.0
        %3958 = vmatpush1.msra.mxu0 %v1512
        %3959 = vmatprep.subr.mxu0 0.0
        %3960 = vmatpush1.msra.mxu0 %v1511
        %3961 = vmatprep.subr.mxu0 0.0
        %3962 = vmatpush1.msra.mxu0 %v1510
        %3963 = vmatprep.subr.mxu0 0.0
        %3964 = vmatpush1.msra.mxu0 %v1509
        %3965 = vmatprep.subr.mxu0 0.0
        %3966 = vmatpush2.msra.mxu0 0.0
        %3967 = vmatprep.subr.mxu0 0.0
        %3968 = vmatpush2.msra.mxu0 0.0
        %3969 = vmatprep.subr.mxu0 0.0
        %3970 = vmatpush2.msra.mxu0 0.0
        %3971 = vmatprep.subr.mxu0 0.0
        %3972 = vmatpush2.msra.mxu0 0.0
        %3973 = vmatprep.subr.mxu0 0.0
        %3974 = vmatpush2.msra.mxu0 0.0
        %3975 = vmatprep.subr.mxu0 0.0
        %3976 = vmatpush2.msra.mxu0 0.0
        %3977 = vmatprep.subr.mxu0 0.0
        %3978 = vmatpush2.msra.mxu0 0.0
        %3979 = vmatprep.subr.mxu0 0.0
        %3980 = vmatpush2.msra.mxu0 0.0
        %3981 = vmatprep.subr.mxu0 0.0
        %3982 = vmatpush2.msra.mxu0 0.0
        %3983 = vmatprep.subr.mxu0 0.0
        %3984 = vmatpush2.msra.mxu0 0.0
        %3985 = vmatprep.subr.mxu0 0.0
        %3986 = vmatpush2.msra.mxu0 0.0
        %3987 = vmatprep.subr.mxu0 0.0
        %3988 = vmatpush2.msra.mxu0 0.0
        %3989 = vmatprep.subr.mxu0 0.0
        %3990 = vmatpush2.msra.mxu0 0.0
        %3991 = vmatprep.subr.mxu0 0.0
        %3992 = vmatpush2.msra.mxu0 0.0
        %3993 = vmatprep.subr.mxu0 0.0
        %3994 = vmatpush2.msra.mxu0 0.0
        %3995 = vmatprep.subr.mxu0 0.0
        %3996 = vmatpush2.msra.mxu0 0.0
        %3997 = vmatprep.mubr.f32.mxu0 0.0
        %3998 = vmatmul.mubr.f32.gmra.mxu0 %v2156
        %v3999 = vpop.f32.mrf.mxu0
        %v4000 = vadd.f32 0.0, %v3999
        %v4001 = vpop.f32.mrf.mxu0
        %4002 = vmatprep.mubr.f32.mxu0 0.0
        %4003 = vmatmul.mubr.f32.gmra.mxu0 %v2158
        %v4004 = vpop.f32.mrf.mxu0
        %v4005 = vadd.f32 0.0, %v4004
        %v4006 = vpop.f32.mrf.mxu0
        %4007 = vmatprep.mubr.f32.mxu0 0.0
        %4008 = vmatmul.mubr.f32.gmra.mxu0 %v2160
        %v4009 = vpop.f32.mrf.mxu0
        %v4010 = vadd.f32 0.0, %v4009
        %v4011 = vpop.f32.mrf.mxu0
        %4012 = vmatprep.mubr.f32.mxu0 0.0
        %4013 = vmatmul.mubr.f32.gmra.mxu0 %v2162
        %v4014 = vpop.f32.mrf.mxu0
        %v4015 = vadd.f32 0.0, %v4014
        %v4016 = vpop.f32.mrf.mxu0
        %4017 = vmatprep.mubr.f32.mxu0 0.0
        %4018 = vmatmul.mubr.f32.gmra.mxu0 %v2164
        %v4019 = vpop.f32.mrf.mxu0
        %v4020 = vadd.f32 0.0, %v4019
        %v4021 = vpop.f32.mrf.mxu0
        %4022 = vmatprep.mubr.f32.mxu0 0.0
        %4023 = vmatmul.mubr.f32.gmra.mxu0 %v2753
        %v4024 = vpop.f32.mrf.mxu0
        %v4025 = vadd.f32 0.0, %v4024
        %v4026 = vpop.f32.mrf.mxu0
        %4027 = vmatprep.mubr.f32.mxu0 0.0
        %4028 = vmatmul.mubr.f32.gmra.mxu0 %v3342
        %v4029 = vpop.f32.mrf.mxu0
        %v4030 = vadd.f32 0.0, %v4029
        %v4031 = vpop.f32.mrf.mxu0
        %4032 = vmatprep.mubr.f32.mxu0 0.0
        %4033 = vmatmul.mubr.f32.gmra.mxu0 %v3931
        %v4034 = vpop.f32.mrf.mxu0
        %v4035 = vadd.f32 0.0, %v4034
        %v4036 = vpop.f32.mrf.mxu0
        %4037 = vdwg.mxu0
        %v4038 = vadd.f32 %v3920, %v4000
        %v4039 = vadd.f32 %v3921, %v4005
        %v4040 = vadd.f32 %v3922, %v4010
        %v4041 = vadd.f32 %v3923, %v4015
        %v4042 = vadd.f32 %v3924, %v4020
        %v4043 = vadd.f32 %v3925, %v4025
        %v4044 = vadd.f32 %v3926, %v4030
        %v4045 = vadd.f32 %v3927, %v4035
        %v4047 = vsel %vm1574, %v1431, 0
        %4049 = vmatprep.subr.mxu0 0.0
        %4050 = vmatpush1.msra.mxu0 0.0
        %4051 = vmatprep.subr.mxu0 0.0
        %4052 = vmatpush1.msra.mxu0 0.0
        %4053 = vmatprep.subr.mxu0 0.0
        %4054 = vmatpush1.msra.mxu0 0.0
        %4055 = vmatprep.subr.mxu0 0.0
        %4056 = vmatpush1.msra.mxu0 0.0
        %4057 = vmatprep.subr.mxu0 0.0
        %4058 = vmatpush1.msra.mxu0 0.0
        %4059 = vmatprep.subr.mxu0 0.0
        %4060 = vmatpush1.msra.mxu0 0.0
        %4061 = vmatprep.subr.mxu0 0.0
        %4062 = vmatpush1.msra.mxu0 0.0
        %4063 = vmatprep.subr.mxu0 0.0
        %4064 = vmatpush1.msra.mxu0 0.0
        %4065 = vmatprep.subr.mxu0 0.0
        %4066 = vmatpush1.msra.mxu0 0.0
        %4067 = vmatprep.subr.mxu0 0.0
        %4068 = vmatpush1.msra.mxu0 0.0
        %4069 = vmatprep.subr.mxu0 0.0
        %4070 = vmatpush1.msra.mxu0 0.0
        %4071 = vmatprep.subr.mxu0 0.0
        %4072 = vmatpush1.msra.mxu0 0.0
        %4073 = vmatprep.subr.mxu0 0.0
        %4074 = vmatpush1.msra.mxu0 %v1516
        %4075 = vmatprep.subr.mxu0 0.0
        %4076 = vmatpush1.msra.mxu0 %v1515
        %4077 = vmatprep.subr.mxu0 0.0
        %4078 = vmatpush1.msra.mxu0 %v1514
        %4079 = vmatprep.subr.mxu0 0.0
        %4080 = vmatpush1.msra.mxu0 %v1513
        %4081 = vmatprep.subr.mxu0 0.0
        %4082 = vmatpush2.msra.mxu0 0.0
        %4083 = vmatprep.subr.mxu0 0.0
        %4084 = vmatpush2.msra.mxu0 0.0
        %4085 = vmatprep.subr.mxu0 0.0
        %4086 = vmatpush2.msra.mxu0 0.0
        %4087 = vmatprep.subr.mxu0 0.0
        %4088 = vmatpush2.msra.mxu0 0.0
        %4089 = vmatprep.subr.mxu0 0.0
        %4090 = vmatpush2.msra.mxu0 0.0
        %4091 = vmatprep.subr.mxu0 0.0
        %4092 = vmatpush2.msra.mxu0 0.0
        %4093 = vmatprep.subr.mxu0 0.0
        %4094 = vmatpush2.msra.mxu0 0.0
        %4095 = vmatprep.subr.mxu0 0.0
        %4096 = vmatpush2.msra.mxu0 0.0
        %4097 = vmatprep.subr.mxu0 0.0
        %4098 = vmatpush2.msra.mxu0 0.0
        %4099 = vmatprep.subr.mxu0 0.0
        %4100 = vmatpush2.msra.mxu0 0.0
        %4101 = vmatprep.subr.mxu0 0.0
        %4102 = vmatpush2.msra.mxu0 0.0
        %4103 = vmatprep.subr.mxu0 0.0
        %4104 = vmatpush2.msra.mxu0 0.0
        %4105 = vmatprep.subr.mxu0 0.0
        %4106 = vmatpush2.msra.mxu0 0.0
        %4107 = vmatprep.subr.mxu0 0.0
        %4108 = vmatpush2.msra.mxu0 0.0
        %4109 = vmatprep.subr.mxu0 0.0
        %4110 = vmatpush2.msra.mxu0 0.0
        %4111 = vmatprep.subr.mxu0 0.0
        %4112 = vmatpush2.msra.mxu0 0.0
        %4113 = vmatprep.mubr.f32.mxu0 0.0
        %4114 = vmatmul.mubr.f32.gmra.mxu0 %v1704
        %v4115 = vpop.f32.mrf.mxu0
        %v4116 = vadd.f32 0.0, %v4115
        %v4117 = vpop.f32.mrf.mxu0
        %4118 = vmatprep.mubr.f32.mxu0 0.0
        %4119 = vmatmul.mubr.f32.gmra.mxu0 %v1706
        %v4120 = vpop.f32.mrf.mxu0
        %v4121 = vadd.f32 0.0, %v4120
        %v4122 = vpop.f32.mrf.mxu0
        %4123 = vmatprep.mubr.f32.mxu0 0.0
        %4124 = vmatmul.mubr.f32.gmra.mxu0 %v1708
        %v4125 = vpop.f32.mrf.mxu0
        %v4126 = vadd.f32 0.0, %v4125
        %v4127 = vpop.f32.mrf.mxu0
        %4128 = vmatprep.mubr.f32.mxu0 0.0
        %4129 = vmatmul.mubr.f32.gmra.mxu0 %v1710
        %v4130 = vpop.f32.mrf.mxu0
        %v4131 = vadd.f32 0.0, %v4130
        %v4132 = vpop.f32.mrf.mxu0
        %4133 = vmatprep.mubr.f32.mxu0 0.0
        %4134 = vmatmul.mubr.f32.gmra.mxu0 %v2280
        %v4135 = vpop.f32.mrf.mxu0
        %v4136 = vadd.f32 0.0, %v4135
        %v4137 = vpop.f32.mrf.mxu0
        %4138 = vmatprep.mubr.f32.mxu0 0.0
        %4139 = vmatmul.mubr.f32.gmra.mxu0 %v2869
        %v4140 = vpop.f32.mrf.mxu0
        %v4141 = vadd.f32 0.0, %v4140
        %v4142 = vpop.f32.mrf.mxu0
        %4143 = vmatprep.mubr.f32.mxu0 0.0
        %4144 = vmatmul.mubr.f32.gmra.mxu0 %v3458
        %v4145 = vpop.f32.mrf.mxu0
        %v4146 = vadd.f32 0.0, %v4145
        %v4147 = vpop.f32.mrf.mxu0
        %4148 = vmatprep.mubr.f32.mxu0 0.0
        %4149 = vmatmul.mubr.f32.gmra.mxu0 %v4047
        %v4150 = vpop.f32.mrf.mxu0
        %v4151 = vadd.f32 0.0, %v4150
        %v4152 = vpop.f32.mrf.mxu0
        %4153 = vdwg.mxu0
        %v4154 = vadd.f32 %v4038, %v4116
        %v4155 = vadd.f32 %v4039, %v4121
        %v4156 = vadd.f32 %v4040, %v4126
        %v4157 = vadd.f32 %v4041, %v4131
        %v4158 = vadd.f32 %v4042, %v4136
        %v4159 = vadd.f32 %v4043, %v4141
        %v4160 = vadd.f32 %v4044, %v4146
        %v4161 = vadd.f32 %v4045, %v4151
        %v4163 = vrot.slane %v1431, 1
        %v4164 = vrot.slane %v1432, 1
        %v4165 = vsel %vm1549, %v4163, %v4164
        %v4166 = vsel %vm1574, %v4165, 0
        %4168 = vmatprep.subr.mxu0 0.0
        %4169 = vmatpush1.msra.mxu0 0.0
        %4170 = vmatprep.subr.mxu0 0.0
        %4171 = vmatpush1.msra.mxu0 0.0
        %4172 = vmatprep.subr.mxu0 0.0
        %4173 = vmatpush1.msra.mxu0 0.0
        %4174 = vmatprep.subr.mxu0 0.0
        %4175 = vmatpush1.msra.mxu0 0.0
        %4176 = vmatprep.subr.mxu0 0.0
        %4177 = vmatpush1.msra.mxu0 0.0
        %4178 = vmatprep.subr.mxu0 0.0
        %4179 = vmatpush1.msra.mxu0 0.0
        %4180 = vmatprep.subr.mxu0 0.0
        %4181 = vmatpush1.msra.mxu0 0.0
        %4182 = vmatprep.subr.mxu0 0.0
        %4183 = vmatpush1.msra.mxu0 0.0
        %4184 = vmatprep.subr.mxu0 0.0
        %4185 = vmatpush1.msra.mxu0 0.0
        %4186 = vmatprep.subr.mxu0 0.0
        %4187 = vmatpush1.msra.mxu0 0.0
        %4188 = vmatprep.subr.mxu0 0.0
        %4189 = vmatpush1.msra.mxu0 0.0
        %4190 = vmatprep.subr.mxu0 0.0
        %4191 = vmatpush1.msra.mxu0 0.0
        %4192 = vmatprep.subr.mxu0 0.0
        %4193 = vmatpush1.msra.mxu0 %v1520
        %4194 = vmatprep.subr.mxu0 0.0
        %4195 = vmatpush1.msra.mxu0 %v1519
        %4196 = vmatprep.subr.mxu0 0.0
        %4197 = vmatpush1.msra.mxu0 %v1518
        %4198 = vmatprep.subr.mxu0 0.0
        %4199 = vmatpush1.msra.mxu0 %v1517
        %4200 = vmatprep.subr.mxu0 0.0
        %4201 = vmatpush2.msra.mxu0 0.0
        %4202 = vmatprep.subr.mxu0 0.0
        %4203 = vmatpush2.msra.mxu0 0.0
        %4204 = vmatprep.subr.mxu0 0.0
        %4205 = vmatpush2.msra.mxu0 0.0
        %4206 = vmatprep.subr.mxu0 0.0
        %4207 = vmatpush2.msra.mxu0 0.0
        %4208 = vmatprep.subr.mxu0 0.0
        %4209 = vmatpush2.msra.mxu0 0.0
        %4210 = vmatprep.subr.mxu0 0.0
        %4211 = vmatpush2.msra.mxu0 0.0
        %4212 = vmatprep.subr.mxu0 0.0
        %4213 = vmatpush2.msra.mxu0 0.0
        %4214 = vmatprep.subr.mxu0 0.0
        %4215 = vmatpush2.msra.mxu0 0.0
        %4216 = vmatprep.subr.mxu0 0.0
        %4217 = vmatpush2.msra.mxu0 0.0
        %4218 = vmatprep.subr.mxu0 0.0
        %4219 = vmatpush2.msra.mxu0 0.0
        %4220 = vmatprep.subr.mxu0 0.0
        %4221 = vmatpush2.msra.mxu0 0.0
        %4222 = vmatprep.subr.mxu0 0.0
        %4223 = vmatpush2.msra.mxu0 0.0
        %4224 = vmatprep.subr.mxu0 0.0
        %4225 = vmatpush2.msra.mxu0 0.0
        %4226 = vmatprep.subr.mxu0 0.0
        %4227 = vmatpush2.msra.mxu0 0.0
        %4228 = vmatprep.subr.mxu0 0.0
        %4229 = vmatpush2.msra.mxu0 0.0
        %4230 = vmatprep.subr.mxu0 0.0
        %4231 = vmatpush2.msra.mxu0 0.0
        %4232 = vmatprep.mubr.f32.mxu0 0.0
        %4233 = vmatmul.mubr.f32.gmra.mxu0 %v1583
        %v4234 = vpop.f32.mrf.mxu0
        %v4235 = vadd.f32 0.0, %v4234
        %v4236 = vpop.f32.mrf.mxu0
        %4237 = vmatprep.mubr.f32.mxu0 0.0
        %4238 = vmatmul.mubr.f32.gmra.mxu0 %v1585
        %v4239 = vpop.f32.mrf.mxu0
        %v4240 = vadd.f32 0.0, %v4239
        %v4241 = vpop.f32.mrf.mxu0
        %4242 = vmatprep.mubr.f32.mxu0 0.0
        %4243 = vmatmul.mubr.f32.gmra.mxu0 %v1587
        %v4244 = vpop.f32.mrf.mxu0
        %v4245 = vadd.f32 0.0, %v4244
        %v4246 = vpop.f32.mrf.mxu0
        %4247 = vmatprep.mubr.f32.mxu0 0.0
        %4248 = vmatmul.mubr.f32.gmra.mxu0 %v1589
        %v4249 = vpop.f32.mrf.mxu0
        %v4250 = vadd.f32 0.0, %v4249
        %v4251 = vpop.f32.mrf.mxu0
        %4252 = vmatprep.mubr.f32.mxu0 0.0
        %4253 = vmatmul.mubr.f32.gmra.mxu0 %v2399
        %v4254 = vpop.f32.mrf.mxu0
        %v4255 = vadd.f32 0.0, %v4254
        %v4256 = vpop.f32.mrf.mxu0
        %4257 = vmatprep.mubr.f32.mxu0 0.0
        %4258 = vmatmul.mubr.f32.gmra.mxu0 %v2988
        %v4259 = vpop.f32.mrf.mxu0
        %v4260 = vadd.f32 0.0, %v4259
        %v4261 = vpop.f32.mrf.mxu0
        %4262 = vmatprep.mubr.f32.mxu0 0.0
        %4263 = vmatmul.mubr.f32.gmra.mxu0 %v3577
        %v4264 = vpop.f32.mrf.mxu0
        %v4265 = vadd.f32 0.0, %v4264
        %v4266 = vpop.f32.mrf.mxu0
        %4267 = vmatprep.mubr.f32.mxu0 0.0
        %4268 = vmatmul.mubr.f32.gmra.mxu0 %v4166
        %v4269 = vpop.f32.mrf.mxu0
        %v4270 = vadd.f32 0.0, %v4269
        %v4271 = vpop.f32.mrf.mxu0
        %4272 = vdwg.mxu0
        %v4273 = vadd.f32 %v4154, %v4235
        %v4274 = vadd.f32 %v4155, %v4240
        %v4275 = vadd.f32 %v4156, %v4245
        %v4276 = vadd.f32 %v4157, %v4250
        %v4277 = vadd.f32 %v4158, %v4255
        %v4278 = vadd.f32 %v4159, %v4260
        %v4279 = vadd.f32 %v4160, %v4265
        %v4280 = vadd.f32 %v4161, %v4270
        %v4281 = vrot.slane %v1431, 2
        %v4282 = vrot.slane %v1432, 2
        %v4283 = vsel %vm1817, %v4281, %v4282
        %v4284 = vsel %vm1574, %v4283, 0
        %4286 = vmatprep.subr.mxu0 0.0
        %4287 = vmatpush1.msra.mxu0 0.0
        %4288 = vmatprep.subr.mxu0 0.0
        %4289 = vmatpush1.msra.mxu0 0.0
        %4290 = vmatprep.subr.mxu0 0.0
        %4291 = vmatpush1.msra.mxu0 0.0
        %4292 = vmatprep.subr.mxu0 0.0
        %4293 = vmatpush1.msra.mxu0 0.0
        %4294 = vmatprep.subr.mxu0 0.0
        %4295 = vmatpush1.msra.mxu0 0.0
        %4296 = vmatprep.subr.mxu0 0.0
        %4297 = vmatpush1.msra.mxu0 0.0
        %4298 = vmatprep.subr.mxu0 0.0
        %4299 = vmatpush1.msra.mxu0 0.0
        %4300 = vmatprep.subr.mxu0 0.0
        %4301 = vmatpush1.msra.mxu0 0.0
        %4302 = vmatprep.subr.mxu0 0.0
        %4303 = vmatpush1.msra.mxu0 0.0
        %4304 = vmatprep.subr.mxu0 0.0
        %4305 = vmatpush1.msra.mxu0 0.0
        %4306 = vmatprep.subr.mxu0 0.0
        %4307 = vmatpush1.msra.mxu0 0.0
        %4308 = vmatprep.subr.mxu0 0.0
        %4309 = vmatpush1.msra.mxu0 0.0
        %4310 = vmatprep.subr.mxu0 0.0
        %4311 = vmatpush1.msra.mxu0 %v1524
        %4312 = vmatprep.subr.mxu0 0.0
        %4313 = vmatpush1.msra.mxu0 %v1523
        %4314 = vmatprep.subr.mxu0 0.0
        %4315 = vmatpush1.msra.mxu0 %v1522
        %4316 = vmatprep.subr.mxu0 0.0
        %4317 = vmatpush1.msra.mxu0 %v1521
        %4318 = vmatprep.subr.mxu0 0.0
        %4319 = vmatpush2.msra.mxu0 0.0
        %4320 = vmatprep.subr.mxu0 0.0
        %4321 = vmatpush2.msra.mxu0 0.0
        %4322 = vmatprep.subr.mxu0 0.0
        %4323 = vmatpush2.msra.mxu0 0.0
        %4324 = vmatprep.subr.mxu0 0.0
        %4325 = vmatpush2.msra.mxu0 0.0
        %4326 = vmatprep.subr.mxu0 0.0
        %4327 = vmatpush2.msra.mxu0 0.0
        %4328 = vmatprep.subr.mxu0 0.0
        %4329 = vmatpush2.msra.mxu0 0.0
        %4330 = vmatprep.subr.mxu0 0.0
        %4331 = vmatpush2.msra.mxu0 0.0
        %4332 = vmatprep.subr.mxu0 0.0
        %4333 = vmatpush2.msra.mxu0 0.0
        %4334 = vmatprep.subr.mxu0 0.0
        %4335 = vmatpush2.msra.mxu0 0.0
        %4336 = vmatprep.subr.mxu0 0.0
        %4337 = vmatpush2.msra.mxu0 0.0
        %4338 = vmatprep.subr.mxu0 0.0
        %4339 = vmatpush2.msra.mxu0 0.0
        %4340 = vmatprep.subr.mxu0 0.0
        %4341 = vmatpush2.msra.mxu0 0.0
        %4342 = vmatprep.subr.mxu0 0.0
        %4343 = vmatpush2.msra.mxu0 0.0
        %4344 = vmatprep.subr.mxu0 0.0
        %4345 = vmatpush2.msra.mxu0 0.0
        %4346 = vmatprep.subr.mxu0 0.0
        %4347 = vmatpush2.msra.mxu0 0.0
        %4348 = vmatprep.subr.mxu0 0.0
        %4349 = vmatpush2.msra.mxu0 0.0
        %4350 = vmatprep.mubr.f32.mxu0 0.0
        %4351 = vmatmul.mubr.f32.gmra.mxu0 %v1850
        %v4352 = vpop.f32.mrf.mxu0
        %v4353 = vadd.f32 0.0, %v4352
        %v4354 = vpop.f32.mrf.mxu0
        %4355 = vmatprep.mubr.f32.mxu0 0.0
        %4356 = vmatmul.mubr.f32.gmra.mxu0 %v1852
        %v4357 = vpop.f32.mrf.mxu0
        %v4358 = vadd.f32 0.0, %v4357
        %v4359 = vpop.f32.mrf.mxu0
        %4360 = vmatprep.mubr.f32.mxu0 0.0
        %4361 = vmatmul.mubr.f32.gmra.mxu0 %v1854
        %v4362 = vpop.f32.mrf.mxu0
        %v4363 = vadd.f32 0.0, %v4362
        %v4364 = vpop.f32.mrf.mxu0
        %4365 = vmatprep.mubr.f32.mxu0 0.0
        %4366 = vmatmul.mubr.f32.gmra.mxu0 %v1856
        %v4367 = vpop.f32.mrf.mxu0
        %v4368 = vadd.f32 0.0, %v4367
        %v4369 = vpop.f32.mrf.mxu0
        %4370 = vmatprep.mubr.f32.mxu0 0.0
        %4371 = vmatmul.mubr.f32.gmra.mxu0 %v2517
        %v4372 = vpop.f32.mrf.mxu0
        %v4373 = vadd.f32 0.0, %v4372
        %v4374 = vpop.f32.mrf.mxu0
        %4375 = vmatprep.mubr.f32.mxu0 0.0
        %4376 = vmatmul.mubr.f32.gmra.mxu0 %v3106
        %v4377 = vpop.f32.mrf.mxu0
        %v4378 = vadd.f32 0.0, %v4377
        %v4379 = vpop.f32.mrf.mxu0
        %4380 = vmatprep.mubr.f32.mxu0 0.0
        %4381 = vmatmul.mubr.f32.gmra.mxu0 %v3695
        %v4382 = vpop.f32.mrf.mxu0
        %v4383 = vadd.f32 0.0, %v4382
        %v4384 = vpop.f32.mrf.mxu0
        %4385 = vmatprep.mubr.f32.mxu0 0.0
        %4386 = vmatmul.mubr.f32.gmra.mxu0 %v4284
        %v4387 = vpop.f32.mrf.mxu0
        %v4388 = vadd.f32 0.0, %v4387
        %v4389 = vpop.f32.mrf.mxu0
        %4390 = vdwg.mxu0
        %v4391 = vadd.f32 %v4273, %v4353
        %v4392 = vadd.f32 %v4274, %v4358
        %v4393 = vadd.f32 %v4275, %v4363
        %v4394 = vadd.f32 %v4276, %v4368
        %v4395 = vadd.f32 %v4277, %v4373
        %v4396 = vadd.f32 %v4278, %v4378
        %v4397 = vadd.f32 %v4279, %v4383
        %v4398 = vadd.f32 %v4280, %v4388
        %v4399 = vrot.slane %v1431, 3
        %v4400 = vrot.slane %v1432, 3
        %v4401 = vsel %vm1971, %v4399, %v4400
        %v4402 = vsel %vm1574, %v4401, 0
        %4404 = vmatprep.subr.mxu0 0.0
        %4405 = vmatpush1.msra.mxu0 0.0
        %4406 = vmatprep.subr.mxu0 0.0
        %4407 = vmatpush1.msra.mxu0 0.0
        %4408 = vmatprep.subr.mxu0 0.0
        %4409 = vmatpush1.msra.mxu0 0.0
        %4410 = vmatprep.subr.mxu0 0.0
        %4411 = vmatpush1.msra.mxu0 0.0
        %4412 = vmatprep.subr.mxu0 0.0
        %4413 = vmatpush1.msra.mxu0 0.0
        %4414 = vmatprep.subr.mxu0 0.0
        %4415 = vmatpush1.msra.mxu0 0.0
        %4416 = vmatprep.subr.mxu0 0.0
        %4417 = vmatpush1.msra.mxu0 0.0
        %4418 = vmatprep.subr.mxu0 0.0
        %4419 = vmatpush1.msra.mxu0 0.0
        %4420 = vmatprep.subr.mxu0 0.0
        %4421 = vmatpush1.msra.mxu0 0.0
        %4422 = vmatprep.subr.mxu0 0.0
        %4423 = vmatpush1.msra.mxu0 0.0
        %4424 = vmatprep.subr.mxu0 0.0
        %4425 = vmatpush1.msra.mxu0 0.0
        %4426 = vmatprep.subr.mxu0 0.0
        %4427 = vmatpush1.msra.mxu0 0.0
        %4428 = vmatprep.subr.mxu0 0.0
        %4429 = vmatpush1.msra.mxu0 %v1528
        %4430 = vmatprep.subr.mxu0 0.0
        %4431 = vmatpush1.msra.mxu0 %v1527
        %4432 = vmatprep.subr.mxu0 0.0
        %4433 = vmatpush1.msra.mxu0 %v1526
        %4434 = vmatprep.subr.mxu0 0.0
        %4435 = vmatpush1.msra.mxu0 %v1525
        %4436 = vmatprep.subr.mxu0 0.0
        %4437 = vmatpush2.msra.mxu0 0.0
        %4438 = vmatprep.subr.mxu0 0.0
        %4439 = vmatpush2.msra.mxu0 0.0
        %4440 = vmatprep.subr.mxu0 0.0
        %4441 = vmatpush2.msra.mxu0 0.0
        %4442 = vmatprep.subr.mxu0 0.0
        %4443 = vmatpush2.msra.mxu0 0.0
        %4444 = vmatprep.subr.mxu0 0.0
        %4445 = vmatpush2.msra.mxu0 0.0
        %4446 = vmatprep.subr.mxu0 0.0
        %4447 = vmatpush2.msra.mxu0 0.0
        %4448 = vmatprep.subr.mxu0 0.0
        %4449 = vmatpush2.msra.mxu0 0.0
        %4450 = vmatprep.subr.mxu0 0.0
        %4451 = vmatpush2.msra.mxu0 0.0
        %4452 = vmatprep.subr.mxu0 0.0
        %4453 = vmatpush2.msra.mxu0 0.0
        %4454 = vmatprep.subr.mxu0 0.0
        %4455 = vmatpush2.msra.mxu0 0.0
        %4456 = vmatprep.subr.mxu0 0.0
        %4457 = vmatpush2.msra.mxu0 0.0
        %4458 = vmatprep.subr.mxu0 0.0
        %4459 = vmatpush2.msra.mxu0 0.0
        %4460 = vmatprep.subr.mxu0 0.0
        %4461 = vmatpush2.msra.mxu0 0.0
        %4462 = vmatprep.subr.mxu0 0.0
        %4463 = vmatpush2.msra.mxu0 0.0
        %4464 = vmatprep.subr.mxu0 0.0
        %4465 = vmatpush2.msra.mxu0 0.0
        %4466 = vmatprep.subr.mxu0 0.0
        %4467 = vmatpush2.msra.mxu0 0.0
        %4468 = vmatprep.mubr.f32.mxu0 0.0
        %4469 = vmatmul.mubr.f32.gmra.mxu0 %v2004
        %v4470 = vpop.f32.mrf.mxu0
        %v4471 = vadd.f32 0.0, %v4470
        %v4472 = vpop.f32.mrf.mxu0
        %4473 = vmatprep.mubr.f32.mxu0 0.0
        %4474 = vmatmul.mubr.f32.gmra.mxu0 %v2006
        %v4475 = vpop.f32.mrf.mxu0
        %v4476 = vadd.f32 0.0, %v4475
        %v4477 = vpop.f32.mrf.mxu0
        %4478 = vmatprep.mubr.f32.mxu0 0.0
        %4479 = vmatmul.mubr.f32.gmra.mxu0 %v2008
        %v4480 = vpop.f32.mrf.mxu0
        %v4481 = vadd.f32 0.0, %v4480
        %v4482 = vpop.f32.mrf.mxu0
        %4483 = vmatprep.mubr.f32.mxu0 0.0
        %4484 = vmatmul.mubr.f32.gmra.mxu0 %v2010
        %v4485 = vpop.f32.mrf.mxu0
        %v4486 = vadd.f32 0.0, %v4485
        %v4487 = vpop.f32.mrf.mxu0
        %4488 = vmatprep.mubr.f32.mxu0 0.0
        %4489 = vmatmul.mubr.f32.gmra.mxu0 %v2635
        %v4490 = vpop.f32.mrf.mxu0
        %v4491 = vadd.f32 0.0, %v4490
        %v4492 = vpop.f32.mrf.mxu0
        %4493 = vmatprep.mubr.f32.mxu0 0.0
        %4494 = vmatmul.mubr.f32.gmra.mxu0 %v3224
        %v4495 = vpop.f32.mrf.mxu0
        %v4496 = vadd.f32 0.0, %v4495
        %v4497 = vpop.f32.mrf.mxu0
        %4498 = vmatprep.mubr.f32.mxu0 0.0
        %4499 = vmatmul.mubr.f32.gmra.mxu0 %v3813
        %v4500 = vpop.f32.mrf.mxu0
        %v4501 = vadd.f32 0.0, %v4500
        %v4502 = vpop.f32.mrf.mxu0
        %4503 = vmatprep.mubr.f32.mxu0 0.0
        %4504 = vmatmul.mubr.f32.gmra.mxu0 %v4402
        %v4505 = vpop.f32.mrf.mxu0
        %v4506 = vadd.f32 0.0, %v4505
        %v4507 = vpop.f32.mrf.mxu0
        %4508 = vdwg.mxu0
        %v4509 = vadd.f32 %v4391, %v4471
        %v4510 = vadd.f32 %v4392, %v4476
        %v4511 = vadd.f32 %v4393, %v4481
        %v4512 = vadd.f32 %v4394, %v4486
        %v4513 = vadd.f32 %v4395, %v4491
        %v4514 = vadd.f32 %v4396, %v4496
        %v4515 = vadd.f32 %v4397, %v4501
        %v4516 = vadd.f32 %v4398, %v4506
        %v4517 = vrot.slane %v1431, 4
        %v4518 = vrot.slane %v1432, 4
        %v4519 = vsel %vm2125, %v4517, %v4518
        %v4520 = vsel %vm1574, %v4519, 0
        %4522 = vmatprep.subr.mxu0 0.0
        %4523 = vmatpush1.msra.mxu0 0.0
        %4524 = vmatprep.subr.mxu0 0.0
        %4525 = vmatpush1.msra.mxu0 0.0
        %4526 = vmatprep.subr.mxu0 0.0
        %4527 = vmatpush1.msra.mxu0 0.0
        %4528 = vmatprep.subr.mxu0 0.0
        %4529 = vmatpush1.msra.mxu0 0.0
        %4530 = vmatprep.subr.mxu0 0.0
        %4531 = vmatpush1.msra.mxu0 0.0
        %4532 = vmatprep.subr.mxu0 0.0
        %4533 = vmatpush1.msra.mxu0 0.0
        %4534 = vmatprep.subr.mxu0 0.0
        %4535 = vmatpush1.msra.mxu0 0.0
        %4536 = vmatprep.subr.mxu0 0.0
        %4537 = vmatpush1.msra.mxu0 0.0
        %4538 = vmatprep.subr.mxu0 0.0
        %4539 = vmatpush1.msra.mxu0 0.0
        %4540 = vmatprep.subr.mxu0 0.0
        %4541 = vmatpush1.msra.mxu0 0.0
        %4542 = vmatprep.subr.mxu0 0.0
        %4543 = vmatpush1.msra.mxu0 0.0
        %4544 = vmatprep.subr.mxu0 0.0
        %4545 = vmatpush1.msra.mxu0 0.0
        %4546 = vmatprep.subr.mxu0 0.0
        %4547 = vmatpush1.msra.mxu0 %v1532
        %4548 = vmatprep.subr.mxu0 0.0
        %4549 = vmatpush1.msra.mxu0 %v1531
        %4550 = vmatprep.subr.mxu0 0.0
        %4551 = vmatpush1.msra.mxu0 %v1530
        %4552 = vmatprep.subr.mxu0 0.0
        %4553 = vmatpush1.msra.mxu0 %v1529
        %4554 = vmatprep.subr.mxu0 0.0
        %4555 = vmatpush2.msra.mxu0 0.0
        %4556 = vmatprep.subr.mxu0 0.0
        %4557 = vmatpush2.msra.mxu0 0.0
        %4558 = vmatprep.subr.mxu0 0.0
        %4559 = vmatpush2.msra.mxu0 0.0
        %4560 = vmatprep.subr.mxu0 0.0
        %4561 = vmatpush2.msra.mxu0 0.0
        %4562 = vmatprep.subr.mxu0 0.0
        %4563 = vmatpush2.msra.mxu0 0.0
        %4564 = vmatprep.subr.mxu0 0.0
        %4565 = vmatpush2.msra.mxu0 0.0
        %4566 = vmatprep.subr.mxu0 0.0
        %4567 = vmatpush2.msra.mxu0 0.0
        %4568 = vmatprep.subr.mxu0 0.0
        %4569 = vmatpush2.msra.mxu0 0.0
        %4570 = vmatprep.subr.mxu0 0.0
        %4571 = vmatpush2.msra.mxu0 0.0
        %4572 = vmatprep.subr.mxu0 0.0
        %4573 = vmatpush2.msra.mxu0 0.0
        %4574 = vmatprep.subr.mxu0 0.0
        %4575 = vmatpush2.msra.mxu0 0.0
        %4576 = vmatprep.subr.mxu0 0.0
        %4577 = vmatpush2.msra.mxu0 0.0
        %4578 = vmatprep.subr.mxu0 0.0
        %4579 = vmatpush2.msra.mxu0 0.0
        %4580 = vmatprep.subr.mxu0 0.0
        %4581 = vmatpush2.msra.mxu0 0.0
        %4582 = vmatprep.subr.mxu0 0.0
        %4583 = vmatpush2.msra.mxu0 0.0
        %4584 = vmatprep.subr.mxu0 0.0
        %4585 = vmatpush2.msra.mxu0 0.0
        %4586 = vmatprep.mubr.f32.mxu0 0.0
        %4587 = vmatmul.mubr.f32.gmra.mxu0 %v2158
        %v4588 = vpop.f32.mrf.mxu0
        %v4589 = vadd.f32 0.0, %v4588
        %v4590 = vpop.f32.mrf.mxu0
        %4591 = vmatprep.mubr.f32.mxu0 0.0
        %4592 = vmatmul.mubr.f32.gmra.mxu0 %v2160
        %v4593 = vpop.f32.mrf.mxu0
        %v4594 = vadd.f32 0.0, %v4593
        %v4595 = vpop.f32.mrf.mxu0
        %4596 = vmatprep.mubr.f32.mxu0 0.0
        %4597 = vmatmul.mubr.f32.gmra.mxu0 %v2162
        %v4598 = vpop.f32.mrf.mxu0
        %v4599 = vadd.f32 0.0, %v4598
        %v4600 = vpop.f32.mrf.mxu0
        %4601 = vmatprep.mubr.f32.mxu0 0.0
        %4602 = vmatmul.mubr.f32.gmra.mxu0 %v2164
        %v4603 = vpop.f32.mrf.mxu0
        %v4604 = vadd.f32 0.0, %v4603
        %v4605 = vpop.f32.mrf.mxu0
        %4606 = vmatprep.mubr.f32.mxu0 0.0
        %4607 = vmatmul.mubr.f32.gmra.mxu0 %v2753
        %v4608 = vpop.f32.mrf.mxu0
        %v4609 = vadd.f32 0.0, %v4608
        %v4610 = vpop.f32.mrf.mxu0
        %4611 = vmatprep.mubr.f32.mxu0 0.0
        %4612 = vmatmul.mubr.f32.gmra.mxu0 %v3342
        %v4613 = vpop.f32.mrf.mxu0
        %v4614 = vadd.f32 0.0, %v4613
        %v4615 = vpop.f32.mrf.mxu0
        %4616 = vmatprep.mubr.f32.mxu0 0.0
        %4617 = vmatmul.mubr.f32.gmra.mxu0 %v3931
        %v4618 = vpop.f32.mrf.mxu0
        %v4619 = vadd.f32 0.0, %v4618
        %v4620 = vpop.f32.mrf.mxu0
        %4621 = vmatprep.mubr.f32.mxu0 0.0
        %4622 = vmatmul.mubr.f32.gmra.mxu0 %v4520
        %v4623 = vpop.f32.mrf.mxu0
        %v4624 = vadd.f32 0.0, %v4623
        %v4625 = vpop.f32.mrf.mxu0
        %4626 = vdwg.mxu0
        %v4627 = vadd.f32 %v4509, %v4589
        %v4628 = vadd.f32 %v4510, %v4594
        %v4629 = vadd.f32 %v4511, %v4599
        %v4630 = vadd.f32 %v4512, %v4604
        %v4631 = vadd.f32 %v4513, %v4609
        %v4632 = vadd.f32 %v4514, %v4614
        %v4633 = vadd.f32 %v4515, %v4619
        %v4634 = vadd.f32 %v4516, %v4624
        %vm4635 = vcmask 523264
        %v4636 = vsel %vm4635, %v4627, -inf
        %v4637 = vsel %vm4635, %v4628, -inf
        %v4638 = vsel %vm4635, %v4629, -inf
        %v4639 = vsel %vm4635, %v4630, -inf
        %v4640 = vsel %vm4635, %v4631, -inf
        %v4641 = vmax.f32 %v4636, %v4640
        %v4642 = vsel %vm4635, %v4632, -inf
        %v4643 = vmax.f32 %v4637, %v4642
        %v4644 = vsel %vm4635, %v4633, -inf
        %v4645 = vmax.f32 %v4638, %v4644
        %v4646 = vsel %vm4635, %v4634, -inf
        %v4647 = vmax.f32 %v4639, %v4646
        %v4648 = vmax.f32 %v4641, %v4643
        %v4649 = vmax.f32 %v4645, %v4647
        %v4650 = vmax.f32 %v4648, %v4649
        %v4651 = vrot.slane %v4650, 4
        %v4652 = vmax.f32 %v4650, %v4651
        %v4653 = vrot.slane %v4652, 2
        %v4654 = vmax.f32 %v4652, %v4653
        %v4655 = vrot.slane %v4654, 1
        %v4656 = vmax.f32 %v4654, %v4655
        %v4657 = vld [vmem:[%s4] sm:$0x1]
        %v4658 = vadd.f32 %v4656, %v4657
        %v4659 = vld [vmem:[%s5] sm:$0xff]
        %v4660 = vld [vmem:[%s5 + $0x8] sm:$0xff]
        %v4661 = vld [vmem:[%s5 + $0x10] sm:$0xff]
        %v4662 = vld [vmem:[%s5 + $0x18] sm:$0xff]
        %v4663 = vld [vmem:[%s5 + $0x20] sm:$0xff]
        %v4664 = vld [vmem:[%s5 + $0x28] sm:$0xff]
        %v4665 = vld [vmem:[%s5 + $0x30] sm:$0xff]
        %v4666 = vld [vmem:[%s5 + $0x38] sm:$0xff]
        %v4667 = vld [vmem:[%s6] sm:$0x1]
        %v4669 = vsel %vm4635, %v4658, 0
        %4671 = vmatprep.subr.mxu0 0.0
        %4672 = vmatpush1.msra.mxu0 0.0
        %4673 = vmatprep.subr.mxu0 0.0
        %4674 = vmatpush1.msra.mxu0 0.0
        %4675 = vmatprep.subr.mxu0 0.0
        %4676 = vmatpush1.msra.mxu0 0.0
        %4677 = vmatprep.subr.mxu0 0.0
        %4678 = vmatpush1.msra.mxu0 0.0
        %4679 = vmatprep.subr.mxu0 0.0
        %4680 = vmatpush1.msra.mxu0 0.0
        %4681 = vmatprep.subr.mxu0 0.0
        %4682 = vmatpush1.msra.mxu0 0.0
        %4683 = vmatprep.subr.mxu0 0.0
        %4684 = vmatpush1.msra.mxu0 0.0
        %4685 = vmatprep.subr.mxu0 0.0
        %4686 = vmatpush1.msra.mxu0 0.0
        %4687 = vmatprep.subr.mxu0 0.0
        %4688 = vmatpush1.msra.mxu0 %v4666
        %4689 = vmatprep.subr.mxu0 0.0
        %4690 = vmatpush1.msra.mxu0 %v4665
        %4691 = vmatprep.subr.mxu0 0.0
        %4692 = vmatpush1.msra.mxu0 %v4664
        %4693 = vmatprep.subr.mxu0 0.0
        %4694 = vmatpush1.msra.mxu0 %v4663
        %4695 = vmatprep.subr.mxu0 0.0
        %4696 = vmatpush1.msra.mxu0 %v4662
        %4697 = vmatprep.subr.mxu0 0.0
        %4698 = vmatpush1.msra.mxu0 %v4661
        %4699 = vmatprep.subr.mxu0 0.0
        %4700 = vmatpush1.msra.mxu0 %v4660
        %4701 = vmatprep.subr.mxu0 0.0
        %4702 = vmatpush1.msra.mxu0 %v4659
        %4703 = vmatprep.subr.mxu0 0.0
        %4704 = vmatpush2.msra.mxu0 0.0
        %4705 = vmatprep.subr.mxu0 0.0
        %4706 = vmatpush2.msra.mxu0 0.0
        %4707 = vmatprep.subr.mxu0 0.0
        %4708 = vmatpush2.msra.mxu0 0.0
        %4709 = vmatprep.subr.mxu0 0.0
        %4710 = vmatpush2.msra.mxu0 0.0
        %4711 = vmatprep.subr.mxu0 0.0
        %4712 = vmatpush2.msra.mxu0 0.0
        %4713 = vmatprep.subr.mxu0 0.0
        %4714 = vmatpush2.msra.mxu0 0.0
        %4715 = vmatprep.subr.mxu0 0.0
        %4716 = vmatpush2.msra.mxu0 0.0
        %4717 = vmatprep.subr.mxu0 0.0
        %4718 = vmatpush2.msra.mxu0 0.0
        %4719 = vmatprep.subr.mxu0 0.0
        %4720 = vmatpush2.msra.mxu0 0.0
        %4721 = vmatprep.subr.mxu0 0.0
        %4722 = vmatpush2.msra.mxu0 0.0
        %4723 = vmatprep.subr.mxu0 0.0
        %4724 = vmatpush2.msra.mxu0 0.0
        %4725 = vmatprep.subr.mxu0 0.0
        %4726 = vmatpush2.msra.mxu0 0.0
        %4727 = vmatprep.subr.mxu0 0.0
        %4728 = vmatpush2.msra.mxu0 0.0
        %4729 = vmatprep.subr.mxu0 0.0
        %4730 = vmatpush2.msra.mxu0 0.0
        %4731 = vmatprep.subr.mxu0 0.0
        %4732 = vmatpush2.msra.mxu0 0.0
        %4733 = vmatprep.subr.mxu0 0.0
        %4734 = vmatpush2.msra.mxu0 0.0
        %4735 = vmatprep.mubr.f32.mxu0 0.0
        %4736 = vmatmul.mubr.f32.gmra.mxu0 %v4669
        %v4737 = vpop.f32.mrf.mxu0
        %v4738 = vadd.f32 %v4667, %v4737
        %v4739 = vpop.f32.mrf.mxu0
        %4740 = vdwg.mxu0
        %v4741 = vmax.f32 %v4738, 0.0
        %v4742 = vld [vmem:[%s7] sm:$0xff]
        %v4743 = vld [vmem:[%s7 + $0x8] sm:$0xff]
        %v4744 = vld [vmem:[%s7 + $0x10] sm:$0xff]
        %v4745 = vld [vmem:[%s7 + $0x18] sm:$0xff]
        %v4746 = vld [vmem:[%s8] sm:$0x1]
        %v4748 = vsel %vm1574, %v4741, 0
        %4750 = vmatprep.subr.mxu0 0.0
        %4751 = vmatpush1.msra.mxu0 0.0
        %4752 = vmatprep.subr.mxu0 0.0
        %4753 = vmatpush1.msra.mxu0 0.0
        %4754 = vmatprep.subr.mxu0 0.0
        %4755 = vmatpush1.msra.mxu0 0.0
        %4756 = vmatprep.subr.mxu0 0.0
        %4757 = vmatpush1.msra.mxu0 0.0
        %4758 = vmatprep.subr.mxu0 0.0
        %4759 = vmatpush1.msra.mxu0 0.0
        %4760 = vmatprep.subr.mxu0 0.0
        %4761 = vmatpush1.msra.mxu0 0.0
        %4762 = vmatprep.subr.mxu0 0.0
        %4763 = vmatpush1.msra.mxu0 0.0
        %4764 = vmatprep.subr.mxu0 0.0
        %4765 = vmatpush1.msra.mxu0 0.0
        %4766 = vmatprep.subr.mxu0 0.0
        %4767 = vmatpush1.msra.mxu0 0.0
        %4768 = vmatprep.subr.mxu0 0.0
        %4769 = vmatpush1.msra.mxu0 0.0
        %4770 = vmatprep.subr.mxu0 0.0
        %4771 = vmatpush1.msra.mxu0 0.0
        %4772 = vmatprep.subr.mxu0 0.0
        %4773 = vmatpush1.msra.mxu0 0.0
        %4774 = vmatprep.subr.mxu0 0.0
        %4775 = vmatpush1.msra.mxu0 %v4745
        %4776 = vmatprep.subr.mxu0 0.0
        %4777 = vmatpush1.msra.mxu0 %v4744
        %4778 = vmatprep.subr.mxu0 0.0
        %4779 = vmatpush1.msra.mxu0 %v4743
        %4780 = vmatprep.subr.mxu0 0.0
        %4781 = vmatpush1.msra.mxu0 %v4742
        %4782 = vmatprep.subr.mxu0 0.0
        %4783 = vmatpush2.msra.mxu0 0.0
        %4784 = vmatprep.subr.mxu0 0.0
        %4785 = vmatpush2.msra.mxu0 0.0
        %4786 = vmatprep.subr.mxu0 0.0
        %4787 = vmatpush2.msra.mxu0 0.0
        %4788 = vmatprep.subr.mxu0 0.0
        %4789 = vmatpush2.msra.mxu0 0.0
        %4790 = vmatprep.subr.mxu0 0.0
        %4791 = vmatpush2.msra.mxu0 0.0
        %4792 = vmatprep.subr.mxu0 0.0
        %4793 = vmatpush2.msra.mxu0 0.0
        %4794 = vmatprep.subr.mxu0 0.0
        %4795 = vmatpush2.msra.mxu0 0.0
        %4796 = vmatprep.subr.mxu0 0.0
        %4797 = vmatpush2.msra.mxu0 0.0
        %4798 = vmatprep.subr.mxu0 0.0
        %4799 = vmatpush2.msra.mxu0 0.0
        %4800 = vmatprep.subr.mxu0 0.0
        %4801 = vmatpush2.msra.mxu0 0.0
        %4802 = vmatprep.subr.mxu0 0.0
        %4803 = vmatpush2.msra.mxu0 0.0
        %4804 = vmatprep.subr.mxu0 0.0
        %4805 = vmatpush2.msra.mxu0 0.0
        %4806 = vmatprep.subr.mxu0 0.0
        %4807 = vmatpush2.msra.mxu0 0.0
        %4808 = vmatprep.subr.mxu0 0.0
        %4809 = vmatpush2.msra.mxu0 0.0
        %4810 = vmatprep.subr.mxu0 0.0
        %4811 = vmatpush2.msra.mxu0 0.0
        %4812 = vmatprep.subr.mxu0 0.0
        %4813 = vmatpush2.msra.mxu0 0.0
        %4814 = vmatprep.mubr.f32.mxu0 0.0
        %4815 = vmatmul.mubr.f32.gmra.mxu0 %v4748
        %v4816 = vpop.f32.mrf.mxu0
        %v4817 = vadd.f32 %v4746, %v4816
        %v4818 = vpop.f32.mrf.mxu0
        %4819 = vdwg.mxu0
        %vm4820 = vcmask 73728
        %4821 = vst.msk [vmem:[%s324] sm:$0x1] %vm4820, %v4817
        %s4822 = sand.u32 %s225, 1
        %s4823 = scalar_lea.sflag [#allocation3], %s4822
        %s4824 = sand.u32 %s225, 1
        %s4825 = scalar_lea.vmem [#allocation2], %s4824
        // Predicated region
        $region57: #{net_forward.1} parent=55 // pred_check
          %p4826 = pneg %p235
        $region58: #{net_forward.1} parent=55 // pred_check_branch
          %4828 = sbr.rel (%p4826) target = $region60
        $region59: #{net_forward.1} parent=55 // pred_region
          %s4830 = ssub.s32 16, 16
          %4831 = vsyncadd %s4823, %s4830
          %s4832 = smul.addr %s23, 16
          %s4833 = scalar_lea.hbm %s9, %s4832
          %s4835 = sshll.u32 %s4825, 4
          %s4836 = int_to_ptr.vmem [resolvable:$true] %s4835
          %4838 = dma.vmem_to_hbm [thread:$0]  %s4836, 16, %s4833, %s4823
        $region60: #{net_forward.1} parent=55 // pred_fallthru
          _
      $region56: #{net_forward.1} parent=5 // pred_fallthru
        _
      %p4839 = scmp.le.s32.totalorder 2, %s18
      // Predicated region
      $region61: #{net_forward.1} parent=5 // pred_check
        %p4840 = pneg %p4839
      $region62: #{net_forward.1} parent=5 // pred_check_branch
        %4842 = sbr.rel (%p4840) target = $region64
      $region63: #{net_forward.1} parent=5 // pred_region
        %s4843 = ssub.s32 %s18, 2
        // Predicated region
        $region65: #{net_forward.1} parent=63 // pred_check
          %p4844 = pneg %p241
        $region66: #{net_forward.1} parent=63 // pred_check_branch
          %4846 = sbr.rel (%p4844) target = $region68
        $region67: #{net_forward.1} parent=63 // pred_region
          %s4847 = sand.u32 %s226, 1
          %s4848 = scalar_lea.sflag [#allocation3], %s4847
          %s4849 = sand.u32 %s226, 1
          %s4850 = scalar_lea.vmem [#allocation2], %s4849
          %4851 = dma.done %s4848, 16
        $region68: #{net_forward.1} parent=63 // pred_fallthru
          _
      $region64: #{net_forward.1} parent=5 // pred_fallthru
        _
    $region6: #{net_forward.1} parent=1 // loop_footer
      %s22 = sadd.s32 1, %s18
    $region7: #{net_forward.1} parent=1 // loop_footer_branch
      %17 = sbr.rel target = $region3
    $region8: #{net_forward.1} parent=1 // loop_exit
      _
    %4852 = vsyncpa [#allocation3], 1
    %s4853 = scalar_lea.sflag [#allocation3], 1
    %4854 = vsyncpa %s4853, 1

</llo_original>
